<compile_context>
chip_gen: v7x
topology: tpu7x:2x2x1
jax: 0.10.0
libtpu: 0.0.40
codegen_flags: <defaults>
</compile_context>

<pallas_src>
import functools

import jax
import jax.numpy as jnp
from jax.experimental import pallas as pl
from jax.experimental.pallas import tpu as pltpu

_LANES = 128


# ------------------------------ Pallas kernel ------------------------------ #

def _basic_block_kernel(x_ref, w1_ref, b1_ref, w2_ref, b2_ref, wsc_ref, bsc_ref,
                        o_ref, hpad_ref, *, stride, ho, wo, compute_dtype):
    """Fused BasicBlock forward for one image (one grid step).

    x_ref   : (1, s, s, Hph, Wph, Cin)  stride-phase view of the padded input
    w1_ref  : (9, Cin,   Cmid_p)        conv1 weights (bn1 scale folded in)
    w2_ref  : (9, Cmid_p, Cout_p)       conv2 weights (bn2 scale folded in)
    wsc_ref : (Cin, Cout_p)             1x1 shortcut weights (or identity)
    b*_ref  : (1, C)                    folded BN biases (f32)
    o_ref   : (1, Ho, Wo, Cout_p)       output block (lane-dense, 128-multiple)
    hpad_ref: VMEM (Ho+2, Wo+2, Cmid_p) zero-padded conv1 activation scratch
    """
    s = stride
    cmid_p = w1_ref.shape[-1]
    cout_p = w2_ref.shape[-1]

    # ---- conv1 (3x3, stride s, pad 1) + bn1 (scale pre-folded) + ReLU ----
    acc1 = jnp.zeros((ho * wo, cmid_p), jnp.float32)
    for i in range(3):
        for j in range(3):
            patch = x_ref[0, i % s, j % s,
                          i // s:i // s + ho,
                          j // s:j // s + wo, :]                 # (ho, wo, cin)
            patch = patch.reshape(ho * wo, -1).astype(compute_dtype)
            acc1 = acc1 + jnp.dot(patch, w1_ref[i * 3 + j],
                                  preferred_element_type=jnp.float32)
    h = jnp.maximum(acc1 + b1_ref[...], 0.0)                     # f32 epilogue

    # Keep the conv1 activation zero-padded in VMEM for conv2's 3x3 windows.
    hpad_ref[...] = jnp.zeros_like(hpad_ref)
    hpad_ref[1:1 + ho, 1:1 + wo, :] = h.reshape(ho, wo, cmid_p)

    # ---- conv2 (3x3, stride 1, pad 1) + bn2 (scale pre-folded) ----
    acc2 = jnp.zeros((ho * wo, cout_p), jnp.float32)
    for i in range(3):
        for j in range(3):
            win = hpad_ref[i:i + ho, j:j + wo, :]                # (ho, wo, cmid)
            win = win.reshape(ho * wo, cmid_p).astype(compute_dtype)
            acc2 = acc2 + jnp.dot(win, w2_ref[i * 3 + j],
                                  preferred_element_type=jnp.float32)
    y = acc2 + b2_ref[...]

    # ---- shortcut (1x1 conv, stride s; identity handled via eye weights) ----
    p, q, r0, c0 = 1 % s, 1 % s, 1 // s, 1 // s
    xs = x_ref[0, p, q, r0:r0 + ho, c0:c0 + wo, :]
    xs = xs.reshape(ho * wo, -1).astype(compute_dtype)
    y = y + jnp.dot(xs, wsc_ref[...], preferred_element_type=jnp.float32)
    y = y + bsc_ref[...]

    # ---- residual ReLU + lane-dense store ----
    o_ref[0] = jnp.maximum(y, 0.0).reshape(ho, wo, cout_p).astype(o_ref.dtype)


# ------------------------------- JAX wrapper -------------------------------- #

def _round_up(n, m):
    return (n + m - 1) // m * m


def _fold_bn(w, gamma, beta, mean, var, eps):
    """Fold inference-mode BatchNorm into the conv: (scaled weight, bias)."""
    scale = gamma / jnp.sqrt(var + eps)
    return w * scale, beta - mean * scale


def basic_block_forward(x_nhwc, params, *, in_planes, planes, stride, eps=1e-5,
                        compute_dtype=jnp.float32):
    """Eval-mode BasicBlock forward. x_nhwc: (N, H, W, in_planes)."""
    n, h, w, cin = x_nhwc.shape
    assert cin == in_planes
    s = stride
    ho = (h - 1) // s + 1
    wo = (w - 1) // s + 1
    cmid_p = _round_up(planes, _LANES)     # lane-dense intermediate channels
    cout_p = cmid_p                        # lane-dense output channels
    f32 = jnp.float32

    # ---- fold BN scales into weights; pad channels to 128-lane multiples ----
    w1, b1 = _fold_bn(params["w1"], params["g1"], params["b1"],
                      params["m1"], params["v1"], eps)
    w2, b2 = _fold_bn(params["w2"], params["g2"], params["b2"],
                      params["m2"], params["v2"], eps)

    w1p = jnp.zeros((9, cin, cmid_p), f32).at[:, :, :planes].set(
        w1.reshape(9, cin, planes).astype(f32))
    w2p = jnp.zeros((9, cmid_p, cout_p), f32).at[:, :planes, :planes].set(
        w2.reshape(9, planes, planes).astype(f32))
    b1p = jnp.zeros((1, cmid_p), f32).at[0, :planes].set(b1.astype(f32))
    b2p = jnp.zeros((1, cout_p), f32).at[0, :planes].set(b2.astype(f32))

    if stride != 1 or in_planes != planes:         # projection shortcut
        wsc, bsc = _fold_bn(params["wsc"], params["gsc"], params["bsc"],
                            params["msc"], params["vsc"], eps)
        wscp = jnp.zeros((cin, cout_p), f32).at[:, :planes].set(
            wsc.reshape(cin, planes).astype(f32))
        bscp = jnp.zeros((1, cout_p), f32).at[0, :planes].set(bsc.astype(f32))
    else:                                          # identity shortcut as eye-matmul
        wscp = jnp.zeros((cin, cout_p), f32).at[:cin, :cin].set(
            jnp.eye(cin, dtype=f32))
        bscp = jnp.zeros((1, cout_p), f32)

    # bf16 MXU operands on v6e/v7x: weights cast once on the host (halves their
    # DMA bytes); activation operands are cast per-tap in-kernel.  Accumulation
    # and the epilogue (bias/add/relu) stay f32.
    w1p = w1p.astype(compute_dtype)
    w2p = w2p.astype(compute_dtype)
    wscp = wscp.astype(compute_dtype)

    # ---- stride-phase (space-to-depth) view of the zero-padded input ----
    # phases[n, p, q, r, c, :] == x_pad[n, r*s + p, c*s + q, :]; a pure
    # repartition done once by XLA (no 9x im2col duplication).
    hp, wp = h + 2, w + 2
    hph, wph = pl.cdiv(hp, s), pl.cdiv(wp, s)
    xpad = jnp.pad(x_nhwc, ((0, 0), (1, 1 + hph * s - hp),
                            (1, 1 + wph * s - wp), (0, 0)))
    phases = xpad.reshape(n, hph, s, wph, s, cin).transpose(0, 2, 4, 1, 3, 5)

    kernel = functools.partial(_basic_block_kernel, stride=s, ho=ho, wo=wo,
                               compute_dtype=compute_dtype)

    out = pl.pallas_call(
        kernel,
        out_shape=jax.ShapeDtypeStruct((n, ho, wo, cout_p), x_nhwc.dtype),
        grid=(n,),
        in_specs=[
            pl.BlockSpec((1, s, s, hph, wph, cin),
                         lambda b: (b, 0, 0, 0, 0, 0)),
            pl.BlockSpec((9, cin, cmid_p), lambda b: (0, 0, 0)),
            pl.BlockSpec((1, cmid_p), lambda b: (0, 0)),
            pl.BlockSpec((9, cmid_p, cout_p), lambda b: (0, 0, 0)),
            pl.BlockSpec((1, cout_p), lambda b: (0, 0)),
            pl.BlockSpec((cin, cout_p), lambda b: (0, 0)),
            pl.BlockSpec((1, cout_p), lambda b: (0, 0)),
        ],
        out_specs=pl.BlockSpec((1, ho, wo, cout_p), lambda b: (b, 0, 0, 0)),
        scratch_shapes=[pltpu.VMEM((ho + 2, wo + 2, cmid_p), jnp.float32)],
        compiler_params=pltpu.CompilerParams(
            dimension_semantics=("parallel",)),
    )(phases, w1p, b1p, w2p, b2p, wscp, bscp)

    return out[..., :planes]


# --------------------------- reference (pure JAX) --------------------------- #

def _conv_ref(x, w, stride, padding):
    return jax.lax.conv_general_dilated(
        x, w, (stride, stride), [(padding, padding), (padding, padding)],
        dimension_numbers=("NHWC", "HWIO", "NHWC"))


def _bn_ref(x, g, b, m, v, eps=1e-5):
    return (x - m) / jnp.sqrt(v + eps) * g + b


def basic_block_ref(x_nhwc, p, *, in_planes, planes, stride):
    out = _conv_ref(x_nhwc, p["w1"], stride, 1)
    out = jax.nn.relu(_bn_ref(out, p["g1"], p["b1"], p["m1"], p["v1"]))
    out = _conv_ref(out, p["w2"], 1, 1)
    out = _bn_ref(out, p["g2"], p["b2"], p["m2"], p["v2"])
    if stride != 1 or in_planes != planes:
        sc = _bn_ref(_conv_ref(x_nhwc, p["wsc"], stride, 0),
                     p["gsc"], p["bsc"], p["msc"], p["vsc"])
    else:
        sc = x_nhwc
    return jax.nn.relu(out + sc)


# ----------------------------------- main ----------------------------------- #

if __name__ == "__main__":
    N, in_planes, H, W = 2, 4, 16, 16
    planes, stride = 8, 2

    key = jax.random.PRNGKey(0)
    keys = jax.random.split(key, 16)

    def bn_params(k0, k1, k2, k3, c):
        return (0.5 + jax.random.uniform(k0, (c,)),            # gamma
                0.1 * jax.random.normal(k1, (c,)),              # beta
                0.1 * jax.random.normal(k2, (c,)),              # running_mean
                0.5 + jax.random.uniform(k3, (c,)))             # running_var

    g1, b1, m1, v1 = bn_params(keys[3], keys[4], keys[5], keys[6], planes)
    g2, b2, m2, v2 = bn_params(keys[7], keys[8], keys[9], keys[10], planes)
    gsc, bsc, msc, vsc = bn_params(keys[11], keys[12], keys[13], keys[14], planes)

    params = {
        # weights stored directly in HWIO (equivalent to PyTorch OIHW transposed)
        "w1": 0.1 * jax.random.normal(keys[0], (3, 3, in_planes, planes), jnp.float32),
        "w2": 0.1 * jax.random.normal(keys[1], (3, 3, planes, planes), jnp.float32),
        "wsc": 0.1 * jax.random.normal(keys[2], (1, 1, in_planes, planes), jnp.float32),
        "g1": g1, "b1": b1, "m1": m1, "v1": v1,
        "g2": g2, "b2": b2, "m2": m2, "v2": v2,
        "gsc": gsc, "bsc": bsc, "msc": msc, "vsc": vsc,
    }

    # PyTorch-convention NCHW input, transposed to NHWC for the kernel.
    x_nchw = jax.random.normal(keys[15], (N, in_planes, H, W), jnp.float32)
    x_nhwc = jnp.transpose(x_nchw, (0, 2, 3, 1))

    ref = basic_block_ref(x_nhwc, params, in_planes=in_planes,
                          planes=planes, stride=stride)

    # f32 MXU path (strict check).
    out = basic_block_forward(x_nhwc, params, in_planes=in_planes,
                              planes=planes, stride=stride)
    out = jax.block_until_ready(out)
    assert out.shape == (N, H // stride, W // stride, planes), out.shape
    assert jnp.allclose(out, ref, atol=1e-4, rtol=1e-4), \
        float(jnp.max(jnp.abs(out - ref)))

    # bf16 MXU operands (v6e/v7x recommendation), f32 accumulation/epilogue.
    out_bf16 = basic_block_forward(x_nhwc, params, in_planes=in_planes,
                                   planes=planes, stride=stride,
                                   compute_dtype=jnp.bfloat16)
    out_bf16 = jax.block_until_ready(out_bf16)
    assert jnp.allclose(out_bf16, ref, atol=1e-1, rtol=1e-1), \
        float(jnp.max(jnp.abs(out_bf16 - ref)))

    print("KERNEL_OK")
</pallas_src>

<mosaic_0001>
module attributes {stable_mosaic.version = 11 : i64} {
  func.func @_basic_block_kernel(%arg0: i32, %arg1: memref<1x2x2x9x9x4xf32, #tpu.memory_space<vmem>>, %arg2: memref<9x4x128xf32, #tpu.memory_space<vmem>>, %arg3: memref<1x128xf32, #tpu.memory_space<vmem>>, %arg4: memref<9x128x128xf32, #tpu.memory_space<vmem>>, %arg5: memref<1x128xf32, #tpu.memory_space<vmem>>, %arg6: memref<4x128xf32, #tpu.memory_space<vmem>>, %arg7: memref<1x128xf32, #tpu.memory_space<vmem>>, %arg8: memref<1x8x8x128xf32, #tpu.memory_space<vmem>>, %arg9: memref<10x10x128xf32, #tpu.memory_space<vmem>>) attributes {dimension_semantics = [#tpu.dimension_semantics<parallel>], iteration_bounds = array<i64: 2>, scalar_prefetch = 0 : i64, scratch_operands = 1 : i64, tpu.core_type = #tpu.core_type<tc>, window_params = [{transform_indices = @transform_0, window_bounds = array<i64: 1, 2, 2, 9, 9, 4>}, {pipeline_mode = #tpu.pipeline_mode<synchronous>, transform_indices = @transform_1, window_bounds = array<i64: 9, 4, 128>}, {pipeline_mode = #tpu.pipeline_mode<synchronous>, transform_indices = @transform_2, window_bounds = array<i64: 1, 128>}, {pipeline_mode = #tpu.pipeline_mode<synchronous>, transform_indices = @transform_3, window_bounds = array<i64: 9, 128, 128>}, {pipeline_mode = #tpu.pipeline_mode<synchronous>, transform_indices = @transform_4, window_bounds = array<i64: 1, 128>}, {pipeline_mode = #tpu.pipeline_mode<synchronous>, transform_indices = @transform_5, window_bounds = array<i64: 4, 128>}, {pipeline_mode = #tpu.pipeline_mode<synchronous>, transform_indices = @transform_6, window_bounds = array<i64: 1, 128>}, {transform_indices = @transform_7, window_bounds = array<i64: 1, 8, 8, 128>}]} {
    %cst = arith.constant 0.000000e+00 : f32
    %0 = vector.broadcast %cst : f32 to vector<64x128xf32>
    %c0 = arith.constant 0 : index
    %c0_0 = arith.constant 0 : index
    %c0_1 = arith.constant 0 : index
    %c0_2 = arith.constant 0 : index
    %c0_3 = arith.constant 0 : index
    %c0_4 = arith.constant 0 : index
    %1 = vector.load %arg1[%c0, %c0_0, %c0_1, %c0_2, %c0_3, %c0_4] : memref<1x2x2x9x9x4xf32, #tpu.memory_space<vmem>>, vector<1x1x1x8x8x4xf32>
    %2 = vector.shape_cast %1 : vector<1x1x1x8x8x4xf32> to vector<8x8x4xf32>
    %3 = vector.shape_cast %2 : vector<8x8x4xf32> to vector<64x4xf32>
    %c0_5 = arith.constant 0 : index
    %c0_6 = arith.constant 0 : index
    %c0_7 = arith.constant 0 : index
    %4 = vector.load %arg2[%c0_5, %c0_6, %c0_7] : memref<9x4x128xf32, #tpu.memory_space<vmem>>, vector<1x4x128xf32>
    %5 = vector.shape_cast %4 : vector<1x4x128xf32> to vector<4x128xf32>
    %cst_8 = arith.constant dense<0.000000e+00> : vector<64x128xf32>
    %6 = tpu.matmul %3, %5, %cst_8 {dimension_numbers = #tpu.dot_dimension_numbers<[1], [0], [0], [1], [0, 0, 1, 1], [], []>} : vector<64x4xf32>, vector<4x128xf32>, vector<64x128xf32> -> vector<64x128xf32>
    %7 = arith.addf %0, %6 : vector<64x128xf32>
    %c0_9 = arith.constant 0 : index
    %c0_10 = arith.constant 0 : index
    %c1 = arith.constant 1 : index
    %c0_11 = arith.constant 0 : index
    %c0_12 = arith.constant 0 : index
    %c0_13 = arith.constant 0 : index
    %8 = vector.load %arg1[%c0_9, %c0_10, %c1, %c0_11, %c0_12, %c0_13] : memref<1x2x2x9x9x4xf32, #tpu.memory_space<vmem>>, vector<1x1x1x8x8x4xf32>
    %9 = vector.shape_cast %8 : vector<1x1x1x8x8x4xf32> to vector<8x8x4xf32>
    %10 = vector.shape_cast %9 : vector<8x8x4xf32> to vector<64x4xf32>
    %c1_14 = arith.constant 1 : index
    %c0_15 = arith.constant 0 : index
    %c0_16 = arith.constant 0 : index
    %11 = vector.load %arg2[%c1_14, %c0_15, %c0_16] : memref<9x4x128xf32, #tpu.memory_space<vmem>>, vector<1x4x128xf32>
    %12 = vector.shape_cast %11 : vector<1x4x128xf32> to vector<4x128xf32>
    %cst_17 = arith.constant dense<0.000000e+00> : vector<64x128xf32>
    %13 = tpu.matmul %10, %12, %cst_17 {dimension_numbers = #tpu.dot_dimension_numbers<[1], [0], [0], [1], [0, 0, 1, 1], [], []>} : vector<64x4xf32>, vector<4x128xf32>, vector<64x128xf32> -> vector<64x128xf32>
    %14 = arith.addf %7, %13 : vector<64x128xf32>
    %c0_18 = arith.constant 0 : index
    %c0_19 = arith.constant 0 : index
    %c0_20 = arith.constant 0 : index
    %c0_21 = arith.constant 0 : index
    %c1_22 = arith.constant 1 : index
    %c0_23 = arith.constant 0 : index
    %15 = vector.load %arg1[%c0_18, %c0_19, %c0_20, %c0_21, %c1_22, %c0_23] : memref<1x2x2x9x9x4xf32, #tpu.memory_space<vmem>>, vector<1x1x1x8x8x4xf32>
    %16 = vector.shape_cast %15 : vector<1x1x1x8x8x4xf32> to vector<8x8x4xf32>
    %17 = vector.shape_cast %16 : vector<8x8x4xf32> to vector<64x4xf32>
    %c2 = arith.constant 2 : index
    %c0_24 = arith.constant 0 : index
    %c0_25 = arith.constant 0 : index
    %18 = vector.load %arg2[%c2, %c0_24, %c0_25] : memref<9x4x128xf32, #tpu.memory_space<vmem>>, vector<1x4x128xf32>
    %19 = vector.shape_cast %18 : vector<1x4x128xf32> to vector<4x128xf32>
    %cst_26 = arith.constant dense<0.000000e+00> : vector<64x128xf32>
    %20 = tpu.matmul %17, %19, %cst_26 {dimension_numbers = #tpu.dot_dimension_numbers<[1], [0], [0], [1], [0, 0, 1, 1], [], []>} : vector<64x4xf32>, vector<4x128xf32>, vector<64x128xf32> -> vector<64x128xf32>
    %21 = arith.addf %14, %20 : vector<64x128xf32>
    %c0_27 = arith.constant 0 : index
    %c1_28 = arith.constant 1 : index
    %c0_29 = arith.constant 0 : index
    %c0_30 = arith.constant 0 : index
    %c0_31 = arith.constant 0 : index
    %c0_32 = arith.constant 0 : index
    %22 = vector.load %arg1[%c0_27, %c1_28, %c0_29, %c0_30, %c0_31, %c0_32] : memref<1x2x2x9x9x4xf32, #tpu.memory_space<vmem>>, vector<1x1x1x8x8x4xf32>
    %23 = vector.shape_cast %22 : vector<1x1x1x8x8x4xf32> to vector<8x8x4xf32>
    %24 = vector.shape_cast %23 : vector<8x8x4xf32> to vector<64x4xf32>
    %c3 = arith.constant 3 : index
    %c0_33 = arith.constant 0 : index
    %c0_34 = arith.constant 0 : index
    %25 = vector.load %arg2[%c3, %c0_33, %c0_34] : memref<9x4x128xf32, #tpu.memory_space<vmem>>, vector<1x4x128xf32>
    %26 = vector.shape_cast %25 : vector<1x4x128xf32> to vector<4x128xf32>
    %cst_35 = arith.constant dense<0.000000e+00> : vector<64x128xf32>
    %27 = tpu.matmul %24, %26, %cst_35 {dimension_numbers = #tpu.dot_dimension_numbers<[1], [0], [0], [1], [0, 0, 1, 1], [], []>} : vector<64x4xf32>, vector<4x128xf32>, vector<64x128xf32> -> vector<64x128xf32>
    %28 = arith.addf %21, %27 : vector<64x128xf32>
    %c0_36 = arith.constant 0 : index
    %c1_37 = arith.constant 1 : index
    %c1_38 = arith.constant 1 : index
    %c0_39 = arith.constant 0 : index
    %c0_40 = arith.constant 0 : index
    %c0_41 = arith.constant 0 : index
    %29 = vector.load %arg1[%c0_36, %c1_37, %c1_38, %c0_39, %c0_40, %c0_41] : memref<1x2x2x9x9x4xf32, #tpu.memory_space<vmem>>, vector<1x1x1x8x8x4xf32>
    %30 = vector.shape_cast %29 : vector<1x1x1x8x8x4xf32> to vector<8x8x4xf32>
    %31 = vector.shape_cast %30 : vector<8x8x4xf32> to vector<64x4xf32>
    %c4 = arith.constant 4 : index
    %c0_42 = arith.constant 0 : index
    %c0_43 = arith.constant 0 : index
    %32 = vector.load %arg2[%c4, %c0_42, %c0_43] : memref<9x4x128xf32, #tpu.memory_space<vmem>>, vector<1x4x128xf32>
    %33 = vector.shape_cast %32 : vector<1x4x128xf32> to vector<4x128xf32>
    %cst_44 = arith.constant dense<0.000000e+00> : vector<64x128xf32>
    %34 = tpu.matmul %31, %33, %cst_44 {dimension_numbers = #tpu.dot_dimension_numbers<[1], [0], [0], [1], [0, 0, 1, 1], [], []>} : vector<64x4xf32>, vector<4x128xf32>, vector<64x128xf32> -> vector<64x128xf32>
    %35 = arith.addf %28, %34 : vector<64x128xf32>
    %c0_45 = arith.constant 0 : index
    %c1_46 = arith.constant 1 : index
    %c0_47 = arith.constant 0 : index
    %c0_48 = arith.constant 0 : index
    %c1_49 = arith.constant 1 : index
    %c0_50 = arith.constant 0 : index
    %36 = vector.load %arg1[%c0_45, %c1_46, %c0_47, %c0_48, %c1_49, %c0_50] : memref<1x2x2x9x9x4xf32, #tpu.memory_space<vmem>>, vector<1x1x1x8x8x4xf32>
    %37 = vector.shape_cast %36 : vector<1x1x1x8x8x4xf32> to vector<8x8x4xf32>
    %38 = vector.shape_cast %37 : vector<8x8x4xf32> to vector<64x4xf32>
    %c5 = arith.constant 5 : index
    %c0_51 = arith.constant 0 : index
    %c0_52 = arith.constant 0 : index
    %39 = vector.load %arg2[%c5, %c0_51, %c0_52] : memref<9x4x128xf32, #tpu.memory_space<vmem>>, vector<1x4x128xf32>
    %40 = vector.shape_cast %39 : vector<1x4x128xf32> to vector<4x128xf32>
    %cst_53 = arith.constant dense<0.000000e+00> : vector<64x128xf32>
    %41 = tpu.matmul %38, %40, %cst_53 {dimension_numbers = #tpu.dot_dimension_numbers<[1], [0], [0], [1], [0, 0, 1, 1], [], []>} : vector<64x4xf32>, vector<4x128xf32>, vector<64x128xf32> -> vector<64x128xf32>
    %42 = arith.addf %35, %41 : vector<64x128xf32>
    %c0_54 = arith.constant 0 : index
    %c0_55 = arith.constant 0 : index
    %c0_56 = arith.constant 0 : index
    %c1_57 = arith.constant 1 : index
    %c0_58 = arith.constant 0 : index
    %c0_59 = arith.constant 0 : index
    %43 = vector.load %arg1[%c0_54, %c0_55, %c0_56, %c1_57, %c0_58, %c0_59] : memref<1x2x2x9x9x4xf32, #tpu.memory_space<vmem>>, vector<1x1x1x8x8x4xf32>
    %44 = vector.shape_cast %43 : vector<1x1x1x8x8x4xf32> to vector<8x8x4xf32>
    %45 = vector.shape_cast %44 : vector<8x8x4xf32> to vector<64x4xf32>
    %c6 = arith.constant 6 : index
    %c0_60 = arith.constant 0 : index
    %c0_61 = arith.constant 0 : index
    %46 = vector.load %arg2[%c6, %c0_60, %c0_61] : memref<9x4x128xf32, #tpu.memory_space<vmem>>, vector<1x4x128xf32>
    %47 = vector.shape_cast %46 : vector<1x4x128xf32> to vector<4x128xf32>
    %cst_62 = arith.constant dense<0.000000e+00> : vector<64x128xf32>
    %48 = tpu.matmul %45, %47, %cst_62 {dimension_numbers = #tpu.dot_dimension_numbers<[1], [0], [0], [1], [0, 0, 1, 1], [], []>} : vector<64x4xf32>, vector<4x128xf32>, vector<64x128xf32> -> vector<64x128xf32>
    %49 = arith.addf %42, %48 : vector<64x128xf32>
    %c0_63 = arith.constant 0 : index
    %c0_64 = arith.constant 0 : index
    %c1_65 = arith.constant 1 : index
    %c1_66 = arith.constant 1 : index
    %c0_67 = arith.constant 0 : index
    %c0_68 = arith.constant 0 : index
    %50 = vector.load %arg1[%c0_63, %c0_64, %c1_65, %c1_66, %c0_67, %c0_68] : memref<1x2x2x9x9x4xf32, #tpu.memory_space<vmem>>, vector<1x1x1x8x8x4xf32>
    %51 = vector.shape_cast %50 : vector<1x1x1x8x8x4xf32> to vector<8x8x4xf32>
    %52 = vector.shape_cast %51 : vector<8x8x4xf32> to vector<64x4xf32>
    %c7 = arith.constant 7 : index
    %c0_69 = arith.constant 0 : index
    %c0_70 = arith.constant 0 : index
    %53 = vector.load %arg2[%c7, %c0_69, %c0_70] : memref<9x4x128xf32, #tpu.memory_space<vmem>>, vector<1x4x128xf32>
    %54 = vector.shape_cast %53 : vector<1x4x128xf32> to vector<4x128xf32>
    %cst_71 = arith.constant dense<0.000000e+00> : vector<64x128xf32>
    %55 = tpu.matmul %52, %54, %cst_71 {dimension_numbers = #tpu.dot_dimension_numbers<[1], [0], [0], [1], [0, 0, 1, 1], [], []>} : vector<64x4xf32>, vector<4x128xf32>, vector<64x128xf32> -> vector<64x128xf32>
    %56 = arith.addf %49, %55 : vector<64x128xf32>
    %c0_72 = arith.constant 0 : index
    %c0_73 = arith.constant 0 : index
    %c0_74 = arith.constant 0 : index
    %c1_75 = arith.constant 1 : index
    %c1_76 = arith.constant 1 : index
    %c0_77 = arith.constant 0 : index
    %57 = vector.load %arg1[%c0_72, %c0_73, %c0_74, %c1_75, %c1_76, %c0_77] : memref<1x2x2x9x9x4xf32, #tpu.memory_space<vmem>>, vector<1x1x1x8x8x4xf32>
    %58 = vector.shape_cast %57 : vector<1x1x1x8x8x4xf32> to vector<8x8x4xf32>
    %59 = vector.shape_cast %58 : vector<8x8x4xf32> to vector<64x4xf32>
    %c8 = arith.constant 8 : index
    %c0_78 = arith.constant 0 : index
    %c0_79 = arith.constant 0 : index
    %60 = vector.load %arg2[%c8, %c0_78, %c0_79] : memref<9x4x128xf32, #tpu.memory_space<vmem>>, vector<1x4x128xf32>
    %61 = vector.shape_cast %60 : vector<1x4x128xf32> to vector<4x128xf32>
    %cst_80 = arith.constant dense<0.000000e+00> : vector<64x128xf32>
    %62 = tpu.matmul %59, %61, %cst_80 {dimension_numbers = #tpu.dot_dimension_numbers<[1], [0], [0], [1], [0, 0, 1, 1], [], []>} : vector<64x4xf32>, vector<4x128xf32>, vector<64x128xf32> -> vector<64x128xf32>
    %63 = arith.addf %56, %62 : vector<64x128xf32>
    %c0_81 = arith.constant 0 : index
    %c0_82 = arith.constant 0 : index
    %64 = vector.load %arg3[%c0_81, %c0_82] : memref<1x128xf32, #tpu.memory_space<vmem>>, vector<1x128xf32>
    %65 = vector.broadcast %64 : vector<1x128xf32> to vector<64x128xf32>
    %66 = arith.addf %63, %65 : vector<64x128xf32>
    %cst_83 = arith.constant 0.000000e+00 : f32
    %67 = vector.broadcast %cst_83 : f32 to vector<64x128xf32>
    %68 = arith.maximumf %66, %67 : vector<64x128xf32>
    %cst_84 = arith.constant 0.000000e+00 : f32
    %69 = vector.broadcast %cst_84 : f32 to vector<10x10x128xf32>
    %c0_85 = arith.constant 0 : index
    %c0_86 = arith.constant 0 : index
    %c0_87 = arith.constant 0 : index
    %70 = vector.load %arg9[%c0_85, %c0_86, %c0_87] : memref<10x10x128xf32, #tpu.memory_space<vmem>>, vector<10x10x128xf32>
    tpu.vector_store %arg9[%c0_85, %c0_86, %c0_87], %69 {strides = array<i32>} : memref<10x10x128xf32, #tpu.memory_space<vmem>>, vector<10x10x128xf32>,
    %71 = vector.shape_cast %68 : vector<64x128xf32> to vector<8x8x128xf32>
    %c1_88 = arith.constant 1 : index
    %c1_89 = arith.constant 1 : index
    %c0_90 = arith.constant 0 : index
    %72 = vector.load %arg9[%c1_88, %c1_89, %c0_90] : memref<10x10x128xf32, #tpu.memory_space<vmem>>, vector<8x8x128xf32>
    tpu.vector_store %arg9[%c1_88, %c1_89, %c0_90], %71 {strides = array<i32>} : memref<10x10x128xf32, #tpu.memory_space<vmem>>, vector<8x8x128xf32>,
    %cst_91 = arith.constant 0.000000e+00 : f32
    %73 = vector.broadcast %cst_91 : f32 to vector<64x128xf32>
    %c0_92 = arith.constant 0 : index
    %c0_93 = arith.constant 0 : index
    %c0_94 = arith.constant 0 : index
    %74 = vector.load %arg9[%c0_92, %c0_93, %c0_94] : memref<10x10x128xf32, #tpu.memory_space<vmem>>, vector<8x8x128xf32>
    %75 = vector.shape_cast %74 : vector<8x8x128xf32> to vector<64x128xf32>
    %c0_95 = arith.constant 0 : index
    %c0_96 = arith.constant 0 : index
    %c0_97 = arith.constant 0 : index
    %76 = vector.load %arg4[%c0_95, %c0_96, %c0_97] : memref<9x128x128xf32, #tpu.memory_space<vmem>>, vector<1x128x128xf32>
    %77 = vector.shape_cast %76 : vector<1x128x128xf32> to vector<128x128xf32>
    %cst_98 = arith.constant dense<0.000000e+00> : vector<64x128xf32>
    %78 = tpu.matmul %75, %77, %cst_98 {dimension_numbers = #tpu.dot_dimension_numbers<[1], [0], [0], [1], [0, 0, 1, 1], [], []>} : vector<64x128xf32>, vector<128x128xf32>, vector<64x128xf32> -> vector<64x128xf32>
    %79 = arith.addf %73, %78 : vector<64x128xf32>
    %c0_99 = arith.constant 0 : index
    %c1_100 = arith.constant 1 : index
    %c0_101 = arith.constant 0 : index
    %80 = vector.load %arg9[%c0_99, %c1_100, %c0_101] : memref<10x10x128xf32, #tpu.memory_space<vmem>>, vector<8x8x128xf32>
    %81 = vector.shape_cast %80 : vector<8x8x128xf32> to vector<64x128xf32>
    %c1_102 = arith.constant 1 : index
    %c0_103 = arith.constant 0 : index
    %c0_104 = arith.constant 0 : index
    %82 = vector.load %arg4[%c1_102, %c0_103, %c0_104] : memref<9x128x128xf32, #tpu.memory_space<vmem>>, vector<1x128x128xf32>
    %83 = vector.shape_cast %82 : vector<1x128x128xf32> to vector<128x128xf32>
    %cst_105 = arith.constant dense<0.000000e+00> : vector<64x128xf32>
    %84 = tpu.matmul %81, %83, %cst_105 {dimension_numbers = #tpu.dot_dimension_numbers<[1], [0], [0], [1], [0, 0, 1, 1], [], []>} : vector<64x128xf32>, vector<128x128xf32>, vector<64x128xf32> -> vector<64x128xf32>
    %85 = arith.addf %79, %84 : vector<64x128xf32>
    %c0_106 = arith.constant 0 : index
    %c2_107 = arith.constant 2 : index
    %c0_108 = arith.constant 0 : index
    %86 = vector.load %arg9[%c0_106, %c2_107, %c0_108] : memref<10x10x128xf32, #tpu.memory_space<vmem>>, vector<8x8x128xf32>
    %87 = vector.shape_cast %86 : vector<8x8x128xf32> to vector<64x128xf32>
    %c2_109 = arith.constant 2 : index
    %c0_110 = arith.constant 0 : index
    %c0_111 = arith.constant 0 : index
    %88 = vector.load %arg4[%c2_109, %c0_110, %c0_111] : memref<9x128x128xf32, #tpu.memory_space<vmem>>, vector<1x128x128xf32>
    %89 = vector.shape_cast %88 : vector<1x128x128xf32> to vector<128x128xf32>
    %cst_112 = arith.constant dense<0.000000e+00> : vector<64x128xf32>
    %90 = tpu.matmul %87, %89, %cst_112 {dimension_numbers = #tpu.dot_dimension_numbers<[1], [0], [0], [1], [0, 0, 1, 1], [], []>} : vector<64x128xf32>, vector<128x128xf32>, vector<64x128xf32> -> vector<64x128xf32>
    %91 = arith.addf %85, %90 : vector<64x128xf32>
    %c1_113 = arith.constant 1 : index
    %c0_114 = arith.constant 0 : index
    %c0_115 = arith.constant 0 : index
    %92 = vector.load %arg9[%c1_113, %c0_114, %c0_115] : memref<10x10x128xf32, #tpu.memory_space<vmem>>, vector<8x8x128xf32>
    %93 = vector.shape_cast %92 : vector<8x8x128xf32> to vector<64x128xf32>
    %c3_116 = arith.constant 3 : index
    %c0_117 = arith.constant 0 : index
    %c0_118 = arith.constant 0 : index
    %94 = vector.load %arg4[%c3_116, %c0_117, %c0_118] : memref<9x128x128xf32, #tpu.memory_space<vmem>>, vector<1x128x128xf32>
    %95 = vector.shape_cast %94 : vector<1x128x128xf32> to vector<128x128xf32>
    %cst_119 = arith.constant dense<0.000000e+00> : vector<64x128xf32>
    %96 = tpu.matmul %93, %95, %cst_119 {dimension_numbers = #tpu.dot_dimension_numbers<[1], [0], [0], [1], [0, 0, 1, 1], [], []>} : vector<64x128xf32>, vector<128x128xf32>, vector<64x128xf32> -> vector<64x128xf32>
    %97 = arith.addf %91, %96 : vector<64x128xf32>
    %c1_120 = arith.constant 1 : index
    %c1_121 = arith.constant 1 : index
    %c0_122 = arith.constant 0 : index
    %98 = vector.load %arg9[%c1_120, %c1_121, %c0_122] : memref<10x10x128xf32, #tpu.memory_space<vmem>>, vector<8x8x128xf32>
    %99 = vector.shape_cast %98 : vector<8x8x128xf32> to vector<64x128xf32>
    %c4_123 = arith.constant 4 : index
    %c0_124 = arith.constant 0 : index
    %c0_125 = arith.constant 0 : index
    %100 = vector.load %arg4[%c4_123, %c0_124, %c0_125] : memref<9x128x128xf32, #tpu.memory_space<vmem>>, vector<1x128x128xf32>
    %101 = vector.shape_cast %100 : vector<1x128x128xf32> to vector<128x128xf32>
    %cst_126 = arith.constant dense<0.000000e+00> : vector<64x128xf32>
    %102 = tpu.matmul %99, %101, %cst_126 {dimension_numbers = #tpu.dot_dimension_numbers<[1], [0], [0], [1], [0, 0, 1, 1], [], []>} : vector<64x128xf32>, vector<128x128xf32>, vector<64x128xf32> -> vector<64x128xf32>
    %103 = arith.addf %97, %102 : vector<64x128xf32>
    %c1_127 = arith.constant 1 : index
    %c2_128 = arith.constant 2 : index
    %c0_129 = arith.constant 0 : index
    %104 = vector.load %arg9[%c1_127, %c2_128, %c0_129] : memref<10x10x128xf32, #tpu.memory_space<vmem>>, vector<8x8x128xf32>
    %105 = vector.shape_cast %104 : vector<8x8x128xf32> to vector<64x128xf32>
    %c5_130 = arith.constant 5 : index
    %c0_131 = arith.constant 0 : index
    %c0_132 = arith.constant 0 : index
    %106 = vector.load %arg4[%c5_130, %c0_131, %c0_132] : memref<9x128x128xf32, #tpu.memory_space<vmem>>, vector<1x128x128xf32>
    %107 = vector.shape_cast %106 : vector<1x128x128xf32> to vector<128x128xf32>
    %cst_133 = arith.constant dense<0.000000e+00> : vector<64x128xf32>
    %108 = tpu.matmul %105, %107, %cst_133 {dimension_numbers = #tpu.dot_dimension_numbers<[1], [0], [0], [1], [0, 0, 1, 1], [], []>} : vector<64x128xf32>, vector<128x128xf32>, vector<64x128xf32> -> vector<64x128xf32>
    %109 = arith.addf %103, %108 : vector<64x128xf32>
    %c2_134 = arith.constant 2 : index
    %c0_135 = arith.constant 0 : index
    %c0_136 = arith.constant 0 : index
    %110 = vector.load %arg9[%c2_134, %c0_135, %c0_136] : memref<10x10x128xf32, #tpu.memory_space<vmem>>, vector<8x8x128xf32>
    %111 = vector.shape_cast %110 : vector<8x8x128xf32> to vector<64x128xf32>
    %c6_137 = arith.constant 6 : index
    %c0_138 = arith.constant 0 : index
    %c0_139 = arith.constant 0 : index
    %112 = vector.load %arg4[%c6_137, %c0_138, %c0_139] : memref<9x128x128xf32, #tpu.memory_space<vmem>>, vector<1x128x128xf32>
    %113 = vector.shape_cast %112 : vector<1x128x128xf32> to vector<128x128xf32>
    %cst_140 = arith.constant dense<0.000000e+00> : vector<64x128xf32>
    %114 = tpu.matmul %111, %113, %cst_140 {dimension_numbers = #tpu.dot_dimension_numbers<[1], [0], [0], [1], [0, 0, 1, 1], [], []>} : vector<64x128xf32>, vector<128x128xf32>, vector<64x128xf32> -> vector<64x128xf32>
    %115 = arith.addf %109, %114 : vector<64x128xf32>
    %c2_141 = arith.constant 2 : index
    %c1_142 = arith.constant 1 : index
    %c0_143 = arith.constant 0 : index
    %116 = vector.load %arg9[%c2_141, %c1_142, %c0_143] : memref<10x10x128xf32, #tpu.memory_space<vmem>>, vector<8x8x128xf32>
    %117 = vector.shape_cast %116 : vector<8x8x128xf32> to vector<64x128xf32>
    %c7_144 = arith.constant 7 : index
    %c0_145 = arith.constant 0 : index
    %c0_146 = arith.constant 0 : index
    %118 = vector.load %arg4[%c7_144, %c0_145, %c0_146] : memref<9x128x128xf32, #tpu.memory_space<vmem>>, vector<1x128x128xf32>
    %119 = vector.shape_cast %118 : vector<1x128x128xf32> to vector<128x128xf32>
    %cst_147 = arith.constant dense<0.000000e+00> : vector<64x128xf32>
    %120 = tpu.matmul %117, %119, %cst_147 {dimension_numbers = #tpu.dot_dimension_numbers<[1], [0], [0], [1], [0, 0, 1, 1], [], []>} : vector<64x128xf32>, vector<128x128xf32>, vector<64x128xf32> -> vector<64x128xf32>
    %121 = arith.addf %115, %120 : vector<64x128xf32>
    %c2_148 = arith.constant 2 : index
    %c2_149 = arith.constant 2 : index
    %c0_150 = arith.constant 0 : index
    %122 = vector.load %arg9[%c2_148, %c2_149, %c0_150] : memref<10x10x128xf32, #tpu.memory_space<vmem>>, vector<8x8x128xf32>
    %123 = vector.shape_cast %122 : vector<8x8x128xf32> to vector<64x128xf32>
    %c8_151 = arith.constant 8 : index
    %c0_152 = arith.constant 0 : index
    %c0_153 = arith.constant 0 : index
    %124 = vector.load %arg4[%c8_151, %c0_152, %c0_153] : memref<9x128x128xf32, #tpu.memory_space<vmem>>, vector<1x128x128xf32>
    %125 = vector.shape_cast %124 : vector<1x128x128xf32> to vector<128x128xf32>
    %cst_154 = arith.constant dense<0.000000e+00> : vector<64x128xf32>
    %126 = tpu.matmul %123, %125, %cst_154 {dimension_numbers = #tpu.dot_dimension_numbers<[1], [0], [0], [1], [0, 0, 1, 1], [], []>} : vector<64x128xf32>, vector<128x128xf32>, vector<64x128xf32> -> vector<64x128xf32>
    %127 = arith.addf %121, %126 : vector<64x128xf32>
    %c0_155 = arith.constant 0 : index
    %c0_156 = arith.constant 0 : index
    %128 = vector.load %arg5[%c0_155, %c0_156] : memref<1x128xf32, #tpu.memory_space<vmem>>, vector<1x128xf32>
    %129 = vector.broadcast %128 : vector<1x128xf32> to vector<64x128xf32>
    %130 = arith.addf %127, %129 : vector<64x128xf32>
    %c0_157 = arith.constant 0 : index
    %c1_158 = arith.constant 1 : index
    %c1_159 = arith.constant 1 : index
    %c0_160 = arith.constant 0 : index
    %c0_161 = arith.constant 0 : index
    %c0_162 = arith.constant 0 : index
    %131 = vector.load %arg1[%c0_157, %c1_158, %c1_159, %c0_160, %c0_161, %c0_162] : memref<1x2x2x9x9x4xf32, #tpu.memory_space<vmem>>, vector<1x1x1x8x8x4xf32>
    %132 = vector.shape_cast %131 : vector<1x1x1x8x8x4xf32> to vector<8x8x4xf32>
    %133 = vector.shape_cast %132 : vector<8x8x4xf32> to vector<64x4xf32>
    %c0_163 = arith.constant 0 : index
    %c0_164 = arith.constant 0 : index
    %134 = vector.load %arg6[%c0_163, %c0_164] : memref<4x128xf32, #tpu.memory_space<vmem>>, vector<4x128xf32>
    %cst_165 = arith.constant dense<0.000000e+00> : vector<64x128xf32>
    %135 = tpu.matmul %133, %134, %cst_165 {dimension_numbers = #tpu.dot_dimension_numbers<[1], [0], [0], [1], [0, 0, 1, 1], [], []>} : vector<64x4xf32>, vector<4x128xf32>, vector<64x128xf32> -> vector<64x128xf32>
    %136 = arith.addf %130, %135 : vector<64x128xf32>
    %c0_166 = arith.constant 0 : index
    %c0_167 = arith.constant 0 : index
    %137 = vector.load %arg7[%c0_166, %c0_167] : memref<1x128xf32, #tpu.memory_space<vmem>>, vector<1x128xf32>
    %138 = vector.broadcast %137 : vector<1x128xf32> to vector<64x128xf32>
    %139 = arith.addf %136, %138 : vector<64x128xf32>
    %cst_168 = arith.constant 0.000000e+00 : f32
    %140 = vector.broadcast %cst_168 : f32 to vector<64x128xf32>
    %141 = arith.maximumf %139, %140 : vector<64x128xf32>
    %142 = vector.shape_cast %141 : vector<64x128xf32> to vector<8x8x128xf32>
    %c0_169 = arith.constant 0 : index
    %c0_170 = arith.constant 0 : index
    %c0_171 = arith.constant 0 : index
    %c0_172 = arith.constant 0 : index
    %143 = vector.load %arg8[%c0_169, %c0_170, %c0_171, %c0_172] : memref<1x8x8x128xf32, #tpu.memory_space<vmem>>, vector<1x8x8x128xf32>
    %144 = vector.shape_cast %143 : vector<1x8x8x128xf32> to vector<8x8x128xf32>
    %145 = vector.shape_cast %142 : vector<8x8x128xf32> to vector<1x8x8x128xf32>
    tpu.vector_store %arg8[%c0_169, %c0_170, %c0_171, %c0_172], %145 {strides = array<i32>} : memref<1x8x8x128xf32, #tpu.memory_space<vmem>>, vector<1x8x8x128xf32>,
    return
  }
  func.func @transform_0(%arg0: i32) -> (i32, i32, i32, i32, i32, i32) {
    %c0_i32 = arith.constant 0 : i32
    %c0_i32_0 = arith.constant 0 : i32
    %c0_i32_1 = arith.constant 0 : i32
    %c0_i32_2 = arith.constant 0 : i32
    %c0_i32_3 = arith.constant 0 : i32
    %c0_i32_4 = arith.constant 0 : i32
    return %arg0, %c0_i32, %c0_i32_0, %c0_i32_1, %c0_i32_2, %c0_i32_3 : i32, i32, i32, i32, i32, i32
  }
  func.func @transform_1(%arg0: i32) -> (i32, i32, i32) {
    %c0_i32 = arith.constant 0 : i32
    %c0_i32_0 = arith.constant 0 : i32
    %c0_i32_1 = arith.constant 0 : i32
    %c0_i32_2 = arith.constant 0 : i32
    return %c0_i32, %c0_i32_0, %c0_i32_1 : i32, i32, i32
  }
  func.func @transform_2(%arg0: i32) -> (i32, i32) {
    %c0_i32 = arith.constant 0 : i32
    %c0_i32_0 = arith.constant 0 : i32
    %c0_i32_1 = arith.constant 0 : i32
    return %c0_i32, %c0_i32_0 : i32, i32
  }
  func.func @transform_3(%arg0: i32) -> (i32, i32, i32) {
    %c0_i32 = arith.constant 0 : i32
    %c0_i32_0 = arith.constant 0 : i32
    %c0_i32_1 = arith.constant 0 : i32
    %c0_i32_2 = arith.constant 0 : i32
    return %c0_i32, %c0_i32_0, %c0_i32_1 : i32, i32, i32
  }
  func.func @transform_4(%arg0: i32) -> (i32, i32) {
    %c0_i32 = arith.constant 0 : i32
    %c0_i32_0 = arith.constant 0 : i32
    %c0_i32_1 = arith.constant 0 : i32
    return %c0_i32, %c0_i32_0 : i32, i32
  }
  func.func @transform_5(%arg0: i32) -> (i32, i32) {
    %c0_i32 = arith.constant 0 : i32
    %c0_i32_0 = arith.constant 0 : i32
    %c0_i32_1 = arith.constant 0 : i32
    return %c0_i32, %c0_i32_0 : i32, i32
  }
  func.func @transform_6(%arg0: i32) -> (i32, i32) {
    %c0_i32 = arith.constant 0 : i32
    %c0_i32_0 = arith.constant 0 : i32
    %c0_i32_1 = arith.constant 0 : i32
    return %c0_i32, %c0_i32_0 : i32, i32
  }
  func.func @transform_7(%arg0: i32) -> (i32, i32, i32, i32) {
    %c0_i32 = arith.constant 0 : i32
    %c0_i32_0 = arith.constant 0 : i32
    %c0_i32_1 = arith.constant 0 : i32
    %c0_i32_2 = arith.constant 0 : i32
    return %arg0, %c0_i32, %c0_i32_0, %c0_i32_1 : i32, i32, i32, i32
  }
}

</mosaic_0001>

<llo_original>
// kernel: tpu_custom_call.1
$region0: #{tpu_custom_call.1}
  #allocation0 [shape = 'u32[]', space=smem, size = 0x4, offset = 0x4, fixed_abs, tag = 'smem constant byte address 0x4 - core index']
  #allocation1 [shape = 'u32[144,128]{1,0:T(1,128)}', space=vmem, size = 0x12000, scoped, tag = 'internal scratch']
  #allocation2 [shape = 'f32[10,10,128]{2,1,0:T(8,128)}', space=vmem, size = 0x14000, scoped, tag = 'scratch operand']
  %s0 = inlined_call_operand.vmem [shape: f32[2,2,2,9,9,4], index: 0, kind: input, shape index: {}]
  %s1 = inlined_call_operand.vmem [shape: f32[9,4,128], index: 1, kind: input, shape index: {}]
  %s2 = inlined_call_operand.vmem [shape: f32[1,128], index: 2, kind: input, shape index: {}]
  %s3 = inlined_call_operand.vmem [shape: f32[9,128,128], index: 3, kind: input, shape index: {}]
  %s4 = inlined_call_operand.vmem [shape: f32[1,128], index: 4, kind: input, shape index: {}]
  %s5 = inlined_call_operand.vmem [shape: f32[4,128], index: 5, kind: input, shape index: {}]
  %s6 = inlined_call_operand.vmem [shape: f32[1,128], index: 6, kind: input, shape index: {}]
  %s7 = inlined_call_operand.hbm [shape: f32[2,8,8,128], index: 7, kind: output, shape index: {}]
  %s8 = sld [smem:[#allocation0]]
  $region61: #{tpu_custom_call.1} parent=0
    _
  %s10 = ssub.s32 1, %s8
  %s11 = scalar_select 0, %s10, %s8
  $region1: #{tpu_custom_call.1} parent=0
    #allocation3 [shape = 'u8[65536]{0}', space=vmem, size = 0x10000, scoped, tag = 'output window, operand 0']
    #allocation4 [shape = 's32[2]{0}', space=sflag, size = 0x8, scoped, tag = 'scoped memory for tpu_custom_call.1']
    %12 = vsyncpa [#allocation4], 0
    %s13 = scalar_lea.sflag [#allocation4], 1
    %14 = vsyncpa %s13, 0
    loop: start=0, step=1, limit=4
    $region2: #{tpu_custom_call.1} parent=1 // loop_pre_header
      _
    $region3: #{tpu_custom_call.1} parent=1 // loop_header
      %s16 = sphi 0, %s20
      %p17 = scmp.ge.s32.totalorder %s16, 4
      %s26 = sphi 0, %s28
      %s29 = sphi 0, %s26
      %s30 = sphi 0, %s29
      %s46 = sphi 0, %s30
      %s50 = sphi 0, %s50
      %s52 = sphi 0, %s50
      %s53 = sphi 0, %s52
      %s67 = sphi 0, %s53
      %s71 = sphi 0, %s71
      %s73 = sphi 0, %s71
      %s74 = sphi 0, %s73
      %s88 = sphi 0, %s74
      %s92 = sphi 0, %s92
      %s94 = sphi 0, %s92
      %s95 = sphi 0, %s94
      %s109 = sphi 0, %s95
      %s113 = sphi 0, %s113
      %s115 = sphi 0, %s113
      %s116 = sphi 0, %s115
      %s130 = sphi 0, %s116
      %s134 = sphi 0, %s134
      %s136 = sphi 0, %s134
      %s137 = sphi 0, %s136
      %s151 = sphi 0, %s137
      %s155 = sphi 0, %s155
      %s157 = sphi 0, %s155
      %s158 = sphi 0, %s157
      %s172 = sphi 0, %s158
      %s178 = sphi 0, %s180
      %s181 = sphi 0, %s178
      %s182 = sphi 0, %s181
      %s198 = sphi 0, %s182
    $region4: #{tpu_custom_call.1} parent=1 // loop_header_branch
      %19 = sbr.rel (%p17) target = $region8
    $region5: #{tpu_custom_call.1} parent=1 // loop_body
      %s21 = ssub.s32 %s16, 1
      %s22 = ssub.s32 %s16, 2
      %s23 = sadd.s32 %s16, 1
      %s24 = ssub.s32 %s16, %s23
      %p25 = scmp.eq.s32.totalorder %s24, 0
      %s27 = sadd.s32 %s26, 1
      %s28 = scalar_select %p25, %s26, %s27
      %p31 = pneg %p25
      %p32 = scmp.eq.s32.totalorder %s16, 1
      %p33 = por %p31, %p32
      %p34 = scmp.ne.s32.totalorder %s26, %s29
      %p35 = scmp.eq.s32.totalorder %s16, 0
      %p36 = por %p34, %p35
      %p37 = scmp.ne.s32.totalorder %s26, %s29
      %p38 = scmp.eq.s32.totalorder %s21, 1
      %p39 = por %p37, %p38
      %p40 = scmp.ne.s32.totalorder %s29, %s30
      %p41 = scmp.eq.s32.totalorder %s21, 0
      %p42 = por %p40, %p41
      %p43 = scmp.ne.s32.totalorder %s29, %s30
      %p44 = scmp.eq.s32.totalorder %s22, 1
      %p45 = por %p43, %p44
      %p47 = scmp.ne.s32.totalorder %s30, %s46
      %p48 = scmp.eq.s32.totalorder %s22, 0
      %p49 = por %p47, %p48
      %s51 = sadd.s32 %s50, 1
      %p54 = scmp.eq.s32.totalorder %s16, 1
      %p55 = scmp.ne.s32.totalorder %s50, %s52
      %p56 = scmp.eq.s32.totalorder %s16, 0
      %p57 = por %p55, %p56
      %p58 = scmp.ne.s32.totalorder %s50, %s52
      %p59 = scmp.eq.s32.totalorder %s21, 1
      %p60 = por %p58, %p59
      %p61 = scmp.ne.s32.totalorder %s52, %s53
      %p62 = scmp.eq.s32.totalorder %s21, 0
      %p63 = por %p61, %p62
      %p64 = scmp.ne.s32.totalorder %s52, %s53
      %p65 = scmp.eq.s32.totalorder %s22, 1
      %p66 = por %p64, %p65
      %p68 = scmp.ne.s32.totalorder %s53, %s67
      %p69 = scmp.eq.s32.totalorder %s22, 0
      %p70 = por %p68, %p69
      %s72 = sadd.s32 %s71, 1
      %p75 = scmp.eq.s32.totalorder %s16, 1
      %p76 = scmp.ne.s32.totalorder %s71, %s73
      %p77 = scmp.eq.s32.totalorder %s16, 0
      %p78 = por %p76, %p77
      %p79 = scmp.ne.s32.totalorder %s71, %s73
      %p80 = scmp.eq.s32.totalorder %s21, 1
      %p81 = por %p79, %p80
      %p82 = scmp.ne.s32.totalorder %s73, %s74
      %p83 = scmp.eq.s32.totalorder %s21, 0
      %p84 = por %p82, %p83
      %p85 = scmp.ne.s32.totalorder %s73, %s74
      %p86 = scmp.eq.s32.totalorder %s22, 1
      %p87 = por %p85, %p86
      %p89 = scmp.ne.s32.totalorder %s74, %s88
      %p90 = scmp.eq.s32.totalorder %s22, 0
      %p91 = por %p89, %p90
      %s93 = sadd.s32 %s92, 1
      %p96 = scmp.eq.s32.totalorder %s16, 1
      %p97 = scmp.ne.s32.totalorder %s92, %s94
      %p98 = scmp.eq.s32.totalorder %s16, 0
      %p99 = por %p97, %p98
      %p100 = scmp.ne.s32.totalorder %s92, %s94
      %p101 = scmp.eq.s32.totalorder %s21, 1
      %p102 = por %p100, %p101
      %p103 = scmp.ne.s32.totalorder %s94, %s95
      %p104 = scmp.eq.s32.totalorder %s21, 0
      %p105 = por %p103, %p104
      %p106 = scmp.ne.s32.totalorder %s94, %s95
      %p107 = scmp.eq.s32.totalorder %s22, 1
      %p108 = por %p106, %p107
      %p110 = scmp.ne.s32.totalorder %s95, %s109
      %p111 = scmp.eq.s32.totalorder %s22, 0
      %p112 = por %p110, %p111
      %s114 = sadd.s32 %s113, 1
      %p117 = scmp.eq.s32.totalorder %s16, 1
      %p118 = scmp.ne.s32.totalorder %s113, %s115
      %p119 = scmp.eq.s32.totalorder %s16, 0
      %p120 = por %p118, %p119
      %p121 = scmp.ne.s32.totalorder %s113, %s115
      %p122 = scmp.eq.s32.totalorder %s21, 1
      %p123 = por %p121, %p122
      %p124 = scmp.ne.s32.totalorder %s115, %s116
      %p125 = scmp.eq.s32.totalorder %s21, 0
      %p126 = por %p124, %p125
      %p127 = scmp.ne.s32.totalorder %s115, %s116
      %p128 = scmp.eq.s32.totalorder %s22, 1
      %p129 = por %p127, %p128
      %p131 = scmp.ne.s32.totalorder %s116, %s130
      %p132 = scmp.eq.s32.totalorder %s22, 0
      %p133 = por %p131, %p132
      %s135 = sadd.s32 %s134, 1
      %p138 = scmp.eq.s32.totalorder %s16, 1
      %p139 = scmp.ne.s32.totalorder %s134, %s136
      %p140 = scmp.eq.s32.totalorder %s16, 0
      %p141 = por %p139, %p140
      %p142 = scmp.ne.s32.totalorder %s134, %s136
      %p143 = scmp.eq.s32.totalorder %s21, 1
      %p144 = por %p142, %p143
      %p145 = scmp.ne.s32.totalorder %s136, %s137
      %p146 = scmp.eq.s32.totalorder %s21, 0
      %p147 = por %p145, %p146
      %p148 = scmp.ne.s32.totalorder %s136, %s137
      %p149 = scmp.eq.s32.totalorder %s22, 1
      %p150 = por %p148, %p149
      %p152 = scmp.ne.s32.totalorder %s137, %s151
      %p153 = scmp.eq.s32.totalorder %s22, 0
      %p154 = por %p152, %p153
      %s156 = sadd.s32 %s155, 1
      %p159 = scmp.eq.s32.totalorder %s16, 1
      %p160 = scmp.ne.s32.totalorder %s155, %s157
      %p161 = scmp.eq.s32.totalorder %s16, 0
      %p162 = por %p160, %p161
      %p163 = scmp.ne.s32.totalorder %s155, %s157
      %p164 = scmp.eq.s32.totalorder %s21, 1
      %p165 = por %p163, %p164
      %p166 = scmp.ne.s32.totalorder %s157, %s158
      %p167 = scmp.eq.s32.totalorder %s21, 0
      %p168 = por %p166, %p167
      %p169 = scmp.ne.s32.totalorder %s157, %s158
      %p170 = scmp.eq.s32.totalorder %s22, 1
      %p171 = por %p169, %p170
      %p173 = scmp.ne.s32.totalorder %s158, %s172
      %p174 = scmp.eq.s32.totalorder %s22, 0
      %p175 = por %p173, %p174
      %s176 = ssub.s32 %s16, %s23
      %p177 = scmp.eq.s32.totalorder %s176, 0
      %s179 = sadd.s32 %s178, 1
      %s180 = scalar_select %p177, %s178, %s179
      %p183 = pneg %p177
      %p184 = scmp.eq.s32.totalorder %s16, 1
      %p185 = por %p183, %p184
      %p186 = scmp.ne.s32.totalorder %s178, %s181
      %p187 = scmp.eq.s32.totalorder %s16, 0
      %p188 = por %p186, %p187
      %p189 = scmp.ne.s32.totalorder %s178, %s181
      %p190 = scmp.eq.s32.totalorder %s21, 1
      %p191 = por %p189, %p190
      %p192 = scmp.ne.s32.totalorder %s181, %s182
      %p193 = scmp.eq.s32.totalorder %s21, 0
      %p194 = por %p192, %p193
      %p195 = scmp.ne.s32.totalorder %s181, %s182
      %p196 = scmp.eq.s32.totalorder %s22, 1
      %p197 = por %p195, %p196
      %p199 = scmp.ne.s32.totalorder %s182, %s198
      %p200 = scmp.eq.s32.totalorder %s22, 0
      %p201 = por %p199, %p200
      %p202 = scmp.le.s32.totalorder 1, %s16
      %p203 = scmp.lt.s32.totalorder %s16, 3
      %p204 = pnand %p202, %p203
      %p205 = pneg %p204
      // Predicated region
      $region9: #{tpu_custom_call.1} parent=5 // pred_check
        _
      $region10: #{tpu_custom_call.1} parent=5 // pred_check_branch
        %207 = sbr.rel (%p204) target = $region12
      $region11: #{tpu_custom_call.1} parent=5 // pred_region
        %s208 = ssub.s32 %s16, 1
        // Predicated region
        $region13: #{tpu_custom_call.1} parent=11 // pred_check
          %p209 = pneg %p63
        $region14: #{tpu_custom_call.1} parent=11 // pred_check_branch
          %211 = sbr.rel (%p209) target = $region16
        $region15: #{tpu_custom_call.1} parent=11 // pred_region
          _
        $region16: #{tpu_custom_call.1} parent=11 // pred_fallthru
          _
        // Predicated region
        $region17: #{tpu_custom_call.1} parent=11 // pred_check
          %p212 = pneg %p84
        $region18: #{tpu_custom_call.1} parent=11 // pred_check_branch
          %214 = sbr.rel (%p212) target = $region20
        $region19: #{tpu_custom_call.1} parent=11 // pred_region
          _
        $region20: #{tpu_custom_call.1} parent=11 // pred_fallthru
          _
        // Predicated region
        $region21: #{tpu_custom_call.1} parent=11 // pred_check
          %p215 = pneg %p105
        $region22: #{tpu_custom_call.1} parent=11 // pred_check_branch
          %217 = sbr.rel (%p215) target = $region24
        $region23: #{tpu_custom_call.1} parent=11 // pred_region
          _
        $region24: #{tpu_custom_call.1} parent=11 // pred_fallthru
          _
        // Predicated region
        $region25: #{tpu_custom_call.1} parent=11 // pred_check
          %p218 = pneg %p126
        $region26: #{tpu_custom_call.1} parent=11 // pred_check_branch
          %220 = sbr.rel (%p218) target = $region28
        $region27: #{tpu_custom_call.1} parent=11 // pred_region
          _
        $region28: #{tpu_custom_call.1} parent=11 // pred_fallthru
          _
        // Predicated region
        $region29: #{tpu_custom_call.1} parent=11 // pred_check
          %p221 = pneg %p147
        $region30: #{tpu_custom_call.1} parent=11 // pred_check_branch
          %223 = sbr.rel (%p221) target = $region32
        $region31: #{tpu_custom_call.1} parent=11 // pred_region
          _
        $region32: #{tpu_custom_call.1} parent=11 // pred_fallthru
          _
        // Predicated region
        $region33: #{tpu_custom_call.1} parent=11 // pred_check
          %p224 = pneg %p168
        $region34: #{tpu_custom_call.1} parent=11 // pred_check_branch
          %226 = sbr.rel (%p224) target = $region36
        $region35: #{tpu_custom_call.1} parent=11 // pred_region
          _
        $region36: #{tpu_custom_call.1} parent=11 // pred_fallthru
          _
      $region12: #{tpu_custom_call.1} parent=5 // pred_fallthru
        _
      %p227 = scmp.lt.s32.totalorder %s16, 2
      // Predicated region
      $region37: #{tpu_custom_call.1} parent=5 // pred_check
        %p228 = pneg %p227
      $region38: #{tpu_custom_call.1} parent=5 // pred_check_branch
        %230 = sbr.rel (%p228) target = $region40
      $region39: #{tpu_custom_call.1} parent=5 // pred_region
        // Predicated region
        $region41: #{tpu_custom_call.1} parent=39 // pred_check
          %p231 = pneg %p36
        $region42: #{tpu_custom_call.1} parent=39 // pred_check_branch
          %233 = sbr.rel (%p231) target = $region44
        $region43: #{tpu_custom_call.1} parent=39 // pred_region
          %p234 = scmp.lt.s32.totalorder %s16, 1
          %s235 = scalar_select %p234, %s16, 1
          %s236 = smul.addr %s235, 72
          %s237 = smul.addr %s236, 8
          %s238 = scalar_lea.vmem %s0, %s237
        $region44: #{tpu_custom_call.1} parent=39 // pred_fallthru
          _
      $region40: #{tpu_custom_call.1} parent=5 // pred_fallthru
        _
      %p239 = scmp.le.s32.totalorder 1, %s16
      %p240 = scmp.lt.s32.totalorder %s16, 3
      %p241 = pnand %p239, %p240
      %p242 = pneg %p241
      // Predicated region
      $region45: #{tpu_custom_call.1} parent=5 // pred_check
        _
      $region46: #{tpu_custom_call.1} parent=5 // pred_check_branch
        %244 = sbr.rel (%p241) target = $region48
      $region47: #{tpu_custom_call.1} parent=5 // pred_region
        %s245 = ssub.s32 %s16, 1
        %p246 = scmp.lt.s32.totalorder %s21, 1
        %s247 = scalar_select %p246, %s21, 1
        %s248 = smul.addr %s247, 72
        %s249 = smul.addr %s248, 8
        %s250 = scalar_lea.vmem %s0, %s249
        %p251 = pneg %p42
        %p252 = pneg %p39
        %p253 = pneg %p63
        %p254 = pneg %p60
        %p255 = pneg %p84
        %p256 = pneg %p81
        %p257 = pneg %p105
        %p258 = pneg %p102
        %p259 = pneg %p126
        %p260 = pneg %p123
        %p261 = pneg %p147
        %p262 = pneg %p144
        %p263 = pneg %p168
        %p264 = pneg %p165
        %p265 = pneg %p194
        %p266 = pneg %p191
        %s267 = sand.u32 %s181, 1
        %s268 = scalar_lea.sflag [#allocation4], %s267
        %s269 = sand.u32 %s181, 1
        %s270 = smul.addr %s269, 64
        %s271 = scalar_lea.vmem [#allocation3], %s270
        %p272 = scmp.lt.s32.totalorder %s21, 1
        %s273 = scalar_select %p272, %s21, 1
        %s274 = smul.addr %s273, 72
        %s275 = smul.addr %s274, 8
        %s276 = scalar_lea.vmem %s0, %s275
        %v277 = vld [vmem:[%s276] sm:$0xff]
        %v278 = vld [vmem:[%s276 + $0x10] sm:$0xff]
        %v279 = vld [vmem:[%s276 + $0x20] sm:$0xff]
        %v280 = vld [vmem:[%s276 + $0x30] sm:$0xff]
        %v281 = vld [vmem:[%s276 + $0x40] sm:$0xff]
        %v282 = vld [vmem:[%s276 + $0x50] sm:$0xff]
        %v283 = vld [vmem:[%s276 + $0x60] sm:$0xff]
        %v284 = vld [vmem:[%s276 + $0x70] sm:$0xff]
        %v285 = vld [vmem:[%s1] sm:$0xf]
        %s286 = scalar_lea.vmem %s276, 144
        %v287 = vld [vmem:[%s286] sm:$0xff]
        %v288 = vld [vmem:[%s286 + $0x10] sm:$0xff]
        %v289 = vld [vmem:[%s286 + $0x20] sm:$0xff]
        %v290 = vld [vmem:[%s286 + $0x30] sm:$0xff]
        %v291 = vld [vmem:[%s286 + $0x40] sm:$0xff]
        %v292 = vld [vmem:[%s286 + $0x50] sm:$0xff]
        %v293 = vld [vmem:[%s286 + $0x60] sm:$0xff]
        %v294 = vld [vmem:[%s286 + $0x70] sm:$0xff]
        %s295 = scalar_lea.vmem %s1, 4
        %v296 = vld [vmem:[%s295] sm:$0xf]
        %vm297 = vcmask 31744
        %v299 = vsel %vm297, %v287, 0
        %v302 = vsel %vm297, %v288, 0
        %v305 = vsel %vm297, %v289, 0
        %v308 = vsel %vm297, %v290, 0
        %v311 = vsel %vm297, %v291, 0
        %v314 = vsel %vm297, %v292, 0
        %v317 = vsel %vm297, %v293, 0
        %v320 = vsel %vm297, %v294, 0
        %vm322 = vcmask 1043456
        %v324 = vsel %vm322, %v296, 0
        %326 = vmatprep.subr.mxu0 0.0
        %327 = vmatpush1.msra.mxu0 %v324
        %328 = vmatprep.subr.mxu0 0.0
        %329 = vmatpush1.msra.mxu0 0.0
        %330 = vmatprep.subr.mxu0 0.0
        %331 = vmatpush1.msra.mxu0 0.0
        %332 = vmatprep.subr.mxu0 0.0
        %333 = vmatpush1.msra.mxu0 0.0
        %334 = vmatprep.subr.mxu0 0.0
        %335 = vmatpush1.msra.mxu0 0.0
        %336 = vmatprep.subr.mxu0 0.0
        %337 = vmatpush1.msra.mxu0 0.0
        %338 = vmatprep.subr.mxu0 0.0
        %339 = vmatpush1.msra.mxu0 0.0
        %340 = vmatprep.subr.mxu0 0.0
        %341 = vmatpush1.msra.mxu0 0.0
        %342 = vmatprep.subr.mxu0 0.0
        %343 = vmatpush1.msra.mxu0 0.0
        %344 = vmatprep.subr.mxu0 0.0
        %345 = vmatpush1.msra.mxu0 0.0
        %346 = vmatprep.subr.mxu0 0.0
        %347 = vmatpush1.msra.mxu0 0.0
        %348 = vmatprep.subr.mxu0 0.0
        %349 = vmatpush1.msra.mxu0 0.0
        %350 = vmatprep.subr.mxu0 0.0
        %351 = vmatpush1.msra.mxu0 0.0
        %352 = vmatprep.subr.mxu0 0.0
        %353 = vmatpush1.msra.mxu0 0.0
        %354 = vmatprep.subr.mxu0 0.0
        %355 = vmatpush1.msra.mxu0 0.0
        %356 = vmatprep.subr.mxu0 0.0
        %357 = vmatpush1.msra.mxu0 0.0
        %358 = vmatprep.subr.mxu0 0.0
        %359 = vmatpush1.msra.mxu0 0.0
        %360 = vmatprep.subr.mxu0 0.0
        %361 = vmatpush1.msra.mxu0 0.0
        %362 = vmatprep.subr.mxu0 0.0
        %363 = vmatpush1.msra.mxu0 0.0
        %364 = vmatprep.subr.mxu0 0.0
        %365 = vmatpush1.msra.mxu0 0.0
        %366 = vmatprep.subr.mxu0 0.0
        %367 = vmatpush1.msra.mxu0 0.0
        %368 = vmatprep.subr.mxu0 0.0
        %369 = vmatpush1.msra.mxu0 0.0
        %370 = vmatprep.subr.mxu0 0.0
        %371 = vmatpush1.msra.mxu0 0.0
        %372 = vmatprep.subr.mxu0 0.0
        %373 = vmatpush1.msra.mxu0 0.0
        %374 = vmatprep.subr.mxu0 0.0
        %375 = vmatpush1.msra.mxu0 0.0
        %376 = vmatprep.subr.mxu0 0.0
        %377 = vmatpush1.msra.mxu0 0.0
        %378 = vmatprep.subr.mxu0 0.0
        %379 = vmatpush1.msra.mxu0 0.0
        %380 = vmatprep.subr.mxu0 0.0
        %381 = vmatpush1.msra.mxu0 0.0
        %382 = vmatprep.subr.mxu0 0.0
        %383 = vmatpush1.msra.mxu0 0.0
        %384 = vmatprep.subr.mxu0 0.0
        %385 = vmatpush1.msra.mxu0 0.0
        %386 = vmatprep.subr.mxu0 0.0
        %387 = vmatpush1.msra.mxu0 0.0
        %388 = vmatprep.subr.mxu0 0.0
        %389 = vmatpush1.msra.mxu0 0.0
        %390 = vmatprep.mubr.f32.mxu0 0.0
        %391 = vmatmul.mubr.f32.gmra.mrb[0].mxu0 %v299
        %v392 = vpop.f32.mrb[0].mxu0
        %v393 = vadd.f32 0.0, %v392
        %v394 = vpop.f32.mrb[0].mxu0
        %395 = vmatprep.mubr.f32.mxu0 0.0
        %396 = vmatmul.mubr.f32.gmra.mrb[0].mxu0 %v302
        %v397 = vpop.f32.mrb[0].mxu0
        %v398 = vadd.f32 0.0, %v397
        %v399 = vpop.f32.mrb[0].mxu0
        %400 = vmatprep.mubr.f32.mxu0 0.0
        %401 = vmatmul.mubr.f32.gmra.mrb[0].mxu0 %v305
        %v402 = vpop.f32.mrb[0].mxu0
        %v403 = vadd.f32 0.0, %v402
        %v404 = vpop.f32.mrb[0].mxu0
        %405 = vmatprep.mubr.f32.mxu0 0.0
        %406 = vmatmul.mubr.f32.gmra.mrb[0].mxu0 %v308
        %v407 = vpop.f32.mrb[0].mxu0
        %v408 = vadd.f32 0.0, %v407
        %v409 = vpop.f32.mrb[0].mxu0
        %410 = vmatprep.mubr.f32.mxu0 0.0
        %411 = vmatmul.mubr.f32.gmra.mrb[0].mxu0 %v311
        %v412 = vpop.f32.mrb[0].mxu0
        %v413 = vadd.f32 0.0, %v412
        %v414 = vpop.f32.mrb[0].mxu0
        %415 = vmatprep.mubr.f32.mxu0 0.0
        %416 = vmatmul.mubr.f32.gmra.mrb[0].mxu0 %v314
        %v417 = vpop.f32.mrb[0].mxu0
        %v418 = vadd.f32 0.0, %v417
        %v419 = vpop.f32.mrb[0].mxu0
        %420 = vmatprep.mubr.f32.mxu0 0.0
        %421 = vmatmul.mubr.f32.gmra.mrb[0].mxu0 %v317
        %v422 = vpop.f32.mrb[0].mxu0
        %v423 = vadd.f32 0.0, %v422
        %v424 = vpop.f32.mrb[0].mxu0
        %425 = vmatprep.mubr.f32.mxu0 0.0
        %426 = vmatmul.mubr.f32.gmra.mrb[0].mxu0 %v320
        %v427 = vpop.f32.mrb[0].mxu0
        %v428 = vadd.f32 0.0, %v427
        %v429 = vpop.f32.mrb[0].mxu0
        %430 = vdwg.mxu0
        %v432 = vsel %vm297, %v277, 0
        %v435 = vsel %vm297, %v278, 0
        %v438 = vsel %vm297, %v279, 0
        %v441 = vsel %vm297, %v280, 0
        %v444 = vsel %vm297, %v281, 0
        %v447 = vsel %vm297, %v282, 0
        %v450 = vsel %vm297, %v283, 0
        %v453 = vsel %vm297, %v284, 0
        %v456 = vsel %vm322, %v285, 0
        %458 = vmatprep.subr.mxu0 0.0
        %459 = vmatpush1.msra.mxu0 %v456
        %460 = vmatprep.subr.mxu0 0.0
        %461 = vmatpush1.msra.mxu0 0.0
        %462 = vmatprep.subr.mxu0 0.0
        %463 = vmatpush1.msra.mxu0 0.0
        %464 = vmatprep.subr.mxu0 0.0
        %465 = vmatpush1.msra.mxu0 0.0
        %466 = vmatprep.subr.mxu0 0.0
        %467 = vmatpush1.msra.mxu0 0.0
        %468 = vmatprep.subr.mxu0 0.0
        %469 = vmatpush1.msra.mxu0 0.0
        %470 = vmatprep.subr.mxu0 0.0
        %471 = vmatpush1.msra.mxu0 0.0
        %472 = vmatprep.subr.mxu0 0.0
        %473 = vmatpush1.msra.mxu0 0.0
        %474 = vmatprep.subr.mxu0 0.0
        %475 = vmatpush1.msra.mxu0 0.0
        %476 = vmatprep.subr.mxu0 0.0
        %477 = vmatpush1.msra.mxu0 0.0
        %478 = vmatprep.subr.mxu0 0.0
        %479 = vmatpush1.msra.mxu0 0.0
        %480 = vmatprep.subr.mxu0 0.0
        %481 = vmatpush1.msra.mxu0 0.0
        %482 = vmatprep.subr.mxu0 0.0
        %483 = vmatpush1.msra.mxu0 0.0
        %484 = vmatprep.subr.mxu0 0.0
        %485 = vmatpush1.msra.mxu0 0.0
        %486 = vmatprep.subr.mxu0 0.0
        %487 = vmatpush1.msra.mxu0 0.0
        %488 = vmatprep.subr.mxu0 0.0
        %489 = vmatpush1.msra.mxu0 0.0
        %490 = vmatprep.subr.mxu0 0.0
        %491 = vmatpush1.msra.mxu0 0.0
        %492 = vmatprep.subr.mxu0 0.0
        %493 = vmatpush1.msra.mxu0 0.0
        %494 = vmatprep.subr.mxu0 0.0
        %495 = vmatpush1.msra.mxu0 0.0
        %496 = vmatprep.subr.mxu0 0.0
        %497 = vmatpush1.msra.mxu0 0.0
        %498 = vmatprep.subr.mxu0 0.0
        %499 = vmatpush1.msra.mxu0 0.0
        %500 = vmatprep.subr.mxu0 0.0
        %501 = vmatpush1.msra.mxu0 0.0
        %502 = vmatprep.subr.mxu0 0.0
        %503 = vmatpush1.msra.mxu0 0.0
        %504 = vmatprep.subr.mxu0 0.0
        %505 = vmatpush1.msra.mxu0 0.0
        %506 = vmatprep.subr.mxu0 0.0
        %507 = vmatpush1.msra.mxu0 0.0
        %508 = vmatprep.subr.mxu0 0.0
        %509 = vmatpush1.msra.mxu0 0.0
        %510 = vmatprep.subr.mxu0 0.0
        %511 = vmatpush1.msra.mxu0 0.0
        %512 = vmatprep.subr.mxu0 0.0
        %513 = vmatpush1.msra.mxu0 0.0
        %514 = vmatprep.subr.mxu0 0.0
        %515 = vmatpush1.msra.mxu0 0.0
        %516 = vmatprep.subr.mxu0 0.0
        %517 = vmatpush1.msra.mxu0 0.0
        %518 = vmatprep.subr.mxu0 0.0
        %519 = vmatpush1.msra.mxu0 0.0
        %520 = vmatprep.subr.mxu0 0.0
        %521 = vmatpush1.msra.mxu0 0.0
        %522 = vmatprep.mubr.f32.mxu0 0.0
        %523 = vmatmul.mubr.f32.gmra.mrb[0].mxu0 %v432
        %v524 = vpop.f32.mrb[0].mxu0
        %v525 = vadd.f32 %v393, %v524
        %v526 = vpop.f32.mrb[0].mxu0
        %527 = vmatprep.mubr.f32.mxu0 0.0
        %528 = vmatmul.mubr.f32.gmra.mrb[0].mxu0 %v435
        %v529 = vpop.f32.mrb[0].mxu0
        %v530 = vadd.f32 %v398, %v529
        %v531 = vpop.f32.mrb[0].mxu0
        %532 = vmatprep.mubr.f32.mxu0 0.0
        %533 = vmatmul.mubr.f32.gmra.mrb[0].mxu0 %v438
        %v534 = vpop.f32.mrb[0].mxu0
        %v535 = vadd.f32 %v403, %v534
        %v536 = vpop.f32.mrb[0].mxu0
        %537 = vmatprep.mubr.f32.mxu0 0.0
        %538 = vmatmul.mubr.f32.gmra.mrb[0].mxu0 %v441
        %v539 = vpop.f32.mrb[0].mxu0
        %v540 = vadd.f32 %v408, %v539
        %v541 = vpop.f32.mrb[0].mxu0
        %542 = vmatprep.mubr.f32.mxu0 0.0
        %543 = vmatmul.mubr.f32.gmra.mrb[0].mxu0 %v444
        %v544 = vpop.f32.mrb[0].mxu0
        %v545 = vadd.f32 %v413, %v544
        %v546 = vpop.f32.mrb[0].mxu0
        %547 = vmatprep.mubr.f32.mxu0 0.0
        %548 = vmatmul.mubr.f32.gmra.mrb[0].mxu0 %v447
        %v549 = vpop.f32.mrb[0].mxu0
        %v550 = vadd.f32 %v418, %v549
        %v551 = vpop.f32.mrb[0].mxu0
        %552 = vmatprep.mubr.f32.mxu0 0.0
        %553 = vmatmul.mubr.f32.gmra.mrb[0].mxu0 %v450
        %v554 = vpop.f32.mrb[0].mxu0
        %v555 = vadd.f32 %v423, %v554
        %v556 = vpop.f32.mrb[0].mxu0
        %557 = vmatprep.mubr.f32.mxu0 0.0
        %558 = vmatmul.mubr.f32.gmra.mrb[0].mxu0 %v453
        %v559 = vpop.f32.mrb[0].mxu0
        %v560 = vadd.f32 %v428, %v559
        %v561 = vpop.f32.mrb[0].mxu0
        %562 = vdwg.mxu0
        %v563 = vld [vmem:[%s276 + $0x1] sm:$0xff]
        %v564 = vld [vmem:[%s276 + $0x11] sm:$0xff]
        %v565 = vld [vmem:[%s276 + $0x21] sm:$0xff]
        %v566 = vld [vmem:[%s276 + $0x31] sm:$0xff]
        %v567 = vld [vmem:[%s276 + $0x41] sm:$0xff]
        %v568 = vld [vmem:[%s276 + $0x51] sm:$0xff]
        %v569 = vld [vmem:[%s276 + $0x61] sm:$0xff]
        %v570 = vld [vmem:[%s276 + $0x71] sm:$0xff]
        %s571 = scalar_lea.vmem %s1, 8
        %v572 = vld [vmem:[%s571] sm:$0xf]
        %v574 = vsel %vm297, %v563, 0
        %v577 = vsel %vm297, %v564, 0
        %v580 = vsel %vm297, %v565, 0
        %v583 = vsel %vm297, %v566, 0
        %v586 = vsel %vm297, %v567, 0
        %v589 = vsel %vm297, %v568, 0
        %v592 = vsel %vm297, %v569, 0
        %v595 = vsel %vm297, %v570, 0
        %v598 = vsel %vm322, %v572, 0
        %600 = vmatprep.subr.mxu0 0.0
        %601 = vmatpush1.msra.mxu0 %v598
        %602 = vmatprep.subr.mxu0 0.0
        %603 = vmatpush1.msra.mxu0 0.0
        %604 = vmatprep.subr.mxu0 0.0
        %605 = vmatpush1.msra.mxu0 0.0
        %606 = vmatprep.subr.mxu0 0.0
        %607 = vmatpush1.msra.mxu0 0.0
        %608 = vmatprep.subr.mxu0 0.0
        %609 = vmatpush1.msra.mxu0 0.0
        %610 = vmatprep.subr.mxu0 0.0
        %611 = vmatpush1.msra.mxu0 0.0
        %612 = vmatprep.subr.mxu0 0.0
        %613 = vmatpush1.msra.mxu0 0.0
        %614 = vmatprep.subr.mxu0 0.0
        %615 = vmatpush1.msra.mxu0 0.0
        %616 = vmatprep.subr.mxu0 0.0
        %617 = vmatpush1.msra.mxu0 0.0
        %618 = vmatprep.subr.mxu0 0.0
        %619 = vmatpush1.msra.mxu0 0.0
        %620 = vmatprep.subr.mxu0 0.0
        %621 = vmatpush1.msra.mxu0 0.0
        %622 = vmatprep.subr.mxu0 0.0
        %623 = vmatpush1.msra.mxu0 0.0
        %624 = vmatprep.subr.mxu0 0.0
        %625 = vmatpush1.msra.mxu0 0.0
        %626 = vmatprep.subr.mxu0 0.0
        %627 = vmatpush1.msra.mxu0 0.0
        %628 = vmatprep.subr.mxu0 0.0
        %629 = vmatpush1.msra.mxu0 0.0
        %630 = vmatprep.subr.mxu0 0.0
        %631 = vmatpush1.msra.mxu0 0.0
        %632 = vmatprep.subr.mxu0 0.0
        %633 = vmatpush1.msra.mxu0 0.0
        %634 = vmatprep.subr.mxu0 0.0
        %635 = vmatpush1.msra.mxu0 0.0
        %636 = vmatprep.subr.mxu0 0.0
        %637 = vmatpush1.msra.mxu0 0.0
        %638 = vmatprep.subr.mxu0 0.0
        %639 = vmatpush1.msra.mxu0 0.0
        %640 = vmatprep.subr.mxu0 0.0
        %641 = vmatpush1.msra.mxu0 0.0
        %642 = vmatprep.subr.mxu0 0.0
        %643 = vmatpush1.msra.mxu0 0.0
        %644 = vmatprep.subr.mxu0 0.0
        %645 = vmatpush1.msra.mxu0 0.0
        %646 = vmatprep.subr.mxu0 0.0
        %647 = vmatpush1.msra.mxu0 0.0
        %648 = vmatprep.subr.mxu0 0.0
        %649 = vmatpush1.msra.mxu0 0.0
        %650 = vmatprep.subr.mxu0 0.0
        %651 = vmatpush1.msra.mxu0 0.0
        %652 = vmatprep.subr.mxu0 0.0
        %653 = vmatpush1.msra.mxu0 0.0
        %654 = vmatprep.subr.mxu0 0.0
        %655 = vmatpush1.msra.mxu0 0.0
        %656 = vmatprep.subr.mxu0 0.0
        %657 = vmatpush1.msra.mxu0 0.0
        %658 = vmatprep.subr.mxu0 0.0
        %659 = vmatpush1.msra.mxu0 0.0
        %660 = vmatprep.subr.mxu0 0.0
        %661 = vmatpush1.msra.mxu0 0.0
        %662 = vmatprep.subr.mxu0 0.0
        %663 = vmatpush1.msra.mxu0 0.0
        %664 = vmatprep.mubr.f32.mxu0 0.0
        %665 = vmatmul.mubr.f32.gmra.mrb[0].mxu0 %v574
        %v666 = vpop.f32.mrb[0].mxu0
        %v667 = vadd.f32 0.0, %v666
        %v668 = vpop.f32.mrb[0].mxu0
        %669 = vmatprep.mubr.f32.mxu0 0.0
        %670 = vmatmul.mubr.f32.gmra.mrb[0].mxu0 %v577
        %v671 = vpop.f32.mrb[0].mxu0
        %v672 = vadd.f32 0.0, %v671
        %v673 = vpop.f32.mrb[0].mxu0
        %674 = vmatprep.mubr.f32.mxu0 0.0
        %675 = vmatmul.mubr.f32.gmra.mrb[0].mxu0 %v580
        %v676 = vpop.f32.mrb[0].mxu0
        %v677 = vadd.f32 0.0, %v676
        %v678 = vpop.f32.mrb[0].mxu0
        %679 = vmatprep.mubr.f32.mxu0 0.0
        %680 = vmatmul.mubr.f32.gmra.mrb[0].mxu0 %v583
        %v681 = vpop.f32.mrb[0].mxu0
        %v682 = vadd.f32 0.0, %v681
        %v683 = vpop.f32.mrb[0].mxu0
        %684 = vmatprep.mubr.f32.mxu0 0.0
        %685 = vmatmul.mubr.f32.gmra.mrb[0].mxu0 %v586
        %v686 = vpop.f32.mrb[0].mxu0
        %v687 = vadd.f32 0.0, %v686
        %v688 = vpop.f32.mrb[0].mxu0
        %689 = vmatprep.mubr.f32.mxu0 0.0
        %690 = vmatmul.mubr.f32.gmra.mrb[0].mxu0 %v589
        %v691 = vpop.f32.mrb[0].mxu0
        %v692 = vadd.f32 0.0, %v691
        %v693 = vpop.f32.mrb[0].mxu0
        %694 = vmatprep.mubr.f32.mxu0 0.0
        %695 = vmatmul.mubr.f32.gmra.mrb[0].mxu0 %v592
        %v696 = vpop.f32.mrb[0].mxu0
        %v697 = vadd.f32 0.0, %v696
        %v698 = vpop.f32.mrb[0].mxu0
        %699 = vmatprep.mubr.f32.mxu0 0.0
        %700 = vmatmul.mubr.f32.gmra.mrb[0].mxu0 %v595
        %v701 = vpop.f32.mrb[0].mxu0
        %v702 = vadd.f32 0.0, %v701
        %v703 = vpop.f32.mrb[0].mxu0
        %704 = vdwg.mxu0
        %v705 = vadd.f32 %v525, %v667
        %v706 = vadd.f32 %v530, %v672
        %v707 = vadd.f32 %v535, %v677
        %v708 = vadd.f32 %v540, %v682
        %v709 = vadd.f32 %v545, %v687
        %v710 = vadd.f32 %v550, %v692
        %v711 = vadd.f32 %v555, %v697
        %v712 = vadd.f32 %v560, %v702
        %s713 = scalar_lea.vmem %s276, 288
        %v714 = vld [vmem:[%s713] sm:$0xff]
        %v715 = vld [vmem:[%s713 + $0x10] sm:$0xff]
        %v716 = vld [vmem:[%s713 + $0x20] sm:$0xff]
        %v717 = vld [vmem:[%s713 + $0x30] sm:$0xff]
        %v718 = vld [vmem:[%s713 + $0x40] sm:$0xff]
        %v719 = vld [vmem:[%s713 + $0x50] sm:$0xff]
        %v720 = vld [vmem:[%s713 + $0x60] sm:$0xff]
        %v721 = vld [vmem:[%s713 + $0x70] sm:$0xff]
        %s722 = scalar_lea.vmem %s1, 12
        %v723 = vld [vmem:[%s722] sm:$0xf]
        %v725 = vsel %vm297, %v714, 0
        %v728 = vsel %vm297, %v715, 0
        %v731 = vsel %vm297, %v716, 0
        %v734 = vsel %vm297, %v717, 0
        %v737 = vsel %vm297, %v718, 0
        %v740 = vsel %vm297, %v719, 0
        %v743 = vsel %vm297, %v720, 0
        %v746 = vsel %vm297, %v721, 0
        %v749 = vsel %vm322, %v723, 0
        %751 = vmatprep.subr.mxu0 0.0
        %752 = vmatpush1.msra.mxu0 %v749
        %753 = vmatprep.subr.mxu0 0.0
        %754 = vmatpush1.msra.mxu0 0.0
        %755 = vmatprep.subr.mxu0 0.0
        %756 = vmatpush1.msra.mxu0 0.0
        %757 = vmatprep.subr.mxu0 0.0
        %758 = vmatpush1.msra.mxu0 0.0
        %759 = vmatprep.subr.mxu0 0.0
        %760 = vmatpush1.msra.mxu0 0.0
        %761 = vmatprep.subr.mxu0 0.0
        %762 = vmatpush1.msra.mxu0 0.0
        %763 = vmatprep.subr.mxu0 0.0
        %764 = vmatpush1.msra.mxu0 0.0
        %765 = vmatprep.subr.mxu0 0.0
        %766 = vmatpush1.msra.mxu0 0.0
        %767 = vmatprep.subr.mxu0 0.0
        %768 = vmatpush1.msra.mxu0 0.0
        %769 = vmatprep.subr.mxu0 0.0
        %770 = vmatpush1.msra.mxu0 0.0
        %771 = vmatprep.subr.mxu0 0.0
        %772 = vmatpush1.msra.mxu0 0.0
        %773 = vmatprep.subr.mxu0 0.0
        %774 = vmatpush1.msra.mxu0 0.0
        %775 = vmatprep.subr.mxu0 0.0
        %776 = vmatpush1.msra.mxu0 0.0
        %777 = vmatprep.subr.mxu0 0.0
        %778 = vmatpush1.msra.mxu0 0.0
        %779 = vmatprep.subr.mxu0 0.0
        %780 = vmatpush1.msra.mxu0 0.0
        %781 = vmatprep.subr.mxu0 0.0
        %782 = vmatpush1.msra.mxu0 0.0
        %783 = vmatprep.subr.mxu0 0.0
        %784 = vmatpush1.msra.mxu0 0.0
        %785 = vmatprep.subr.mxu0 0.0
        %786 = vmatpush1.msra.mxu0 0.0
        %787 = vmatprep.subr.mxu0 0.0
        %788 = vmatpush1.msra.mxu0 0.0
        %789 = vmatprep.subr.mxu0 0.0
        %790 = vmatpush1.msra.mxu0 0.0
        %791 = vmatprep.subr.mxu0 0.0
        %792 = vmatpush1.msra.mxu0 0.0
        %793 = vmatprep.subr.mxu0 0.0
        %794 = vmatpush1.msra.mxu0 0.0
        %795 = vmatprep.subr.mxu0 0.0
        %796 = vmatpush1.msra.mxu0 0.0
        %797 = vmatprep.subr.mxu0 0.0
        %798 = vmatpush1.msra.mxu0 0.0
        %799 = vmatprep.subr.mxu0 0.0
        %800 = vmatpush1.msra.mxu0 0.0
        %801 = vmatprep.subr.mxu0 0.0
        %802 = vmatpush1.msra.mxu0 0.0
        %803 = vmatprep.subr.mxu0 0.0
        %804 = vmatpush1.msra.mxu0 0.0
        %805 = vmatprep.subr.mxu0 0.0
        %806 = vmatpush1.msra.mxu0 0.0
        %807 = vmatprep.subr.mxu0 0.0
        %808 = vmatpush1.msra.mxu0 0.0
        %809 = vmatprep.subr.mxu0 0.0
        %810 = vmatpush1.msra.mxu0 0.0
        %811 = vmatprep.subr.mxu0 0.0
        %812 = vmatpush1.msra.mxu0 0.0
        %813 = vmatprep.subr.mxu0 0.0
        %814 = vmatpush1.msra.mxu0 0.0
        %815 = vmatprep.mubr.f32.mxu0 0.0
        %816 = vmatmul.mubr.f32.gmra.mrb[0].mxu0 %v725
        %v817 = vpop.f32.mrb[0].mxu0
        %v818 = vadd.f32 0.0, %v817
        %v819 = vpop.f32.mrb[0].mxu0
        %820 = vmatprep.mubr.f32.mxu0 0.0
        %821 = vmatmul.mubr.f32.gmra.mrb[0].mxu0 %v728
        %v822 = vpop.f32.mrb[0].mxu0
        %v823 = vadd.f32 0.0, %v822
        %v824 = vpop.f32.mrb[0].mxu0
        %825 = vmatprep.mubr.f32.mxu0 0.0
        %826 = vmatmul.mubr.f32.gmra.mrb[0].mxu0 %v731
        %v827 = vpop.f32.mrb[0].mxu0
        %v828 = vadd.f32 0.0, %v827
        %v829 = vpop.f32.mrb[0].mxu0
        %830 = vmatprep.mubr.f32.mxu0 0.0
        %831 = vmatmul.mubr.f32.gmra.mrb[0].mxu0 %v734
        %v832 = vpop.f32.mrb[0].mxu0
        %v833 = vadd.f32 0.0, %v832
        %v834 = vpop.f32.mrb[0].mxu0
        %835 = vmatprep.mubr.f32.mxu0 0.0
        %836 = vmatmul.mubr.f32.gmra.mrb[0].mxu0 %v737
        %v837 = vpop.f32.mrb[0].mxu0
        %v838 = vadd.f32 0.0, %v837
        %v839 = vpop.f32.mrb[0].mxu0
        %840 = vmatprep.mubr.f32.mxu0 0.0
        %841 = vmatmul.mubr.f32.gmra.mrb[0].mxu0 %v740
        %v842 = vpop.f32.mrb[0].mxu0
        %v843 = vadd.f32 0.0, %v842
        %v844 = vpop.f32.mrb[0].mxu0
        %845 = vmatprep.mubr.f32.mxu0 0.0
        %846 = vmatmul.mubr.f32.gmra.mrb[0].mxu0 %v743
        %v847 = vpop.f32.mrb[0].mxu0
        %v848 = vadd.f32 0.0, %v847
        %v849 = vpop.f32.mrb[0].mxu0
        %850 = vmatprep.mubr.f32.mxu0 0.0
        %851 = vmatmul.mubr.f32.gmra.mrb[0].mxu0 %v746
        %v852 = vpop.f32.mrb[0].mxu0
        %v853 = vadd.f32 0.0, %v852
        %v854 = vpop.f32.mrb[0].mxu0
        %855 = vdwg.mxu0
        %v856 = vadd.f32 %v705, %v818
        %v857 = vadd.f32 %v706, %v823
        %v858 = vadd.f32 %v707, %v828
        %v859 = vadd.f32 %v708, %v833
        %v860 = vadd.f32 %v709, %v838
        %v861 = vadd.f32 %v710, %v843
        %v862 = vadd.f32 %v711, %v848
        %v863 = vadd.f32 %v712, %v853
        %s864 = scalar_lea.vmem %s276, 432
        %v865 = vld [vmem:[%s864] sm:$0xff]
        %v866 = vld [vmem:[%s864 + $0x10] sm:$0xff]
        %v867 = vld [vmem:[%s864 + $0x20] sm:$0xff]
        %v868 = vld [vmem:[%s864 + $0x30] sm:$0xff]
        %v869 = vld [vmem:[%s864 + $0x40] sm:$0xff]
        %v870 = vld [vmem:[%s864 + $0x50] sm:$0xff]
        %v871 = vld [vmem:[%s864 + $0x60] sm:$0xff]
        %v872 = vld [vmem:[%s864 + $0x70] sm:$0xff]
        %s873 = scalar_lea.vmem %s1, 16
        %v874 = vld [vmem:[%s873] sm:$0xf]
        %v876 = vsel %vm297, %v865, 0
        %v879 = vsel %vm297, %v866, 0
        %v882 = vsel %vm297, %v867, 0
        %v885 = vsel %vm297, %v868, 0
        %v888 = vsel %vm297, %v869, 0
        %v891 = vsel %vm297, %v870, 0
        %v894 = vsel %vm297, %v871, 0
        %v897 = vsel %vm297, %v872, 0
        %v900 = vsel %vm322, %v874, 0
        %902 = vmatprep.subr.mxu0 0.0
        %903 = vmatpush1.msra.mxu0 %v900
        %904 = vmatprep.subr.mxu0 0.0
        %905 = vmatpush1.msra.mxu0 0.0
        %906 = vmatprep.subr.mxu0 0.0
        %907 = vmatpush1.msra.mxu0 0.0
        %908 = vmatprep.subr.mxu0 0.0
        %909 = vmatpush1.msra.mxu0 0.0
        %910 = vmatprep.subr.mxu0 0.0
        %911 = vmatpush1.msra.mxu0 0.0
        %912 = vmatprep.subr.mxu0 0.0
        %913 = vmatpush1.msra.mxu0 0.0
        %914 = vmatprep.subr.mxu0 0.0
        %915 = vmatpush1.msra.mxu0 0.0
        %916 = vmatprep.subr.mxu0 0.0
        %917 = vmatpush1.msra.mxu0 0.0
        %918 = vmatprep.subr.mxu0 0.0
        %919 = vmatpush1.msra.mxu0 0.0
        %920 = vmatprep.subr.mxu0 0.0
        %921 = vmatpush1.msra.mxu0 0.0
        %922 = vmatprep.subr.mxu0 0.0
        %923 = vmatpush1.msra.mxu0 0.0
        %924 = vmatprep.subr.mxu0 0.0
        %925 = vmatpush1.msra.mxu0 0.0
        %926 = vmatprep.subr.mxu0 0.0
        %927 = vmatpush1.msra.mxu0 0.0
        %928 = vmatprep.subr.mxu0 0.0
        %929 = vmatpush1.msra.mxu0 0.0
        %930 = vmatprep.subr.mxu0 0.0
        %931 = vmatpush1.msra.mxu0 0.0
        %932 = vmatprep.subr.mxu0 0.0
        %933 = vmatpush1.msra.mxu0 0.0
        %934 = vmatprep.subr.mxu0 0.0
        %935 = vmatpush1.msra.mxu0 0.0
        %936 = vmatprep.subr.mxu0 0.0
        %937 = vmatpush1.msra.mxu0 0.0
        %938 = vmatprep.subr.mxu0 0.0
        %939 = vmatpush1.msra.mxu0 0.0
        %940 = vmatprep.subr.mxu0 0.0
        %941 = vmatpush1.msra.mxu0 0.0
        %942 = vmatprep.subr.mxu0 0.0
        %943 = vmatpush1.msra.mxu0 0.0
        %944 = vmatprep.subr.mxu0 0.0
        %945 = vmatpush1.msra.mxu0 0.0
        %946 = vmatprep.subr.mxu0 0.0
        %947 = vmatpush1.msra.mxu0 0.0
        %948 = vmatprep.subr.mxu0 0.0
        %949 = vmatpush1.msra.mxu0 0.0
        %950 = vmatprep.subr.mxu0 0.0
        %951 = vmatpush1.msra.mxu0 0.0
        %952 = vmatprep.subr.mxu0 0.0
        %953 = vmatpush1.msra.mxu0 0.0
        %954 = vmatprep.subr.mxu0 0.0
        %955 = vmatpush1.msra.mxu0 0.0
        %956 = vmatprep.subr.mxu0 0.0
        %957 = vmatpush1.msra.mxu0 0.0
        %958 = vmatprep.subr.mxu0 0.0
        %959 = vmatpush1.msra.mxu0 0.0
        %960 = vmatprep.subr.mxu0 0.0
        %961 = vmatpush1.msra.mxu0 0.0
        %962 = vmatprep.subr.mxu0 0.0
        %963 = vmatpush1.msra.mxu0 0.0
        %964 = vmatprep.subr.mxu0 0.0
        %965 = vmatpush1.msra.mxu0 0.0
        %966 = vmatprep.mubr.f32.mxu0 0.0
        %967 = vmatmul.mubr.f32.gmra.mrb[0].mxu0 %v876
        %v968 = vpop.f32.mrb[0].mxu0
        %v969 = vadd.f32 0.0, %v968
        %v970 = vpop.f32.mrb[0].mxu0
        %971 = vmatprep.mubr.f32.mxu0 0.0
        %972 = vmatmul.mubr.f32.gmra.mrb[0].mxu0 %v879
        %v973 = vpop.f32.mrb[0].mxu0
        %v974 = vadd.f32 0.0, %v973
        %v975 = vpop.f32.mrb[0].mxu0
        %976 = vmatprep.mubr.f32.mxu0 0.0
        %977 = vmatmul.mubr.f32.gmra.mrb[0].mxu0 %v882
        %v978 = vpop.f32.mrb[0].mxu0
        %v979 = vadd.f32 0.0, %v978
        %v980 = vpop.f32.mrb[0].mxu0
        %981 = vmatprep.mubr.f32.mxu0 0.0
        %982 = vmatmul.mubr.f32.gmra.mrb[0].mxu0 %v885
        %v983 = vpop.f32.mrb[0].mxu0
        %v984 = vadd.f32 0.0, %v983
        %v985 = vpop.f32.mrb[0].mxu0
        %986 = vmatprep.mubr.f32.mxu0 0.0
        %987 = vmatmul.mubr.f32.gmra.mrb[0].mxu0 %v888
        %v988 = vpop.f32.mrb[0].mxu0
        %v989 = vadd.f32 0.0, %v988
        %v990 = vpop.f32.mrb[0].mxu0
        %991 = vmatprep.mubr.f32.mxu0 0.0
        %992 = vmatmul.mubr.f32.gmra.mrb[0].mxu0 %v891
        %v993 = vpop.f32.mrb[0].mxu0
        %v994 = vadd.f32 0.0, %v993
        %v995 = vpop.f32.mrb[0].mxu0
        %996 = vmatprep.mubr.f32.mxu0 0.0
        %997 = vmatmul.mubr.f32.gmra.mrb[0].mxu0 %v894
        %v998 = vpop.f32.mrb[0].mxu0
        %v999 = vadd.f32 0.0, %v998
        %v1000 = vpop.f32.mrb[0].mxu0
        %1001 = vmatprep.mubr.f32.mxu0 0.0
        %1002 = vmatmul.mubr.f32.gmra.mrb[0].mxu0 %v897
        %v1003 = vpop.f32.mrb[0].mxu0
        %v1004 = vadd.f32 0.0, %v1003
        %v1005 = vpop.f32.mrb[0].mxu0
        %1006 = vdwg.mxu0
        %v1007 = vadd.f32 %v856, %v969
        %v1008 = vadd.f32 %v857, %v974
        %v1009 = vadd.f32 %v858, %v979
        %v1010 = vadd.f32 %v859, %v984
        %v1011 = vadd.f32 %v860, %v989
        %v1012 = vadd.f32 %v861, %v994
        %v1013 = vadd.f32 %v862, %v999
        %v1014 = vadd.f32 %v863, %v1004
        %v1015 = vld [vmem:[%s713 + $0x1] sm:$0xff]
        %v1016 = vld [vmem:[%s713 + $0x11] sm:$0xff]
        %v1017 = vld [vmem:[%s713 + $0x21] sm:$0xff]
        %v1018 = vld [vmem:[%s713 + $0x31] sm:$0xff]
        %v1019 = vld [vmem:[%s713 + $0x41] sm:$0xff]
        %v1020 = vld [vmem:[%s713 + $0x51] sm:$0xff]
        %v1021 = vld [vmem:[%s713 + $0x61] sm:$0xff]
        %v1022 = vld [vmem:[%s713 + $0x71] sm:$0xff]
        %s1023 = scalar_lea.vmem %s1, 20
        %v1024 = vld [vmem:[%s1023] sm:$0xf]
        %v1026 = vsel %vm297, %v1015, 0
        %v1029 = vsel %vm297, %v1016, 0
        %v1032 = vsel %vm297, %v1017, 0
        %v1035 = vsel %vm297, %v1018, 0
        %v1038 = vsel %vm297, %v1019, 0
        %v1041 = vsel %vm297, %v1020, 0
        %v1044 = vsel %vm297, %v1021, 0
        %v1047 = vsel %vm297, %v1022, 0
        %v1050 = vsel %vm322, %v1024, 0
        %1052 = vmatprep.subr.mxu0 0.0
        %1053 = vmatpush1.msra.mxu0 %v1050
        %1054 = vmatprep.subr.mxu0 0.0
        %1055 = vmatpush1.msra.mxu0 0.0
        %1056 = vmatprep.subr.mxu0 0.0
        %1057 = vmatpush1.msra.mxu0 0.0
        %1058 = vmatprep.subr.mxu0 0.0
        %1059 = vmatpush1.msra.mxu0 0.0
        %1060 = vmatprep.subr.mxu0 0.0
        %1061 = vmatpush1.msra.mxu0 0.0
        %1062 = vmatprep.subr.mxu0 0.0
        %1063 = vmatpush1.msra.mxu0 0.0
        %1064 = vmatprep.subr.mxu0 0.0
        %1065 = vmatpush1.msra.mxu0 0.0
        %1066 = vmatprep.subr.mxu0 0.0
        %1067 = vmatpush1.msra.mxu0 0.0
        %1068 = vmatprep.subr.mxu0 0.0
        %1069 = vmatpush1.msra.mxu0 0.0
        %1070 = vmatprep.subr.mxu0 0.0
        %1071 = vmatpush1.msra.mxu0 0.0
        %1072 = vmatprep.subr.mxu0 0.0
        %1073 = vmatpush1.msra.mxu0 0.0
        %1074 = vmatprep.subr.mxu0 0.0
        %1075 = vmatpush1.msra.mxu0 0.0
        %1076 = vmatprep.subr.mxu0 0.0
        %1077 = vmatpush1.msra.mxu0 0.0
        %1078 = vmatprep.subr.mxu0 0.0
        %1079 = vmatpush1.msra.mxu0 0.0
        %1080 = vmatprep.subr.mxu0 0.0
        %1081 = vmatpush1.msra.mxu0 0.0
        %1082 = vmatprep.subr.mxu0 0.0
        %1083 = vmatpush1.msra.mxu0 0.0
        %1084 = vmatprep.subr.mxu0 0.0
        %1085 = vmatpush1.msra.mxu0 0.0
        %1086 = vmatprep.subr.mxu0 0.0
        %1087 = vmatpush1.msra.mxu0 0.0
        %1088 = vmatprep.subr.mxu0 0.0
        %1089 = vmatpush1.msra.mxu0 0.0
        %1090 = vmatprep.subr.mxu0 0.0
        %1091 = vmatpush1.msra.mxu0 0.0
        %1092 = vmatprep.subr.mxu0 0.0
        %1093 = vmatpush1.msra.mxu0 0.0
        %1094 = vmatprep.subr.mxu0 0.0
        %1095 = vmatpush1.msra.mxu0 0.0
        %1096 = vmatprep.subr.mxu0 0.0
        %1097 = vmatpush1.msra.mxu0 0.0
        %1098 = vmatprep.subr.mxu0 0.0
        %1099 = vmatpush1.msra.mxu0 0.0
        %1100 = vmatprep.subr.mxu0 0.0
        %1101 = vmatpush1.msra.mxu0 0.0
        %1102 = vmatprep.subr.mxu0 0.0
        %1103 = vmatpush1.msra.mxu0 0.0
        %1104 = vmatprep.subr.mxu0 0.0
        %1105 = vmatpush1.msra.mxu0 0.0
        %1106 = vmatprep.subr.mxu0 0.0
        %1107 = vmatpush1.msra.mxu0 0.0
        %1108 = vmatprep.subr.mxu0 0.0
        %1109 = vmatpush1.msra.mxu0 0.0
        %1110 = vmatprep.subr.mxu0 0.0
        %1111 = vmatpush1.msra.mxu0 0.0
        %1112 = vmatprep.subr.mxu0 0.0
        %1113 = vmatpush1.msra.mxu0 0.0
        %1114 = vmatprep.subr.mxu0 0.0
        %1115 = vmatpush1.msra.mxu0 0.0
        %1116 = vmatprep.mubr.f32.mxu0 0.0
        %1117 = vmatmul.mubr.f32.gmra.mrb[0].mxu0 %v1026
        %v1118 = vpop.f32.mrb[0].mxu0
        %v1119 = vadd.f32 0.0, %v1118
        %v1120 = vpop.f32.mrb[0].mxu0
        %1121 = vmatprep.mubr.f32.mxu0 0.0
        %1122 = vmatmul.mubr.f32.gmra.mrb[0].mxu0 %v1029
        %v1123 = vpop.f32.mrb[0].mxu0
        %v1124 = vadd.f32 0.0, %v1123
        %v1125 = vpop.f32.mrb[0].mxu0
        %1126 = vmatprep.mubr.f32.mxu0 0.0
        %1127 = vmatmul.mubr.f32.gmra.mrb[0].mxu0 %v1032
        %v1128 = vpop.f32.mrb[0].mxu0
        %v1129 = vadd.f32 0.0, %v1128
        %v1130 = vpop.f32.mrb[0].mxu0
        %1131 = vmatprep.mubr.f32.mxu0 0.0
        %1132 = vmatmul.mubr.f32.gmra.mrb[0].mxu0 %v1035
        %v1133 = vpop.f32.mrb[0].mxu0
        %v1134 = vadd.f32 0.0, %v1133
        %v1135 = vpop.f32.mrb[0].mxu0
        %1136 = vmatprep.mubr.f32.mxu0 0.0
        %1137 = vmatmul.mubr.f32.gmra.mrb[0].mxu0 %v1038
        %v1138 = vpop.f32.mrb[0].mxu0
        %v1139 = vadd.f32 0.0, %v1138
        %v1140 = vpop.f32.mrb[0].mxu0
        %1141 = vmatprep.mubr.f32.mxu0 0.0
        %1142 = vmatmul.mubr.f32.gmra.mrb[0].mxu0 %v1041
        %v1143 = vpop.f32.mrb[0].mxu0
        %v1144 = vadd.f32 0.0, %v1143
        %v1145 = vpop.f32.mrb[0].mxu0
        %1146 = vmatprep.mubr.f32.mxu0 0.0
        %1147 = vmatmul.mubr.f32.gmra.mrb[0].mxu0 %v1044
        %v1148 = vpop.f32.mrb[0].mxu0
        %v1149 = vadd.f32 0.0, %v1148
        %v1150 = vpop.f32.mrb[0].mxu0
        %1151 = vmatprep.mubr.f32.mxu0 0.0
        %1152 = vmatmul.mubr.f32.gmra.mrb[0].mxu0 %v1047
        %v1153 = vpop.f32.mrb[0].mxu0
        %v1154 = vadd.f32 0.0, %v1153
        %v1155 = vpop.f32.mrb[0].mxu0
        %1156 = vdwg.mxu0
        %v1157 = vadd.f32 %v1007, %v1119
        %v1158 = vadd.f32 %v1008, %v1124
        %v1159 = vadd.f32 %v1009, %v1129
        %v1160 = vadd.f32 %v1010, %v1134
        %v1161 = vadd.f32 %v1011, %v1139
        %v1162 = vadd.f32 %v1012, %v1144
        %v1163 = vadd.f32 %v1013, %v1149
        %v1164 = vadd.f32 %v1014, %v1154
        %s1165 = scalar_lea.vmem %s276, 16
        %v1166 = vld [vmem:[%s1165] sm:$0xff]
        %v1167 = vld [vmem:[%s1165 + $0x10] sm:$0xff]
        %v1168 = vld [vmem:[%s1165 + $0x20] sm:$0xff]
        %v1169 = vld [vmem:[%s1165 + $0x30] sm:$0xff]
        %v1170 = vld [vmem:[%s1165 + $0x40] sm:$0xff]
        %v1171 = vld [vmem:[%s1165 + $0x50] sm:$0xff]
        %v1172 = vld [vmem:[%s1165 + $0x60] sm:$0xff]
        %v1173 = vld [vmem:[%s1165 + $0x70] sm:$0xff]
        %s1174 = scalar_lea.vmem %s1, 24
        %v1175 = vld [vmem:[%s1174] sm:$0xf]
        %v1177 = vsel %vm297, %v1166, 0
        %v1180 = vsel %vm297, %v1167, 0
        %v1183 = vsel %vm297, %v1168, 0
        %v1186 = vsel %vm297, %v1169, 0
        %v1189 = vsel %vm297, %v1170, 0
        %v1192 = vsel %vm297, %v1171, 0
        %v1195 = vsel %vm297, %v1172, 0
        %v1198 = vsel %vm297, %v1173, 0
        %v1201 = vsel %vm322, %v1175, 0
        %1203 = vmatprep.subr.mxu0 0.0
        %1204 = vmatpush1.msra.mxu0 %v1201
        %1205 = vmatprep.subr.mxu0 0.0
        %1206 = vmatpush1.msra.mxu0 0.0
        %1207 = vmatprep.subr.mxu0 0.0
        %1208 = vmatpush1.msra.mxu0 0.0
        %1209 = vmatprep.subr.mxu0 0.0
        %1210 = vmatpush1.msra.mxu0 0.0
        %1211 = vmatprep.subr.mxu0 0.0
        %1212 = vmatpush1.msra.mxu0 0.0
        %1213 = vmatprep.subr.mxu0 0.0
        %1214 = vmatpush1.msra.mxu0 0.0
        %1215 = vmatprep.subr.mxu0 0.0
        %1216 = vmatpush1.msra.mxu0 0.0
        %1217 = vmatprep.subr.mxu0 0.0
        %1218 = vmatpush1.msra.mxu0 0.0
        %1219 = vmatprep.subr.mxu0 0.0
        %1220 = vmatpush1.msra.mxu0 0.0
        %1221 = vmatprep.subr.mxu0 0.0
        %1222 = vmatpush1.msra.mxu0 0.0
        %1223 = vmatprep.subr.mxu0 0.0
        %1224 = vmatpush1.msra.mxu0 0.0
        %1225 = vmatprep.subr.mxu0 0.0
        %1226 = vmatpush1.msra.mxu0 0.0
        %1227 = vmatprep.subr.mxu0 0.0
        %1228 = vmatpush1.msra.mxu0 0.0
        %1229 = vmatprep.subr.mxu0 0.0
        %1230 = vmatpush1.msra.mxu0 0.0
        %1231 = vmatprep.subr.mxu0 0.0
        %1232 = vmatpush1.msra.mxu0 0.0
        %1233 = vmatprep.subr.mxu0 0.0
        %1234 = vmatpush1.msra.mxu0 0.0
        %1235 = vmatprep.subr.mxu0 0.0
        %1236 = vmatpush1.msra.mxu0 0.0
        %1237 = vmatprep.subr.mxu0 0.0
        %1238 = vmatpush1.msra.mxu0 0.0
        %1239 = vmatprep.subr.mxu0 0.0
        %1240 = vmatpush1.msra.mxu0 0.0
        %1241 = vmatprep.subr.mxu0 0.0
        %1242 = vmatpush1.msra.mxu0 0.0
        %1243 = vmatprep.subr.mxu0 0.0
        %1244 = vmatpush1.msra.mxu0 0.0
        %1245 = vmatprep.subr.mxu0 0.0
        %1246 = vmatpush1.msra.mxu0 0.0
        %1247 = vmatprep.subr.mxu0 0.0
        %1248 = vmatpush1.msra.mxu0 0.0
        %1249 = vmatprep.subr.mxu0 0.0
        %1250 = vmatpush1.msra.mxu0 0.0
        %1251 = vmatprep.subr.mxu0 0.0
        %1252 = vmatpush1.msra.mxu0 0.0
        %1253 = vmatprep.subr.mxu0 0.0
        %1254 = vmatpush1.msra.mxu0 0.0
        %1255 = vmatprep.subr.mxu0 0.0
        %1256 = vmatpush1.msra.mxu0 0.0
        %1257 = vmatprep.subr.mxu0 0.0
        %1258 = vmatpush1.msra.mxu0 0.0
        %1259 = vmatprep.subr.mxu0 0.0
        %1260 = vmatpush1.msra.mxu0 0.0
        %1261 = vmatprep.subr.mxu0 0.0
        %1262 = vmatpush1.msra.mxu0 0.0
        %1263 = vmatprep.subr.mxu0 0.0
        %1264 = vmatpush1.msra.mxu0 0.0
        %1265 = vmatprep.subr.mxu0 0.0
        %1266 = vmatpush1.msra.mxu0 0.0
        %1267 = vmatprep.mubr.f32.mxu0 0.0
        %1268 = vmatmul.mubr.f32.gmra.mrb[0].mxu0 %v1177
        %v1269 = vpop.f32.mrb[0].mxu0
        %v1270 = vadd.f32 0.0, %v1269
        %v1271 = vpop.f32.mrb[0].mxu0
        %1272 = vmatprep.mubr.f32.mxu0 0.0
        %1273 = vmatmul.mubr.f32.gmra.mrb[0].mxu0 %v1180
        %v1274 = vpop.f32.mrb[0].mxu0
        %v1275 = vadd.f32 0.0, %v1274
        %v1276 = vpop.f32.mrb[0].mxu0
        %1277 = vmatprep.mubr.f32.mxu0 0.0
        %1278 = vmatmul.mubr.f32.gmra.mrb[0].mxu0 %v1183
        %v1279 = vpop.f32.mrb[0].mxu0
        %v1280 = vadd.f32 0.0, %v1279
        %v1281 = vpop.f32.mrb[0].mxu0
        %1282 = vmatprep.mubr.f32.mxu0 0.0
        %1283 = vmatmul.mubr.f32.gmra.mrb[0].mxu0 %v1186
        %v1284 = vpop.f32.mrb[0].mxu0
        %v1285 = vadd.f32 0.0, %v1284
        %v1286 = vpop.f32.mrb[0].mxu0
        %1287 = vmatprep.mubr.f32.mxu0 0.0
        %1288 = vmatmul.mubr.f32.gmra.mrb[0].mxu0 %v1189
        %v1289 = vpop.f32.mrb[0].mxu0
        %v1290 = vadd.f32 0.0, %v1289
        %v1291 = vpop.f32.mrb[0].mxu0
        %1292 = vmatprep.mubr.f32.mxu0 0.0
        %1293 = vmatmul.mubr.f32.gmra.mrb[0].mxu0 %v1192
        %v1294 = vpop.f32.mrb[0].mxu0
        %v1295 = vadd.f32 0.0, %v1294
        %v1296 = vpop.f32.mrb[0].mxu0
        %1297 = vmatprep.mubr.f32.mxu0 0.0
        %1298 = vmatmul.mubr.f32.gmra.mrb[0].mxu0 %v1195
        %v1299 = vpop.f32.mrb[0].mxu0
        %v1300 = vadd.f32 0.0, %v1299
        %v1301 = vpop.f32.mrb[0].mxu0
        %1302 = vmatprep.mubr.f32.mxu0 0.0
        %1303 = vmatmul.mubr.f32.gmra.mrb[0].mxu0 %v1198
        %v1304 = vpop.f32.mrb[0].mxu0
        %v1305 = vadd.f32 0.0, %v1304
        %v1306 = vpop.f32.mrb[0].mxu0
        %1307 = vdwg.mxu0
        %v1308 = vadd.f32 %v1157, %v1270
        %v1309 = vadd.f32 %v1158, %v1275
        %v1310 = vadd.f32 %v1159, %v1280
        %v1311 = vadd.f32 %v1160, %v1285
        %v1312 = vadd.f32 %v1161, %v1290
        %v1313 = vadd.f32 %v1162, %v1295
        %v1314 = vadd.f32 %v1163, %v1300
        %v1315 = vadd.f32 %v1164, %v1305
        %s1316 = scalar_lea.vmem %s276, 160
        %v1317 = vld [vmem:[%s1316] sm:$0xff]
        %v1318 = vld [vmem:[%s1316 + $0x10] sm:$0xff]
        %v1319 = vld [vmem:[%s1316 + $0x20] sm:$0xff]
        %v1320 = vld [vmem:[%s1316 + $0x30] sm:$0xff]
        %v1321 = vld [vmem:[%s1316 + $0x40] sm:$0xff]
        %v1322 = vld [vmem:[%s1316 + $0x50] sm:$0xff]
        %v1323 = vld [vmem:[%s1316 + $0x60] sm:$0xff]
        %v1324 = vld [vmem:[%s1316 + $0x70] sm:$0xff]
        %s1325 = scalar_lea.vmem %s1, 28
        %v1326 = vld [vmem:[%s1325] sm:$0xf]
        %v1328 = vsel %vm297, %v1317, 0
        %v1331 = vsel %vm297, %v1318, 0
        %v1334 = vsel %vm297, %v1319, 0
        %v1337 = vsel %vm297, %v1320, 0
        %v1340 = vsel %vm297, %v1321, 0
        %v1343 = vsel %vm297, %v1322, 0
        %v1346 = vsel %vm297, %v1323, 0
        %v1349 = vsel %vm297, %v1324, 0
        %v1352 = vsel %vm322, %v1326, 0
        %1354 = vmatprep.subr.mxu0 0.0
        %1355 = vmatpush1.msra.mxu0 %v1352
        %1356 = vmatprep.subr.mxu0 0.0
        %1357 = vmatpush1.msra.mxu0 0.0
        %1358 = vmatprep.subr.mxu0 0.0
        %1359 = vmatpush1.msra.mxu0 0.0
        %1360 = vmatprep.subr.mxu0 0.0
        %1361 = vmatpush1.msra.mxu0 0.0
        %1362 = vmatprep.subr.mxu0 0.0
        %1363 = vmatpush1.msra.mxu0 0.0
        %1364 = vmatprep.subr.mxu0 0.0
        %1365 = vmatpush1.msra.mxu0 0.0
        %1366 = vmatprep.subr.mxu0 0.0
        %1367 = vmatpush1.msra.mxu0 0.0
        %1368 = vmatprep.subr.mxu0 0.0
        %1369 = vmatpush1.msra.mxu0 0.0
        %1370 = vmatprep.subr.mxu0 0.0
        %1371 = vmatpush1.msra.mxu0 0.0
        %1372 = vmatprep.subr.mxu0 0.0
        %1373 = vmatpush1.msra.mxu0 0.0
        %1374 = vmatprep.subr.mxu0 0.0
        %1375 = vmatpush1.msra.mxu0 0.0
        %1376 = vmatprep.subr.mxu0 0.0
        %1377 = vmatpush1.msra.mxu0 0.0
        %1378 = vmatprep.subr.mxu0 0.0
        %1379 = vmatpush1.msra.mxu0 0.0
        %1380 = vmatprep.subr.mxu0 0.0
        %1381 = vmatpush1.msra.mxu0 0.0
        %1382 = vmatprep.subr.mxu0 0.0
        %1383 = vmatpush1.msra.mxu0 0.0
        %1384 = vmatprep.subr.mxu0 0.0
        %1385 = vmatpush1.msra.mxu0 0.0
        %1386 = vmatprep.subr.mxu0 0.0
        %1387 = vmatpush1.msra.mxu0 0.0
        %1388 = vmatprep.subr.mxu0 0.0
        %1389 = vmatpush1.msra.mxu0 0.0
        %1390 = vmatprep.subr.mxu0 0.0
        %1391 = vmatpush1.msra.mxu0 0.0
        %1392 = vmatprep.subr.mxu0 0.0
        %1393 = vmatpush1.msra.mxu0 0.0
        %1394 = vmatprep.subr.mxu0 0.0
        %1395 = vmatpush1.msra.mxu0 0.0
        %1396 = vmatprep.subr.mxu0 0.0
        %1397 = vmatpush1.msra.mxu0 0.0
        %1398 = vmatprep.subr.mxu0 0.0
        %1399 = vmatpush1.msra.mxu0 0.0
        %1400 = vmatprep.subr.mxu0 0.0
        %1401 = vmatpush1.msra.mxu0 0.0
        %1402 = vmatprep.subr.mxu0 0.0
        %1403 = vmatpush1.msra.mxu0 0.0
        %1404 = vmatprep.subr.mxu0 0.0
        %1405 = vmatpush1.msra.mxu0 0.0
        %1406 = vmatprep.subr.mxu0 0.0
        %1407 = vmatpush1.msra.mxu0 0.0
        %1408 = vmatprep.subr.mxu0 0.0
        %1409 = vmatpush1.msra.mxu0 0.0
        %1410 = vmatprep.subr.mxu0 0.0
        %1411 = vmatpush1.msra.mxu0 0.0
        %1412 = vmatprep.subr.mxu0 0.0
        %1413 = vmatpush1.msra.mxu0 0.0
        %1414 = vmatprep.subr.mxu0 0.0
        %1415 = vmatpush1.msra.mxu0 0.0
        %1416 = vmatprep.subr.mxu0 0.0
        %1417 = vmatpush1.msra.mxu0 0.0
        %1418 = vmatprep.mubr.f32.mxu0 0.0
        %1419 = vmatmul.mubr.f32.gmra.mrb[0].mxu0 %v1328
        %v1420 = vpop.f32.mrb[0].mxu0
        %v1421 = vadd.f32 0.0, %v1420
        %v1422 = vpop.f32.mrb[0].mxu0
        %1423 = vmatprep.mubr.f32.mxu0 0.0
        %1424 = vmatmul.mubr.f32.gmra.mrb[0].mxu0 %v1331
        %v1425 = vpop.f32.mrb[0].mxu0
        %v1426 = vadd.f32 0.0, %v1425
        %v1427 = vpop.f32.mrb[0].mxu0
        %1428 = vmatprep.mubr.f32.mxu0 0.0
        %1429 = vmatmul.mubr.f32.gmra.mrb[0].mxu0 %v1334
        %v1430 = vpop.f32.mrb[0].mxu0
        %v1431 = vadd.f32 0.0, %v1430
        %v1432 = vpop.f32.mrb[0].mxu0
        %1433 = vmatprep.mubr.f32.mxu0 0.0
        %1434 = vmatmul.mubr.f32.gmra.mrb[0].mxu0 %v1337
        %v1435 = vpop.f32.mrb[0].mxu0
        %v1436 = vadd.f32 0.0, %v1435
        %v1437 = vpop.f32.mrb[0].mxu0
        %1438 = vmatprep.mubr.f32.mxu0 0.0
        %1439 = vmatmul.mubr.f32.gmra.mrb[0].mxu0 %v1340
        %v1440 = vpop.f32.mrb[0].mxu0
        %v1441 = vadd.f32 0.0, %v1440
        %v1442 = vpop.f32.mrb[0].mxu0
        %1443 = vmatprep.mubr.f32.mxu0 0.0
        %1444 = vmatmul.mubr.f32.gmra.mrb[0].mxu0 %v1343
        %v1445 = vpop.f32.mrb[0].mxu0
        %v1446 = vadd.f32 0.0, %v1445
        %v1447 = vpop.f32.mrb[0].mxu0
        %1448 = vmatprep.mubr.f32.mxu0 0.0
        %1449 = vmatmul.mubr.f32.gmra.mrb[0].mxu0 %v1346
        %v1450 = vpop.f32.mrb[0].mxu0
        %v1451 = vadd.f32 0.0, %v1450
        %v1452 = vpop.f32.mrb[0].mxu0
        %1453 = vmatprep.mubr.f32.mxu0 0.0
        %1454 = vmatmul.mubr.f32.gmra.mrb[0].mxu0 %v1349
        %v1455 = vpop.f32.mrb[0].mxu0
        %v1456 = vadd.f32 0.0, %v1455
        %v1457 = vpop.f32.mrb[0].mxu0
        %1458 = vdwg.mxu0
        %v1459 = vadd.f32 %v1308, %v1421
        %v1460 = vadd.f32 %v1309, %v1426
        %v1461 = vadd.f32 %v1310, %v1431
        %v1462 = vadd.f32 %v1311, %v1436
        %v1463 = vadd.f32 %v1312, %v1441
        %v1464 = vadd.f32 %v1313, %v1446
        %v1465 = vadd.f32 %v1314, %v1451
        %v1466 = vadd.f32 %v1315, %v1456
        %v1467 = vld [vmem:[%s1165 + $0x1] sm:$0xff]
        %v1468 = vld [vmem:[%s1165 + $0x11] sm:$0xff]
        %v1469 = vld [vmem:[%s1165 + $0x21] sm:$0xff]
        %v1470 = vld [vmem:[%s1165 + $0x31] sm:$0xff]
        %v1471 = vld [vmem:[%s1165 + $0x41] sm:$0xff]
        %v1472 = vld [vmem:[%s1165 + $0x51] sm:$0xff]
        %v1473 = vld [vmem:[%s1165 + $0x61] sm:$0xff]
        %v1474 = vld [vmem:[%s1165 + $0x71] sm:$0xff]
        %s1475 = scalar_lea.vmem %s1, 32
        %v1476 = vld [vmem:[%s1475] sm:$0xf]
        %v1478 = vsel %vm297, %v1467, 0
        %v1481 = vsel %vm297, %v1468, 0
        %v1484 = vsel %vm297, %v1469, 0
        %v1487 = vsel %vm297, %v1470, 0
        %v1490 = vsel %vm297, %v1471, 0
        %v1493 = vsel %vm297, %v1472, 0
        %v1496 = vsel %vm297, %v1473, 0
        %v1499 = vsel %vm297, %v1474, 0
        %v1502 = vsel %vm322, %v1476, 0
        %1504 = vmatprep.subr.mxu0 0.0
        %1505 = vmatpush1.msra.mxu0 %v1502
        %1506 = vmatprep.subr.mxu0 0.0
        %1507 = vmatpush1.msra.mxu0 0.0
        %1508 = vmatprep.subr.mxu0 0.0
        %1509 = vmatpush1.msra.mxu0 0.0
        %1510 = vmatprep.subr.mxu0 0.0
        %1511 = vmatpush1.msra.mxu0 0.0
        %1512 = vmatprep.subr.mxu0 0.0
        %1513 = vmatpush1.msra.mxu0 0.0
        %1514 = vmatprep.subr.mxu0 0.0
        %1515 = vmatpush1.msra.mxu0 0.0
        %1516 = vmatprep.subr.mxu0 0.0
        %1517 = vmatpush1.msra.mxu0 0.0
        %1518 = vmatprep.subr.mxu0 0.0
        %1519 = vmatpush1.msra.mxu0 0.0
        %1520 = vmatprep.subr.mxu0 0.0
        %1521 = vmatpush1.msra.mxu0 0.0
        %1522 = vmatprep.subr.mxu0 0.0
        %1523 = vmatpush1.msra.mxu0 0.0
        %1524 = vmatprep.subr.mxu0 0.0
        %1525 = vmatpush1.msra.mxu0 0.0
        %1526 = vmatprep.subr.mxu0 0.0
        %1527 = vmatpush1.msra.mxu0 0.0
        %1528 = vmatprep.subr.mxu0 0.0
        %1529 = vmatpush1.msra.mxu0 0.0
        %1530 = vmatprep.subr.mxu0 0.0
        %1531 = vmatpush1.msra.mxu0 0.0
        %1532 = vmatprep.subr.mxu0 0.0
        %1533 = vmatpush1.msra.mxu0 0.0
        %1534 = vmatprep.subr.mxu0 0.0
        %1535 = vmatpush1.msra.mxu0 0.0
        %1536 = vmatprep.subr.mxu0 0.0
        %1537 = vmatpush1.msra.mxu0 0.0
        %1538 = vmatprep.subr.mxu0 0.0
        %1539 = vmatpush1.msra.mxu0 0.0
        %1540 = vmatprep.subr.mxu0 0.0
        %1541 = vmatpush1.msra.mxu0 0.0
        %1542 = vmatprep.subr.mxu0 0.0
        %1543 = vmatpush1.msra.mxu0 0.0
        %1544 = vmatprep.subr.mxu0 0.0
        %1545 = vmatpush1.msra.mxu0 0.0
        %1546 = vmatprep.subr.mxu0 0.0
        %1547 = vmatpush1.msra.mxu0 0.0
        %1548 = vmatprep.subr.mxu0 0.0
        %1549 = vmatpush1.msra.mxu0 0.0
        %1550 = vmatprep.subr.mxu0 0.0
        %1551 = vmatpush1.msra.mxu0 0.0
        %1552 = vmatprep.subr.mxu0 0.0
        %1553 = vmatpush1.msra.mxu0 0.0
        %1554 = vmatprep.subr.mxu0 0.0
        %1555 = vmatpush1.msra.mxu0 0.0
        %1556 = vmatprep.subr.mxu0 0.0
        %1557 = vmatpush1.msra.mxu0 0.0
        %1558 = vmatprep.subr.mxu0 0.0
        %1559 = vmatpush1.msra.mxu0 0.0
        %1560 = vmatprep.subr.mxu0 0.0
        %1561 = vmatpush1.msra.mxu0 0.0
        %1562 = vmatprep.subr.mxu0 0.0
        %1563 = vmatpush1.msra.mxu0 0.0
        %1564 = vmatprep.subr.mxu0 0.0
        %1565 = vmatpush1.msra.mxu0 0.0
        %1566 = vmatprep.subr.mxu0 0.0
        %1567 = vmatpush1.msra.mxu0 0.0
        %1568 = vmatprep.mubr.f32.mxu0 0.0
        %1569 = vmatmul.mubr.f32.gmra.mrb[0].mxu0 %v1478
        %v1570 = vpop.f32.mrb[0].mxu0
        %v1571 = vadd.f32 0.0, %v1570
        %v1572 = vpop.f32.mrb[0].mxu0
        %1573 = vmatprep.mubr.f32.mxu0 0.0
        %1574 = vmatmul.mubr.f32.gmra.mrb[0].mxu0 %v1481
        %v1575 = vpop.f32.mrb[0].mxu0
        %v1576 = vadd.f32 0.0, %v1575
        %v1577 = vpop.f32.mrb[0].mxu0
        %1578 = vmatprep.mubr.f32.mxu0 0.0
        %1579 = vmatmul.mubr.f32.gmra.mrb[0].mxu0 %v1484
        %v1580 = vpop.f32.mrb[0].mxu0
        %v1581 = vadd.f32 0.0, %v1580
        %v1582 = vpop.f32.mrb[0].mxu0
        %1583 = vmatprep.mubr.f32.mxu0 0.0
        %1584 = vmatmul.mubr.f32.gmra.mrb[0].mxu0 %v1487
        %v1585 = vpop.f32.mrb[0].mxu0
        %v1586 = vadd.f32 0.0, %v1585
        %v1587 = vpop.f32.mrb[0].mxu0
        %1588 = vmatprep.mubr.f32.mxu0 0.0
        %1589 = vmatmul.mubr.f32.gmra.mrb[0].mxu0 %v1490
        %v1590 = vpop.f32.mrb[0].mxu0
        %v1591 = vadd.f32 0.0, %v1590
        %v1592 = vpop.f32.mrb[0].mxu0
        %1593 = vmatprep.mubr.f32.mxu0 0.0
        %1594 = vmatmul.mubr.f32.gmra.mrb[0].mxu0 %v1493
        %v1595 = vpop.f32.mrb[0].mxu0
        %v1596 = vadd.f32 0.0, %v1595
        %v1597 = vpop.f32.mrb[0].mxu0
        %1598 = vmatprep.mubr.f32.mxu0 0.0
        %1599 = vmatmul.mubr.f32.gmra.mrb[0].mxu0 %v1496
        %v1600 = vpop.f32.mrb[0].mxu0
        %v1601 = vadd.f32 0.0, %v1600
        %v1602 = vpop.f32.mrb[0].mxu0
        %1603 = vmatprep.mubr.f32.mxu0 0.0
        %1604 = vmatmul.mubr.f32.gmra.mrb[0].mxu0 %v1499
        %v1605 = vpop.f32.mrb[0].mxu0
        %v1606 = vadd.f32 0.0, %v1605
        %v1607 = vpop.f32.mrb[0].mxu0
        %1608 = vdwg.mxu0
        %v1609 = vadd.f32 %v1459, %v1571
        %v1610 = vadd.f32 %v1460, %v1576
        %v1611 = vadd.f32 %v1461, %v1581
        %v1612 = vadd.f32 %v1462, %v1586
        %v1613 = vadd.f32 %v1463, %v1591
        %v1614 = vadd.f32 %v1464, %v1596
        %v1615 = vadd.f32 %v1465, %v1601
        %v1616 = vadd.f32 %v1466, %v1606
        %v1617 = vld [vmem:[%s2] sm:$0x1]
        %v1619 = vlaneseq
        %v1620 = vshrl.u32 %v1619, 7
        %v1621 = vsub.s32 0, %v1620
        %v1622 = vrot.slane %v1617, %v1621
        %v1624 = vadd.f32 %v1609, %v1622
        %v1625 = vadd.f32 %v1610, %v1622
        %v1626 = vadd.f32 %v1611, %v1622
        %v1627 = vadd.f32 %v1612, %v1622
        %v1628 = vadd.f32 %v1613, %v1622
        %v1629 = vadd.f32 %v1614, %v1622
        %v1630 = vadd.f32 %v1615, %v1622
        %v1631 = vadd.f32 %v1616, %v1622
        %v1632 = vmax.f32 %v1624, 0.0
        %v1633 = vmax.f32 %v1625, 0.0
        %v1634 = vmax.f32 %v1626, 0.0
        %v1635 = vmax.f32 %v1627, 0.0
        %v1636 = vmax.f32 %v1628, 0.0
        %v1637 = vmax.f32 %v1629, 0.0
        %v1638 = vmax.f32 %v1630, 0.0
        %v1639 = vmax.f32 %v1631, 0.0
        %1640 = vst [vmem:[#allocation2] sm:$0xff] 0.0
        %1641 = vst [vmem:[#allocation2 + $0x8] sm:$0x3] 0.0
        %1642 = vst [vmem:[#allocation2 + $0x10] sm:$0xff] 0.0
        %1643 = vst [vmem:[#allocation2 + $0x18] sm:$0x3] 0.0
        %1644 = vst [vmem:[#allocation2 + $0x20] sm:$0xff] 0.0
        %1645 = vst [vmem:[#allocation2 + $0x28] sm:$0x3] 0.0
        %1646 = vst [vmem:[#allocation2 + $0x30] sm:$0xff] 0.0
        %1647 = vst [vmem:[#allocation2 + $0x38] sm:$0x3] 0.0
        %1648 = vst [vmem:[#allocation2 + $0x40] sm:$0xff] 0.0
        %1649 = vst [vmem:[#allocation2 + $0x48] sm:$0x3] 0.0
        %1650 = vst [vmem:[#allocation2 + $0x50] sm:$0xff] 0.0
        %1651 = vst [vmem:[#allocation2 + $0x58] sm:$0x3] 0.0
        %1652 = vst [vmem:[#allocation2 + $0x60] sm:$0xff] 0.0
        %1653 = vst [vmem:[#allocation2 + $0x68] sm:$0x3] 0.0
        %1654 = vst [vmem:[#allocation2 + $0x70] sm:$0xff] 0.0
        %1655 = vst [vmem:[#allocation2 + $0x78] sm:$0x3] 0.0
        %1656 = vst [vmem:[#allocation2 + $0x80] sm:$0xff] 0.0
        %1657 = vst [vmem:[#allocation2 + $0x88] sm:$0x3] 0.0
        %1658 = vst [vmem:[#allocation2 + $0x90] sm:$0xff] 0.0
        %1659 = vst [vmem:[#allocation2 + $0x98] sm:$0x3] 0.0
        %s1660 = scalar_lea.vmem [#allocation2], 16
        %1661 = vst [vmem:[%s1660 + $0x1] sm:$0xff] %v1632
        %1662 = vst [vmem:[%s1660 + $0x11] sm:$0xff] %v1633
        %1663 = vst [vmem:[%s1660 + $0x21] sm:$0xff] %v1634
        %1664 = vst [vmem:[%s1660 + $0x31] sm:$0xff] %v1635
        %1665 = vst [vmem:[%s1660 + $0x41] sm:$0xff] %v1636
        %1666 = vst [vmem:[%s1660 + $0x51] sm:$0xff] %v1637
        %1667 = vst [vmem:[%s1660 + $0x61] sm:$0xff] %v1638
        %1668 = vst [vmem:[%s1660 + $0x71] sm:$0xff] %v1639
        %v1669 = vld [vmem:[#allocation2] sm:$0xff]
        %v1670 = vld [vmem:[#allocation2 + $0x10] sm:$0xff]
        %v1671 = vld [vmem:[#allocation2 + $0x20] sm:$0xff]
        %v1672 = vld [vmem:[#allocation2 + $0x30] sm:$0xff]
        %v1673 = vld [vmem:[#allocation2 + $0x40] sm:$0xff]
        %v1674 = vld [vmem:[#allocation2 + $0x50] sm:$0xff]
        %v1675 = vld [vmem:[#allocation2 + $0x60] sm:$0xff]
        %v1676 = vld [vmem:[#allocation2 + $0x70] sm:$0xff]
        %v1677 = vld [vmem:[%s3] sm:$0xff]
        %v1678 = vld [vmem:[%s3 + $0x8] sm:$0xff]
        %v1679 = vld [vmem:[%s3 + $0x10] sm:$0xff]
        %v1680 = vld [vmem:[%s3 + $0x18] sm:$0xff]
        %v1681 = vld [vmem:[%s3 + $0x20] sm:$0xff]
        %v1682 = vld [vmem:[%s3 + $0x28] sm:$0xff]
        %v1683 = vld [vmem:[%s3 + $0x30] sm:$0xff]
        %v1684 = vld [vmem:[%s3 + $0x38] sm:$0xff]
        %v1685 = vld [vmem:[%s3 + $0x40] sm:$0xff]
        %v1686 = vld [vmem:[%s3 + $0x48] sm:$0xff]
        %v1687 = vld [vmem:[%s3 + $0x50] sm:$0xff]
        %v1688 = vld [vmem:[%s3 + $0x58] sm:$0xff]
        %v1689 = vld [vmem:[%s3 + $0x60] sm:$0xff]
        %v1690 = vld [vmem:[%s3 + $0x68] sm:$0xff]
        %v1691 = vld [vmem:[%s3 + $0x70] sm:$0xff]
        %v1692 = vld [vmem:[%s3 + $0x78] sm:$0xff]
        %v1693 = vld [vmem:[#allocation2 + $0x1] sm:$0xff]
        %v1694 = vld [vmem:[#allocation2 + $0x11] sm:$0xff]
        %v1695 = vld [vmem:[#allocation2 + $0x21] sm:$0xff]
        %v1696 = vld [vmem:[#allocation2 + $0x31] sm:$0xff]
        %v1697 = vld [vmem:[#allocation2 + $0x41] sm:$0xff]
        %v1698 = vld [vmem:[#allocation2 + $0x51] sm:$0xff]
        %v1699 = vld [vmem:[#allocation2 + $0x61] sm:$0xff]
        %v1700 = vld [vmem:[#allocation2 + $0x71] sm:$0xff]
        %s1701 = scalar_lea.vmem %s3, 128
        %v1702 = vld [vmem:[%s1701] sm:$0xff]
        %v1703 = vld [vmem:[%s1701 + $0x8] sm:$0xff]
        %v1704 = vld [vmem:[%s1701 + $0x10] sm:$0xff]
        %v1705 = vld [vmem:[%s1701 + $0x18] sm:$0xff]
        %v1706 = vld [vmem:[%s1701 + $0x20] sm:$0xff]
        %v1707 = vld [vmem:[%s1701 + $0x28] sm:$0xff]
        %v1708 = vld [vmem:[%s1701 + $0x30] sm:$0xff]
        %v1709 = vld [vmem:[%s1701 + $0x38] sm:$0xff]
        %v1710 = vld [vmem:[%s1701 + $0x40] sm:$0xff]
        %v1711 = vld [vmem:[%s1701 + $0x48] sm:$0xff]
        %v1712 = vld [vmem:[%s1701 + $0x50] sm:$0xff]
        %v1713 = vld [vmem:[%s1701 + $0x58] sm:$0xff]
        %v1714 = vld [vmem:[%s1701 + $0x60] sm:$0xff]
        %v1715 = vld [vmem:[%s1701 + $0x68] sm:$0xff]
        %v1716 = vld [vmem:[%s1701 + $0x70] sm:$0xff]
        %v1717 = vld [vmem:[%s1701 + $0x78] sm:$0xff]
        %1718 = vmatprep.subr.mxu0 0.0
        %1719 = vmatpush1.msra.mxu0 %v1702
        %1720 = vmatprep.subr.mxu0 0.0
        %1721 = vmatpush1.msra.mxu0 %v1703
        %1722 = vmatprep.subr.mxu0 0.0
        %1723 = vmatpush1.msra.mxu0 %v1704
        %1724 = vmatprep.subr.mxu0 0.0
        %1725 = vmatpush1.msra.mxu0 %v1705
        %1726 = vmatprep.subr.mxu0 0.0
        %1727 = vmatpush1.msra.mxu0 %v1706
        %1728 = vmatprep.subr.mxu0 0.0
        %1729 = vmatpush1.msra.mxu0 %v1707
        %1730 = vmatprep.subr.mxu0 0.0
        %1731 = vmatpush1.msra.mxu0 %v1708
        %1732 = vmatprep.subr.mxu0 0.0
        %1733 = vmatpush1.msra.mxu0 %v1709
        %1734 = vmatprep.subr.mxu0 0.0
        %1735 = vmatpush1.msra.mxu0 %v1710
        %1736 = vmatprep.subr.mxu0 0.0
        %1737 = vmatpush1.msra.mxu0 %v1711
        %1738 = vmatprep.subr.mxu0 0.0
        %1739 = vmatpush1.msra.mxu0 %v1712
        %1740 = vmatprep.subr.mxu0 0.0
        %1741 = vmatpush1.msra.mxu0 %v1713
        %1742 = vmatprep.subr.mxu0 0.0
        %1743 = vmatpush1.msra.mxu0 %v1714
        %1744 = vmatprep.subr.mxu0 0.0
        %1745 = vmatpush1.msra.mxu0 %v1715
        %1746 = vmatprep.subr.mxu0 0.0
        %1747 = vmatpush1.msra.mxu0 %v1716
        %1748 = vmatprep.subr.mxu0 0.0
        %1749 = vmatpush1.msra.mxu0 %v1717
        %1750 = vmatprep.subr.mxu0 0.0
        %1751 = vmatpush1.msra.mxu0 0.0
        %1752 = vmatprep.subr.mxu0 0.0
        %1753 = vmatpush1.msra.mxu0 0.0
        %1754 = vmatprep.subr.mxu0 0.0
        %1755 = vmatpush1.msra.mxu0 0.0
        %1756 = vmatprep.subr.mxu0 0.0
        %1757 = vmatpush1.msra.mxu0 0.0
        %1758 = vmatprep.subr.mxu0 0.0
        %1759 = vmatpush1.msra.mxu0 0.0
        %1760 = vmatprep.subr.mxu0 0.0
        %1761 = vmatpush1.msra.mxu0 0.0
        %1762 = vmatprep.subr.mxu0 0.0
        %1763 = vmatpush1.msra.mxu0 0.0
        %1764 = vmatprep.subr.mxu0 0.0
        %1765 = vmatpush1.msra.mxu0 0.0
        %1766 = vmatprep.subr.mxu0 0.0
        %1767 = vmatpush1.msra.mxu0 0.0
        %1768 = vmatprep.subr.mxu0 0.0
        %1769 = vmatpush1.msra.mxu0 0.0
        %1770 = vmatprep.subr.mxu0 0.0
        %1771 = vmatpush1.msra.mxu0 0.0
        %1772 = vmatprep.subr.mxu0 0.0
        %1773 = vmatpush1.msra.mxu0 0.0
        %1774 = vmatprep.subr.mxu0 0.0
        %1775 = vmatpush1.msra.mxu0 0.0
        %1776 = vmatprep.subr.mxu0 0.0
        %1777 = vmatpush1.msra.mxu0 0.0
        %1778 = vmatprep.subr.mxu0 0.0
        %1779 = vmatpush1.msra.mxu0 0.0
        %1780 = vmatprep.subr.mxu0 0.0
        %1781 = vmatpush1.msra.mxu0 0.0
        %1782 = vmatprep.mubr.f32.mxu0 0.0
        %1783 = vmatmul.mubr.f32.gmra.mrb[0].mxu0 %v1693
        %v1784 = vpop.f32.mrb[0].mxu0
        %v1785 = vadd.f32 0.0, %v1784
        %v1786 = vpop.f32.mrb[0].mxu0
        %1787 = vmatprep.mubr.f32.mxu0 0.0
        %1788 = vmatmul.mubr.f32.gmra.mrb[0].mxu0 %v1694
        %v1789 = vpop.f32.mrb[0].mxu0
        %v1790 = vadd.f32 0.0, %v1789
        %v1791 = vpop.f32.mrb[0].mxu0
        %1792 = vmatprep.mubr.f32.mxu0 0.0
        %1793 = vmatmul.mubr.f32.gmra.mrb[0].mxu0 %v1695
        %v1794 = vpop.f32.mrb[0].mxu0
        %v1795 = vadd.f32 0.0, %v1794
        %v1796 = vpop.f32.mrb[0].mxu0
        %1797 = vmatprep.mubr.f32.mxu0 0.0
        %1798 = vmatmul.mubr.f32.gmra.mrb[0].mxu0 %v1696
        %v1799 = vpop.f32.mrb[0].mxu0
        %v1800 = vadd.f32 0.0, %v1799
        %v1801 = vpop.f32.mrb[0].mxu0
        %1802 = vmatprep.mubr.f32.mxu0 0.0
        %1803 = vmatmul.mubr.f32.gmra.mrb[0].mxu0 %v1697
        %v1804 = vpop.f32.mrb[0].mxu0
        %v1805 = vadd.f32 0.0, %v1804
        %v1806 = vpop.f32.mrb[0].mxu0
        %1807 = vmatprep.mubr.f32.mxu0 0.0
        %1808 = vmatmul.mubr.f32.gmra.mrb[0].mxu0 %v1698
        %v1809 = vpop.f32.mrb[0].mxu0
        %v1810 = vadd.f32 0.0, %v1809
        %v1811 = vpop.f32.mrb[0].mxu0
        %1812 = vmatprep.mubr.f32.mxu0 0.0
        %1813 = vmatmul.mubr.f32.gmra.mrb[0].mxu0 %v1699
        %v1814 = vpop.f32.mrb[0].mxu0
        %v1815 = vadd.f32 0.0, %v1814
        %v1816 = vpop.f32.mrb[0].mxu0
        %1817 = vmatprep.mubr.f32.mxu0 0.0
        %1818 = vmatmul.mubr.f32.gmra.mrb[0].mxu0 %v1700
        %v1819 = vpop.f32.mrb[0].mxu0
        %v1820 = vadd.f32 0.0, %v1819
        %v1821 = vpop.f32.mrb[0].mxu0
        %1822 = vdwg.mxu0
        %1823 = vmatprep.subr.mxu0 0.0
        %1824 = vmatpush1.msra.mxu0 %v1677
        %1825 = vmatprep.subr.mxu0 0.0
        %1826 = vmatpush1.msra.mxu0 %v1678
        %1827 = vmatprep.subr.mxu0 0.0
        %1828 = vmatpush1.msra.mxu0 %v1679
        %1829 = vmatprep.subr.mxu0 0.0
        %1830 = vmatpush1.msra.mxu0 %v1680
        %1831 = vmatprep.subr.mxu0 0.0
        %1832 = vmatpush1.msra.mxu0 %v1681
        %1833 = vmatprep.subr.mxu0 0.0
        %1834 = vmatpush1.msra.mxu0 %v1682
        %1835 = vmatprep.subr.mxu0 0.0
        %1836 = vmatpush1.msra.mxu0 %v1683
        %1837 = vmatprep.subr.mxu0 0.0
        %1838 = vmatpush1.msra.mxu0 %v1684
        %1839 = vmatprep.subr.mxu0 0.0
        %1840 = vmatpush1.msra.mxu0 %v1685
        %1841 = vmatprep.subr.mxu0 0.0
        %1842 = vmatpush1.msra.mxu0 %v1686
        %1843 = vmatprep.subr.mxu0 0.0
        %1844 = vmatpush1.msra.mxu0 %v1687
        %1845 = vmatprep.subr.mxu0 0.0
        %1846 = vmatpush1.msra.mxu0 %v1688
        %1847 = vmatprep.subr.mxu0 0.0
        %1848 = vmatpush1.msra.mxu0 %v1689
        %1849 = vmatprep.subr.mxu0 0.0
        %1850 = vmatpush1.msra.mxu0 %v1690
        %1851 = vmatprep.subr.mxu0 0.0
        %1852 = vmatpush1.msra.mxu0 %v1691
        %1853 = vmatprep.subr.mxu0 0.0
        %1854 = vmatpush1.msra.mxu0 %v1692
        %1855 = vmatprep.subr.mxu0 0.0
        %1856 = vmatpush1.msra.mxu0 0.0
        %1857 = vmatprep.subr.mxu0 0.0
        %1858 = vmatpush1.msra.mxu0 0.0
        %1859 = vmatprep.subr.mxu0 0.0
        %1860 = vmatpush1.msra.mxu0 0.0
        %1861 = vmatprep.subr.mxu0 0.0
        %1862 = vmatpush1.msra.mxu0 0.0
        %1863 = vmatprep.subr.mxu0 0.0
        %1864 = vmatpush1.msra.mxu0 0.0
        %1865 = vmatprep.subr.mxu0 0.0
        %1866 = vmatpush1.msra.mxu0 0.0
        %1867 = vmatprep.subr.mxu0 0.0
        %1868 = vmatpush1.msra.mxu0 0.0
        %1869 = vmatprep.subr.mxu0 0.0
        %1870 = vmatpush1.msra.mxu0 0.0
        %1871 = vmatprep.subr.mxu0 0.0
        %1872 = vmatpush1.msra.mxu0 0.0
        %1873 = vmatprep.subr.mxu0 0.0
        %1874 = vmatpush1.msra.mxu0 0.0
        %1875 = vmatprep.subr.mxu0 0.0
        %1876 = vmatpush1.msra.mxu0 0.0
        %1877 = vmatprep.subr.mxu0 0.0
        %1878 = vmatpush1.msra.mxu0 0.0
        %1879 = vmatprep.subr.mxu0 0.0
        %1880 = vmatpush1.msra.mxu0 0.0
        %1881 = vmatprep.subr.mxu0 0.0
        %1882 = vmatpush1.msra.mxu0 0.0
        %1883 = vmatprep.subr.mxu0 0.0
        %1884 = vmatpush1.msra.mxu0 0.0
        %1885 = vmatprep.subr.mxu0 0.0
        %1886 = vmatpush1.msra.mxu0 0.0
        %1887 = vmatprep.mubr.f32.mxu0 0.0
        %1888 = vmatmul.mubr.f32.gmra.mrb[0].mxu0 %v1669
        %v1889 = vpop.f32.mrb[0].mxu0
        %v1890 = vadd.f32 %v1785, %v1889
        %v1891 = vpop.f32.mrb[0].mxu0
        %1892 = vmatprep.mubr.f32.mxu0 0.0
        %1893 = vmatmul.mubr.f32.gmra.mrb[0].mxu0 %v1670
        %v1894 = vpop.f32.mrb[0].mxu0
        %v1895 = vadd.f32 %v1790, %v1894
        %v1896 = vpop.f32.mrb[0].mxu0
        %1897 = vmatprep.mubr.f32.mxu0 0.0
        %1898 = vmatmul.mubr.f32.gmra.mrb[0].mxu0 %v1671
        %v1899 = vpop.f32.mrb[0].mxu0
        %v1900 = vadd.f32 %v1795, %v1899
        %v1901 = vpop.f32.mrb[0].mxu0
        %1902 = vmatprep.mubr.f32.mxu0 0.0
        %1903 = vmatmul.mubr.f32.gmra.mrb[0].mxu0 %v1672
        %v1904 = vpop.f32.mrb[0].mxu0
        %v1905 = vadd.f32 %v1800, %v1904
        %v1906 = vpop.f32.mrb[0].mxu0
        %1907 = vmatprep.mubr.f32.mxu0 0.0
        %1908 = vmatmul.mubr.f32.gmra.mrb[0].mxu0 %v1673
        %v1909 = vpop.f32.mrb[0].mxu0
        %v1910 = vadd.f32 %v1805, %v1909
        %v1911 = vpop.f32.mrb[0].mxu0
        %1912 = vmatprep.mubr.f32.mxu0 0.0
        %1913 = vmatmul.mubr.f32.gmra.mrb[0].mxu0 %v1674
        %v1914 = vpop.f32.mrb[0].mxu0
        %v1915 = vadd.f32 %v1810, %v1914
        %v1916 = vpop.f32.mrb[0].mxu0
        %1917 = vmatprep.mubr.f32.mxu0 0.0
        %1918 = vmatmul.mubr.f32.gmra.mrb[0].mxu0 %v1675
        %v1919 = vpop.f32.mrb[0].mxu0
        %v1920 = vadd.f32 %v1815, %v1919
        %v1921 = vpop.f32.mrb[0].mxu0
        %1922 = vmatprep.mubr.f32.mxu0 0.0
        %1923 = vmatmul.mubr.f32.gmra.mrb[0].mxu0 %v1676
        %v1924 = vpop.f32.mrb[0].mxu0
        %v1925 = vadd.f32 %v1820, %v1924
        %v1926 = vpop.f32.mrb[0].mxu0
        %1927 = vdwg.mxu0
        %v1928 = vld [vmem:[#allocation2 + $0x2] sm:$0xff]
        %v1929 = vld [vmem:[#allocation2 + $0x12] sm:$0xff]
        %v1930 = vld [vmem:[#allocation2 + $0x22] sm:$0xff]
        %v1931 = vld [vmem:[#allocation2 + $0x32] sm:$0xff]
        %v1932 = vld [vmem:[#allocation2 + $0x42] sm:$0xff]
        %v1933 = vld [vmem:[#allocation2 + $0x52] sm:$0xff]
        %v1934 = vld [vmem:[#allocation2 + $0x62] sm:$0xff]
        %v1935 = vld [vmem:[#allocation2 + $0x72] sm:$0xff]
        %s1936 = scalar_lea.vmem %s3, 256
        %v1937 = vld [vmem:[%s1936] sm:$0xff]
        %v1938 = vld [vmem:[%s1936 + $0x8] sm:$0xff]
        %v1939 = vld [vmem:[%s1936 + $0x10] sm:$0xff]
        %v1940 = vld [vmem:[%s1936 + $0x18] sm:$0xff]
        %v1941 = vld [vmem:[%s1936 + $0x20] sm:$0xff]
        %v1942 = vld [vmem:[%s1936 + $0x28] sm:$0xff]
        %v1943 = vld [vmem:[%s1936 + $0x30] sm:$0xff]
        %v1944 = vld [vmem:[%s1936 + $0x38] sm:$0xff]
        %v1945 = vld [vmem:[%s1936 + $0x40] sm:$0xff]
        %v1946 = vld [vmem:[%s1936 + $0x48] sm:$0xff]
        %v1947 = vld [vmem:[%s1936 + $0x50] sm:$0xff]
        %v1948 = vld [vmem:[%s1936 + $0x58] sm:$0xff]
        %v1949 = vld [vmem:[%s1936 + $0x60] sm:$0xff]
        %v1950 = vld [vmem:[%s1936 + $0x68] sm:$0xff]
        %v1951 = vld [vmem:[%s1936 + $0x70] sm:$0xff]
        %v1952 = vld [vmem:[%s1936 + $0x78] sm:$0xff]
        %1953 = vmatprep.subr.mxu0 0.0
        %1954 = vmatpush1.msra.mxu0 %v1937
        %1955 = vmatprep.subr.mxu0 0.0
        %1956 = vmatpush1.msra.mxu0 %v1938
        %1957 = vmatprep.subr.mxu0 0.0
        %1958 = vmatpush1.msra.mxu0 %v1939
        %1959 = vmatprep.subr.mxu0 0.0
        %1960 = vmatpush1.msra.mxu0 %v1940
        %1961 = vmatprep.subr.mxu0 0.0
        %1962 = vmatpush1.msra.mxu0 %v1941
        %1963 = vmatprep.subr.mxu0 0.0
        %1964 = vmatpush1.msra.mxu0 %v1942
        %1965 = vmatprep.subr.mxu0 0.0
        %1966 = vmatpush1.msra.mxu0 %v1943
        %1967 = vmatprep.subr.mxu0 0.0
        %1968 = vmatpush1.msra.mxu0 %v1944
        %1969 = vmatprep.subr.mxu0 0.0
        %1970 = vmatpush1.msra.mxu0 %v1945
        %1971 = vmatprep.subr.mxu0 0.0
        %1972 = vmatpush1.msra.mxu0 %v1946
        %1973 = vmatprep.subr.mxu0 0.0
        %1974 = vmatpush1.msra.mxu0 %v1947
        %1975 = vmatprep.subr.mxu0 0.0
        %1976 = vmatpush1.msra.mxu0 %v1948
        %1977 = vmatprep.subr.mxu0 0.0
        %1978 = vmatpush1.msra.mxu0 %v1949
        %1979 = vmatprep.subr.mxu0 0.0
        %1980 = vmatpush1.msra.mxu0 %v1950
        %1981 = vmatprep.subr.mxu0 0.0
        %1982 = vmatpush1.msra.mxu0 %v1951
        %1983 = vmatprep.subr.mxu0 0.0
        %1984 = vmatpush1.msra.mxu0 %v1952
        %1985 = vmatprep.subr.mxu0 0.0
        %1986 = vmatpush1.msra.mxu0 0.0
        %1987 = vmatprep.subr.mxu0 0.0
        %1988 = vmatpush1.msra.mxu0 0.0
        %1989 = vmatprep.subr.mxu0 0.0
        %1990 = vmatpush1.msra.mxu0 0.0
        %1991 = vmatprep.subr.mxu0 0.0
        %1992 = vmatpush1.msra.mxu0 0.0
        %1993 = vmatprep.subr.mxu0 0.0
        %1994 = vmatpush1.msra.mxu0 0.0
        %1995 = vmatprep.subr.mxu0 0.0
        %1996 = vmatpush1.msra.mxu0 0.0
        %1997 = vmatprep.subr.mxu0 0.0
        %1998 = vmatpush1.msra.mxu0 0.0
        %1999 = vmatprep.subr.mxu0 0.0
        %2000 = vmatpush1.msra.mxu0 0.0
        %2001 = vmatprep.subr.mxu0 0.0
        %2002 = vmatpush1.msra.mxu0 0.0
        %2003 = vmatprep.subr.mxu0 0.0
        %2004 = vmatpush1.msra.mxu0 0.0
        %2005 = vmatprep.subr.mxu0 0.0
        %2006 = vmatpush1.msra.mxu0 0.0
        %2007 = vmatprep.subr.mxu0 0.0
        %2008 = vmatpush1.msra.mxu0 0.0
        %2009 = vmatprep.subr.mxu0 0.0
        %2010 = vmatpush1.msra.mxu0 0.0
        %2011 = vmatprep.subr.mxu0 0.0
        %2012 = vmatpush1.msra.mxu0 0.0
        %2013 = vmatprep.subr.mxu0 0.0
        %2014 = vmatpush1.msra.mxu0 0.0
        %2015 = vmatprep.subr.mxu0 0.0
        %2016 = vmatpush1.msra.mxu0 0.0
        %2017 = vmatprep.mubr.f32.mxu0 0.0
        %2018 = vmatmul.mubr.f32.gmra.mrb[0].mxu0 %v1928
        %v2019 = vpop.f32.mrb[0].mxu0
        %v2020 = vadd.f32 0.0, %v2019
        %v2021 = vpop.f32.mrb[0].mxu0
        %2022 = vmatprep.mubr.f32.mxu0 0.0
        %2023 = vmatmul.mubr.f32.gmra.mrb[0].mxu0 %v1929
        %v2024 = vpop.f32.mrb[0].mxu0
        %v2025 = vadd.f32 0.0, %v2024
        %v2026 = vpop.f32.mrb[0].mxu0
        %2027 = vmatprep.mubr.f32.mxu0 0.0
        %2028 = vmatmul.mubr.f32.gmra.mrb[0].mxu0 %v1930
        %v2029 = vpop.f32.mrb[0].mxu0
        %v2030 = vadd.f32 0.0, %v2029
        %v2031 = vpop.f32.mrb[0].mxu0
        %2032 = vmatprep.mubr.f32.mxu0 0.0
        %2033 = vmatmul.mubr.f32.gmra.mrb[0].mxu0 %v1931
        %v2034 = vpop.f32.mrb[0].mxu0
        %v2035 = vadd.f32 0.0, %v2034
        %v2036 = vpop.f32.mrb[0].mxu0
        %2037 = vmatprep.mubr.f32.mxu0 0.0
        %2038 = vmatmul.mubr.f32.gmra.mrb[0].mxu0 %v1932
        %v2039 = vpop.f32.mrb[0].mxu0
        %v2040 = vadd.f32 0.0, %v2039
        %v2041 = vpop.f32.mrb[0].mxu0
        %2042 = vmatprep.mubr.f32.mxu0 0.0
        %2043 = vmatmul.mubr.f32.gmra.mrb[0].mxu0 %v1933
        %v2044 = vpop.f32.mrb[0].mxu0
        %v2045 = vadd.f32 0.0, %v2044
        %v2046 = vpop.f32.mrb[0].mxu0
        %2047 = vmatprep.mubr.f32.mxu0 0.0
        %2048 = vmatmul.mubr.f32.gmra.mrb[0].mxu0 %v1934
        %v2049 = vpop.f32.mrb[0].mxu0
        %v2050 = vadd.f32 0.0, %v2049
        %v2051 = vpop.f32.mrb[0].mxu0
        %2052 = vmatprep.mubr.f32.mxu0 0.0
        %2053 = vmatmul.mubr.f32.gmra.mrb[0].mxu0 %v1935
        %v2054 = vpop.f32.mrb[0].mxu0
        %v2055 = vadd.f32 0.0, %v2054
        %v2056 = vpop.f32.mrb[0].mxu0
        %2057 = vdwg.mxu0
        %v2058 = vadd.f32 %v1890, %v2020
        %v2059 = vadd.f32 %v1895, %v2025
        %v2060 = vadd.f32 %v1900, %v2030
        %v2061 = vadd.f32 %v1905, %v2035
        %v2062 = vadd.f32 %v1910, %v2040
        %v2063 = vadd.f32 %v1915, %v2045
        %v2064 = vadd.f32 %v1920, %v2050
        %v2065 = vadd.f32 %v1925, %v2055
        %v2066 = vld [vmem:[%s1660] sm:$0xff]
        %v2067 = vld [vmem:[%s1660 + $0x10] sm:$0xff]
        %v2068 = vld [vmem:[%s1660 + $0x20] sm:$0xff]
        %v2069 = vld [vmem:[%s1660 + $0x30] sm:$0xff]
        %v2070 = vld [vmem:[%s1660 + $0x40] sm:$0xff]
        %v2071 = vld [vmem:[%s1660 + $0x50] sm:$0xff]
        %v2072 = vld [vmem:[%s1660 + $0x60] sm:$0xff]
        %v2073 = vld [vmem:[%s1660 + $0x70] sm:$0xff]
        %s2074 = scalar_lea.vmem %s3, 384
        %v2075 = vld [vmem:[%s2074] sm:$0xff]
        %v2076 = vld [vmem:[%s2074 + $0x8] sm:$0xff]
        %v2077 = vld [vmem:[%s2074 + $0x10] sm:$0xff]
        %v2078 = vld [vmem:[%s2074 + $0x18] sm:$0xff]
        %v2079 = vld [vmem:[%s2074 + $0x20] sm:$0xff]
        %v2080 = vld [vmem:[%s2074 + $0x28] sm:$0xff]
        %v2081 = vld [vmem:[%s2074 + $0x30] sm:$0xff]
        %v2082 = vld [vmem:[%s2074 + $0x38] sm:$0xff]
        %v2083 = vld [vmem:[%s2074 + $0x40] sm:$0xff]
        %v2084 = vld [vmem:[%s2074 + $0x48] sm:$0xff]
        %v2085 = vld [vmem:[%s2074 + $0x50] sm:$0xff]
        %v2086 = vld [vmem:[%s2074 + $0x58] sm:$0xff]
        %v2087 = vld [vmem:[%s2074 + $0x60] sm:$0xff]
        %v2088 = vld [vmem:[%s2074 + $0x68] sm:$0xff]
        %v2089 = vld [vmem:[%s2074 + $0x70] sm:$0xff]
        %v2090 = vld [vmem:[%s2074 + $0x78] sm:$0xff]
        %2091 = vmatprep.subr.mxu0 0.0
        %2092 = vmatpush1.msra.mxu0 %v2075
        %2093 = vmatprep.subr.mxu0 0.0
        %2094 = vmatpush1.msra.mxu0 %v2076
        %2095 = vmatprep.subr.mxu0 0.0
        %2096 = vmatpush1.msra.mxu0 %v2077
        %2097 = vmatprep.subr.mxu0 0.0
        %2098 = vmatpush1.msra.mxu0 %v2078
        %2099 = vmatprep.subr.mxu0 0.0
        %2100 = vmatpush1.msra.mxu0 %v2079
        %2101 = vmatprep.subr.mxu0 0.0
        %2102 = vmatpush1.msra.mxu0 %v2080
        %2103 = vmatprep.subr.mxu0 0.0
        %2104 = vmatpush1.msra.mxu0 %v2081
        %2105 = vmatprep.subr.mxu0 0.0
        %2106 = vmatpush1.msra.mxu0 %v2082
        %2107 = vmatprep.subr.mxu0 0.0
        %2108 = vmatpush1.msra.mxu0 %v2083
        %2109 = vmatprep.subr.mxu0 0.0
        %2110 = vmatpush1.msra.mxu0 %v2084
        %2111 = vmatprep.subr.mxu0 0.0
        %2112 = vmatpush1.msra.mxu0 %v2085
        %2113 = vmatprep.subr.mxu0 0.0
        %2114 = vmatpush1.msra.mxu0 %v2086
        %2115 = vmatprep.subr.mxu0 0.0
        %2116 = vmatpush1.msra.mxu0 %v2087
        %2117 = vmatprep.subr.mxu0 0.0
        %2118 = vmatpush1.msra.mxu0 %v2088
        %2119 = vmatprep.subr.mxu0 0.0
        %2120 = vmatpush1.msra.mxu0 %v2089
        %2121 = vmatprep.subr.mxu0 0.0
        %2122 = vmatpush1.msra.mxu0 %v2090
        %2123 = vmatprep.subr.mxu0 0.0
        %2124 = vmatpush1.msra.mxu0 0.0
        %2125 = vmatprep.subr.mxu0 0.0
        %2126 = vmatpush1.msra.mxu0 0.0
        %2127 = vmatprep.subr.mxu0 0.0
        %2128 = vmatpush1.msra.mxu0 0.0
        %2129 = vmatprep.subr.mxu0 0.0
        %2130 = vmatpush1.msra.mxu0 0.0
        %2131 = vmatprep.subr.mxu0 0.0
        %2132 = vmatpush1.msra.mxu0 0.0
        %2133 = vmatprep.subr.mxu0 0.0
        %2134 = vmatpush1.msra.mxu0 0.0
        %2135 = vmatprep.subr.mxu0 0.0
        %2136 = vmatpush1.msra.mxu0 0.0
        %2137 = vmatprep.subr.mxu0 0.0
        %2138 = vmatpush1.msra.mxu0 0.0
        %2139 = vmatprep.subr.mxu0 0.0
        %2140 = vmatpush1.msra.mxu0 0.0
        %2141 = vmatprep.subr.mxu0 0.0
        %2142 = vmatpush1.msra.mxu0 0.0
        %2143 = vmatprep.subr.mxu0 0.0
        %2144 = vmatpush1.msra.mxu0 0.0
        %2145 = vmatprep.subr.mxu0 0.0
        %2146 = vmatpush1.msra.mxu0 0.0
        %2147 = vmatprep.subr.mxu0 0.0
        %2148 = vmatpush1.msra.mxu0 0.0
        %2149 = vmatprep.subr.mxu0 0.0
        %2150 = vmatpush1.msra.mxu0 0.0
        %2151 = vmatprep.subr.mxu0 0.0
        %2152 = vmatpush1.msra.mxu0 0.0
        %2153 = vmatprep.subr.mxu0 0.0
        %2154 = vmatpush1.msra.mxu0 0.0
        %2155 = vmatprep.mubr.f32.mxu0 0.0
        %2156 = vmatmul.mubr.f32.gmra.mrb[0].mxu0 %v2066
        %v2157 = vpop.f32.mrb[0].mxu0
        %v2158 = vadd.f32 0.0, %v2157
        %v2159 = vpop.f32.mrb[0].mxu0
        %2160 = vmatprep.mubr.f32.mxu0 0.0
        %2161 = vmatmul.mubr.f32.gmra.mrb[0].mxu0 %v2067
        %v2162 = vpop.f32.mrb[0].mxu0
        %v2163 = vadd.f32 0.0, %v2162
        %v2164 = vpop.f32.mrb[0].mxu0
        %2165 = vmatprep.mubr.f32.mxu0 0.0
        %2166 = vmatmul.mubr.f32.gmra.mrb[0].mxu0 %v2068
        %v2167 = vpop.f32.mrb[0].mxu0
        %v2168 = vadd.f32 0.0, %v2167
        %v2169 = vpop.f32.mrb[0].mxu0
        %2170 = vmatprep.mubr.f32.mxu0 0.0
        %2171 = vmatmul.mubr.f32.gmra.mrb[0].mxu0 %v2069
        %v2172 = vpop.f32.mrb[0].mxu0
        %v2173 = vadd.f32 0.0, %v2172
        %v2174 = vpop.f32.mrb[0].mxu0
        %2175 = vmatprep.mubr.f32.mxu0 0.0
        %2176 = vmatmul.mubr.f32.gmra.mrb[0].mxu0 %v2070
        %v2177 = vpop.f32.mrb[0].mxu0
        %v2178 = vadd.f32 0.0, %v2177
        %v2179 = vpop.f32.mrb[0].mxu0
        %2180 = vmatprep.mubr.f32.mxu0 0.0
        %2181 = vmatmul.mubr.f32.gmra.mrb[0].mxu0 %v2071
        %v2182 = vpop.f32.mrb[0].mxu0
        %v2183 = vadd.f32 0.0, %v2182
        %v2184 = vpop.f32.mrb[0].mxu0
        %2185 = vmatprep.mubr.f32.mxu0 0.0
        %2186 = vmatmul.mubr.f32.gmra.mrb[0].mxu0 %v2072
        %v2187 = vpop.f32.mrb[0].mxu0
        %v2188 = vadd.f32 0.0, %v2187
        %v2189 = vpop.f32.mrb[0].mxu0
        %2190 = vmatprep.mubr.f32.mxu0 0.0
        %2191 = vmatmul.mubr.f32.gmra.mrb[0].mxu0 %v2073
        %v2192 = vpop.f32.mrb[0].mxu0
        %v2193 = vadd.f32 0.0, %v2192
        %v2194 = vpop.f32.mrb[0].mxu0
        %2195 = vdwg.mxu0
        %v2196 = vadd.f32 %v2058, %v2158
        %v2197 = vadd.f32 %v2059, %v2163
        %v2198 = vadd.f32 %v2060, %v2168
        %v2199 = vadd.f32 %v2061, %v2173
        %v2200 = vadd.f32 %v2062, %v2178
        %v2201 = vadd.f32 %v2063, %v2183
        %v2202 = vadd.f32 %v2064, %v2188
        %v2203 = vadd.f32 %v2065, %v2193
        %v2204 = vld [vmem:[%s1660 + $0x1] sm:$0xff]
        %v2205 = vld [vmem:[%s1660 + $0x11] sm:$0xff]
        %v2206 = vld [vmem:[%s1660 + $0x21] sm:$0xff]
        %v2207 = vld [vmem:[%s1660 + $0x31] sm:$0xff]
        %v2208 = vld [vmem:[%s1660 + $0x41] sm:$0xff]
        %v2209 = vld [vmem:[%s1660 + $0x51] sm:$0xff]
        %v2210 = vld [vmem:[%s1660 + $0x61] sm:$0xff]
        %v2211 = vld [vmem:[%s1660 + $0x71] sm:$0xff]
        %s2212 = scalar_lea.vmem %s3, 512
        %v2213 = vld [vmem:[%s2212] sm:$0xff]
        %v2214 = vld [vmem:[%s2212 + $0x8] sm:$0xff]
        %v2215 = vld [vmem:[%s2212 + $0x10] sm:$0xff]
        %v2216 = vld [vmem:[%s2212 + $0x18] sm:$0xff]
        %v2217 = vld [vmem:[%s2212 + $0x20] sm:$0xff]
        %v2218 = vld [vmem:[%s2212 + $0x28] sm:$0xff]
        %v2219 = vld [vmem:[%s2212 + $0x30] sm:$0xff]
        %v2220 = vld [vmem:[%s2212 + $0x38] sm:$0xff]
        %v2221 = vld [vmem:[%s2212 + $0x40] sm:$0xff]
        %v2222 = vld [vmem:[%s2212 + $0x48] sm:$0xff]
        %v2223 = vld [vmem:[%s2212 + $0x50] sm:$0xff]
        %v2224 = vld [vmem:[%s2212 + $0x58] sm:$0xff]
        %v2225 = vld [vmem:[%s2212 + $0x60] sm:$0xff]
        %v2226 = vld [vmem:[%s2212 + $0x68] sm:$0xff]
        %v2227 = vld [vmem:[%s2212 + $0x70] sm:$0xff]
        %v2228 = vld [vmem:[%s2212 + $0x78] sm:$0xff]
        %2229 = vmatprep.subr.mxu0 0.0
        %2230 = vmatpush1.msra.mxu0 %v2213
        %2231 = vmatprep.subr.mxu0 0.0
        %2232 = vmatpush1.msra.mxu0 %v2214
        %2233 = vmatprep.subr.mxu0 0.0
        %2234 = vmatpush1.msra.mxu0 %v2215
        %2235 = vmatprep.subr.mxu0 0.0
        %2236 = vmatpush1.msra.mxu0 %v2216
        %2237 = vmatprep.subr.mxu0 0.0
        %2238 = vmatpush1.msra.mxu0 %v2217
        %2239 = vmatprep.subr.mxu0 0.0
        %2240 = vmatpush1.msra.mxu0 %v2218
        %2241 = vmatprep.subr.mxu0 0.0
        %2242 = vmatpush1.msra.mxu0 %v2219
        %2243 = vmatprep.subr.mxu0 0.0
        %2244 = vmatpush1.msra.mxu0 %v2220
        %2245 = vmatprep.subr.mxu0 0.0
        %2246 = vmatpush1.msra.mxu0 %v2221
        %2247 = vmatprep.subr.mxu0 0.0
        %2248 = vmatpush1.msra.mxu0 %v2222
        %2249 = vmatprep.subr.mxu0 0.0
        %2250 = vmatpush1.msra.mxu0 %v2223
        %2251 = vmatprep.subr.mxu0 0.0
        %2252 = vmatpush1.msra.mxu0 %v2224
        %2253 = vmatprep.subr.mxu0 0.0
        %2254 = vmatpush1.msra.mxu0 %v2225
        %2255 = vmatprep.subr.mxu0 0.0
        %2256 = vmatpush1.msra.mxu0 %v2226
        %2257 = vmatprep.subr.mxu0 0.0
        %2258 = vmatpush1.msra.mxu0 %v2227
        %2259 = vmatprep.subr.mxu0 0.0
        %2260 = vmatpush1.msra.mxu0 %v2228
        %2261 = vmatprep.subr.mxu0 0.0
        %2262 = vmatpush1.msra.mxu0 0.0
        %2263 = vmatprep.subr.mxu0 0.0
        %2264 = vmatpush1.msra.mxu0 0.0
        %2265 = vmatprep.subr.mxu0 0.0
        %2266 = vmatpush1.msra.mxu0 0.0
        %2267 = vmatprep.subr.mxu0 0.0
        %2268 = vmatpush1.msra.mxu0 0.0
        %2269 = vmatprep.subr.mxu0 0.0
        %2270 = vmatpush1.msra.mxu0 0.0
        %2271 = vmatprep.subr.mxu0 0.0
        %2272 = vmatpush1.msra.mxu0 0.0
        %2273 = vmatprep.subr.mxu0 0.0
        %2274 = vmatpush1.msra.mxu0 0.0
        %2275 = vmatprep.subr.mxu0 0.0
        %2276 = vmatpush1.msra.mxu0 0.0
        %2277 = vmatprep.subr.mxu0 0.0
        %2278 = vmatpush1.msra.mxu0 0.0
        %2279 = vmatprep.subr.mxu0 0.0
        %2280 = vmatpush1.msra.mxu0 0.0
        %2281 = vmatprep.subr.mxu0 0.0
        %2282 = vmatpush1.msra.mxu0 0.0
        %2283 = vmatprep.subr.mxu0 0.0
        %2284 = vmatpush1.msra.mxu0 0.0
        %2285 = vmatprep.subr.mxu0 0.0
        %2286 = vmatpush1.msra.mxu0 0.0
        %2287 = vmatprep.subr.mxu0 0.0
        %2288 = vmatpush1.msra.mxu0 0.0
        %2289 = vmatprep.subr.mxu0 0.0
        %2290 = vmatpush1.msra.mxu0 0.0
        %2291 = vmatprep.subr.mxu0 0.0
        %2292 = vmatpush1.msra.mxu0 0.0
        %2293 = vmatprep.mubr.f32.mxu0 0.0
        %2294 = vmatmul.mubr.f32.gmra.mrb[0].mxu0 %v2204
        %v2295 = vpop.f32.mrb[0].mxu0
        %v2296 = vadd.f32 0.0, %v2295
        %v2297 = vpop.f32.mrb[0].mxu0
        %2298 = vmatprep.mubr.f32.mxu0 0.0
        %2299 = vmatmul.mubr.f32.gmra.mrb[0].mxu0 %v2205
        %v2300 = vpop.f32.mrb[0].mxu0
        %v2301 = vadd.f32 0.0, %v2300
        %v2302 = vpop.f32.mrb[0].mxu0
        %2303 = vmatprep.mubr.f32.mxu0 0.0
        %2304 = vmatmul.mubr.f32.gmra.mrb[0].mxu0 %v2206
        %v2305 = vpop.f32.mrb[0].mxu0
        %v2306 = vadd.f32 0.0, %v2305
        %v2307 = vpop.f32.mrb[0].mxu0
        %2308 = vmatprep.mubr.f32.mxu0 0.0
        %2309 = vmatmul.mubr.f32.gmra.mrb[0].mxu0 %v2207
        %v2310 = vpop.f32.mrb[0].mxu0
        %v2311 = vadd.f32 0.0, %v2310
        %v2312 = vpop.f32.mrb[0].mxu0
        %2313 = vmatprep.mubr.f32.mxu0 0.0
        %2314 = vmatmul.mubr.f32.gmra.mrb[0].mxu0 %v2208
        %v2315 = vpop.f32.mrb[0].mxu0
        %v2316 = vadd.f32 0.0, %v2315
        %v2317 = vpop.f32.mrb[0].mxu0
        %2318 = vmatprep.mubr.f32.mxu0 0.0
        %2319 = vmatmul.mubr.f32.gmra.mrb[0].mxu0 %v2209
        %v2320 = vpop.f32.mrb[0].mxu0
        %v2321 = vadd.f32 0.0, %v2320
        %v2322 = vpop.f32.mrb[0].mxu0
        %2323 = vmatprep.mubr.f32.mxu0 0.0
        %2324 = vmatmul.mubr.f32.gmra.mrb[0].mxu0 %v2210
        %v2325 = vpop.f32.mrb[0].mxu0
        %v2326 = vadd.f32 0.0, %v2325
        %v2327 = vpop.f32.mrb[0].mxu0
        %2328 = vmatprep.mubr.f32.mxu0 0.0
        %2329 = vmatmul.mubr.f32.gmra.mrb[0].mxu0 %v2211
        %v2330 = vpop.f32.mrb[0].mxu0
        %v2331 = vadd.f32 0.0, %v2330
        %v2332 = vpop.f32.mrb[0].mxu0
        %2333 = vdwg.mxu0
        %v2334 = vadd.f32 %v2196, %v2296
        %v2335 = vadd.f32 %v2197, %v2301
        %v2336 = vadd.f32 %v2198, %v2306
        %v2337 = vadd.f32 %v2199, %v2311
        %v2338 = vadd.f32 %v2200, %v2316
        %v2339 = vadd.f32 %v2201, %v2321
        %v2340 = vadd.f32 %v2202, %v2326
        %v2341 = vadd.f32 %v2203, %v2331
        %v2342 = vld [vmem:[%s1660 + $0x2] sm:$0xff]
        %v2343 = vld [vmem:[%s1660 + $0x12] sm:$0xff]
        %v2344 = vld [vmem:[%s1660 + $0x22] sm:$0xff]
        %v2345 = vld [vmem:[%s1660 + $0x32] sm:$0xff]
        %v2346 = vld [vmem:[%s1660 + $0x42] sm:$0xff]
        %v2347 = vld [vmem:[%s1660 + $0x52] sm:$0xff]
        %v2348 = vld [vmem:[%s1660 + $0x62] sm:$0xff]
        %v2349 = vld [vmem:[%s1660 + $0x72] sm:$0xff]
        %s2350 = scalar_lea.vmem %s3, 640
        %v2351 = vld [vmem:[%s2350] sm:$0xff]
        %v2352 = vld [vmem:[%s2350 + $0x8] sm:$0xff]
        %v2353 = vld [vmem:[%s2350 + $0x10] sm:$0xff]
        %v2354 = vld [vmem:[%s2350 + $0x18] sm:$0xff]
        %v2355 = vld [vmem:[%s2350 + $0x20] sm:$0xff]
        %v2356 = vld [vmem:[%s2350 + $0x28] sm:$0xff]
        %v2357 = vld [vmem:[%s2350 + $0x30] sm:$0xff]
        %v2358 = vld [vmem:[%s2350 + $0x38] sm:$0xff]
        %v2359 = vld [vmem:[%s2350 + $0x40] sm:$0xff]
        %v2360 = vld [vmem:[%s2350 + $0x48] sm:$0xff]
        %v2361 = vld [vmem:[%s2350 + $0x50] sm:$0xff]
        %v2362 = vld [vmem:[%s2350 + $0x58] sm:$0xff]
        %v2363 = vld [vmem:[%s2350 + $0x60] sm:$0xff]
        %v2364 = vld [vmem:[%s2350 + $0x68] sm:$0xff]
        %v2365 = vld [vmem:[%s2350 + $0x70] sm:$0xff]
        %v2366 = vld [vmem:[%s2350 + $0x78] sm:$0xff]
        %2367 = vmatprep.subr.mxu0 0.0
        %2368 = vmatpush1.msra.mxu0 %v2351
        %2369 = vmatprep.subr.mxu0 0.0
        %2370 = vmatpush1.msra.mxu0 %v2352
        %2371 = vmatprep.subr.mxu0 0.0
        %2372 = vmatpush1.msra.mxu0 %v2353
        %2373 = vmatprep.subr.mxu0 0.0
        %2374 = vmatpush1.msra.mxu0 %v2354
        %2375 = vmatprep.subr.mxu0 0.0
        %2376 = vmatpush1.msra.mxu0 %v2355
        %2377 = vmatprep.subr.mxu0 0.0
        %2378 = vmatpush1.msra.mxu0 %v2356
        %2379 = vmatprep.subr.mxu0 0.0
        %2380 = vmatpush1.msra.mxu0 %v2357
        %2381 = vmatprep.subr.mxu0 0.0
        %2382 = vmatpush1.msra.mxu0 %v2358
        %2383 = vmatprep.subr.mxu0 0.0
        %2384 = vmatpush1.msra.mxu0 %v2359
        %2385 = vmatprep.subr.mxu0 0.0
        %2386 = vmatpush1.msra.mxu0 %v2360
        %2387 = vmatprep.subr.mxu0 0.0
        %2388 = vmatpush1.msra.mxu0 %v2361
        %2389 = vmatprep.subr.mxu0 0.0
        %2390 = vmatpush1.msra.mxu0 %v2362
        %2391 = vmatprep.subr.mxu0 0.0
        %2392 = vmatpush1.msra.mxu0 %v2363
        %2393 = vmatprep.subr.mxu0 0.0
        %2394 = vmatpush1.msra.mxu0 %v2364
        %2395 = vmatprep.subr.mxu0 0.0
        %2396 = vmatpush1.msra.mxu0 %v2365
        %2397 = vmatprep.subr.mxu0 0.0
        %2398 = vmatpush1.msra.mxu0 %v2366
        %2399 = vmatprep.subr.mxu0 0.0
        %2400 = vmatpush1.msra.mxu0 0.0
        %2401 = vmatprep.subr.mxu0 0.0
        %2402 = vmatpush1.msra.mxu0 0.0
        %2403 = vmatprep.subr.mxu0 0.0
        %2404 = vmatpush1.msra.mxu0 0.0
        %2405 = vmatprep.subr.mxu0 0.0
        %2406 = vmatpush1.msra.mxu0 0.0
        %2407 = vmatprep.subr.mxu0 0.0
        %2408 = vmatpush1.msra.mxu0 0.0
        %2409 = vmatprep.subr.mxu0 0.0
        %2410 = vmatpush1.msra.mxu0 0.0
        %2411 = vmatprep.subr.mxu0 0.0
        %2412 = vmatpush1.msra.mxu0 0.0
        %2413 = vmatprep.subr.mxu0 0.0
        %2414 = vmatpush1.msra.mxu0 0.0
        %2415 = vmatprep.subr.mxu0 0.0
        %2416 = vmatpush1.msra.mxu0 0.0
        %2417 = vmatprep.subr.mxu0 0.0
        %2418 = vmatpush1.msra.mxu0 0.0
        %2419 = vmatprep.subr.mxu0 0.0
        %2420 = vmatpush1.msra.mxu0 0.0
        %2421 = vmatprep.subr.mxu0 0.0
        %2422 = vmatpush1.msra.mxu0 0.0
        %2423 = vmatprep.subr.mxu0 0.0
        %2424 = vmatpush1.msra.mxu0 0.0
        %2425 = vmatprep.subr.mxu0 0.0
        %2426 = vmatpush1.msra.mxu0 0.0
        %2427 = vmatprep.subr.mxu0 0.0
        %2428 = vmatpush1.msra.mxu0 0.0
        %2429 = vmatprep.subr.mxu0 0.0
        %2430 = vmatpush1.msra.mxu0 0.0
        %2431 = vmatprep.mubr.f32.mxu0 0.0
        %2432 = vmatmul.mubr.f32.gmra.mrb[0].mxu0 %v2342
        %v2433 = vpop.f32.mrb[0].mxu0
        %v2434 = vadd.f32 0.0, %v2433
        %v2435 = vpop.f32.mrb[0].mxu0
        %2436 = vmatprep.mubr.f32.mxu0 0.0
        %2437 = vmatmul.mubr.f32.gmra.mrb[0].mxu0 %v2343
        %v2438 = vpop.f32.mrb[0].mxu0
        %v2439 = vadd.f32 0.0, %v2438
        %v2440 = vpop.f32.mrb[0].mxu0
        %2441 = vmatprep.mubr.f32.mxu0 0.0
        %2442 = vmatmul.mubr.f32.gmra.mrb[0].mxu0 %v2344
        %v2443 = vpop.f32.mrb[0].mxu0
        %v2444 = vadd.f32 0.0, %v2443
        %v2445 = vpop.f32.mrb[0].mxu0
        %2446 = vmatprep.mubr.f32.mxu0 0.0
        %2447 = vmatmul.mubr.f32.gmra.mrb[0].mxu0 %v2345
        %v2448 = vpop.f32.mrb[0].mxu0
        %v2449 = vadd.f32 0.0, %v2448
        %v2450 = vpop.f32.mrb[0].mxu0
        %2451 = vmatprep.mubr.f32.mxu0 0.0
        %2452 = vmatmul.mubr.f32.gmra.mrb[0].mxu0 %v2346
        %v2453 = vpop.f32.mrb[0].mxu0
        %v2454 = vadd.f32 0.0, %v2453
        %v2455 = vpop.f32.mrb[0].mxu0
        %2456 = vmatprep.mubr.f32.mxu0 0.0
        %2457 = vmatmul.mubr.f32.gmra.mrb[0].mxu0 %v2347
        %v2458 = vpop.f32.mrb[0].mxu0
        %v2459 = vadd.f32 0.0, %v2458
        %v2460 = vpop.f32.mrb[0].mxu0
        %2461 = vmatprep.mubr.f32.mxu0 0.0
        %2462 = vmatmul.mubr.f32.gmra.mrb[0].mxu0 %v2348
        %v2463 = vpop.f32.mrb[0].mxu0
        %v2464 = vadd.f32 0.0, %v2463
        %v2465 = vpop.f32.mrb[0].mxu0
        %2466 = vmatprep.mubr.f32.mxu0 0.0
        %2467 = vmatmul.mubr.f32.gmra.mrb[0].mxu0 %v2349
        %v2468 = vpop.f32.mrb[0].mxu0
        %v2469 = vadd.f32 0.0, %v2468
        %v2470 = vpop.f32.mrb[0].mxu0
        %2471 = vdwg.mxu0
        %v2472 = vadd.f32 %v2334, %v2434
        %v2473 = vadd.f32 %v2335, %v2439
        %v2474 = vadd.f32 %v2336, %v2444
        %v2475 = vadd.f32 %v2337, %v2449
        %v2476 = vadd.f32 %v2338, %v2454
        %v2477 = vadd.f32 %v2339, %v2459
        %v2478 = vadd.f32 %v2340, %v2464
        %v2479 = vadd.f32 %v2341, %v2469
        %s2480 = scalar_lea.vmem [#allocation2], 32
        %v2481 = vld [vmem:[%s2480] sm:$0xff]
        %v2482 = vld [vmem:[%s2480 + $0x10] sm:$0xff]
        %v2483 = vld [vmem:[%s2480 + $0x20] sm:$0xff]
        %v2484 = vld [vmem:[%s2480 + $0x30] sm:$0xff]
        %v2485 = vld [vmem:[%s2480 + $0x40] sm:$0xff]
        %v2486 = vld [vmem:[%s2480 + $0x50] sm:$0xff]
        %v2487 = vld [vmem:[%s2480 + $0x60] sm:$0xff]
        %v2488 = vld [vmem:[%s2480 + $0x70] sm:$0xff]
        %s2489 = scalar_lea.vmem %s3, 768
        %v2490 = vld [vmem:[%s2489] sm:$0xff]
        %v2491 = vld [vmem:[%s2489 + $0x8] sm:$0xff]
        %v2492 = vld [vmem:[%s2489 + $0x10] sm:$0xff]
        %v2493 = vld [vmem:[%s2489 + $0x18] sm:$0xff]
        %v2494 = vld [vmem:[%s2489 + $0x20] sm:$0xff]
        %v2495 = vld [vmem:[%s2489 + $0x28] sm:$0xff]
        %v2496 = vld [vmem:[%s2489 + $0x30] sm:$0xff]
        %v2497 = vld [vmem:[%s2489 + $0x38] sm:$0xff]
        %v2498 = vld [vmem:[%s2489 + $0x40] sm:$0xff]
        %v2499 = vld [vmem:[%s2489 + $0x48] sm:$0xff]
        %v2500 = vld [vmem:[%s2489 + $0x50] sm:$0xff]
        %v2501 = vld [vmem:[%s2489 + $0x58] sm:$0xff]
        %v2502 = vld [vmem:[%s2489 + $0x60] sm:$0xff]
        %v2503 = vld [vmem:[%s2489 + $0x68] sm:$0xff]
        %v2504 = vld [vmem:[%s2489 + $0x70] sm:$0xff]
        %v2505 = vld [vmem:[%s2489 + $0x78] sm:$0xff]
        %2506 = vmatprep.subr.mxu0 0.0
        %2507 = vmatpush1.msra.mxu0 %v2490
        %2508 = vmatprep.subr.mxu0 0.0
        %2509 = vmatpush1.msra.mxu0 %v2491
        %2510 = vmatprep.subr.mxu0 0.0
        %2511 = vmatpush1.msra.mxu0 %v2492
        %2512 = vmatprep.subr.mxu0 0.0
        %2513 = vmatpush1.msra.mxu0 %v2493
        %2514 = vmatprep.subr.mxu0 0.0
        %2515 = vmatpush1.msra.mxu0 %v2494
        %2516 = vmatprep.subr.mxu0 0.0
        %2517 = vmatpush1.msra.mxu0 %v2495
        %2518 = vmatprep.subr.mxu0 0.0
        %2519 = vmatpush1.msra.mxu0 %v2496
        %2520 = vmatprep.subr.mxu0 0.0
        %2521 = vmatpush1.msra.mxu0 %v2497
        %2522 = vmatprep.subr.mxu0 0.0
        %2523 = vmatpush1.msra.mxu0 %v2498
        %2524 = vmatprep.subr.mxu0 0.0
        %2525 = vmatpush1.msra.mxu0 %v2499
        %2526 = vmatprep.subr.mxu0 0.0
        %2527 = vmatpush1.msra.mxu0 %v2500
        %2528 = vmatprep.subr.mxu0 0.0
        %2529 = vmatpush1.msra.mxu0 %v2501
        %2530 = vmatprep.subr.mxu0 0.0
        %2531 = vmatpush1.msra.mxu0 %v2502
        %2532 = vmatprep.subr.mxu0 0.0
        %2533 = vmatpush1.msra.mxu0 %v2503
        %2534 = vmatprep.subr.mxu0 0.0
        %2535 = vmatpush1.msra.mxu0 %v2504
        %2536 = vmatprep.subr.mxu0 0.0
        %2537 = vmatpush1.msra.mxu0 %v2505
        %2538 = vmatprep.subr.mxu0 0.0
        %2539 = vmatpush1.msra.mxu0 0.0
        %2540 = vmatprep.subr.mxu0 0.0
        %2541 = vmatpush1.msra.mxu0 0.0
        %2542 = vmatprep.subr.mxu0 0.0
        %2543 = vmatpush1.msra.mxu0 0.0
        %2544 = vmatprep.subr.mxu0 0.0
        %2545 = vmatpush1.msra.mxu0 0.0
        %2546 = vmatprep.subr.mxu0 0.0
        %2547 = vmatpush1.msra.mxu0 0.0
        %2548 = vmatprep.subr.mxu0 0.0
        %2549 = vmatpush1.msra.mxu0 0.0
        %2550 = vmatprep.subr.mxu0 0.0
        %2551 = vmatpush1.msra.mxu0 0.0
        %2552 = vmatprep.subr.mxu0 0.0
        %2553 = vmatpush1.msra.mxu0 0.0
        %2554 = vmatprep.subr.mxu0 0.0
        %2555 = vmatpush1.msra.mxu0 0.0
        %2556 = vmatprep.subr.mxu0 0.0
        %2557 = vmatpush1.msra.mxu0 0.0
        %2558 = vmatprep.subr.mxu0 0.0
        %2559 = vmatpush1.msra.mxu0 0.0
        %2560 = vmatprep.subr.mxu0 0.0
        %2561 = vmatpush1.msra.mxu0 0.0
        %2562 = vmatprep.subr.mxu0 0.0
        %2563 = vmatpush1.msra.mxu0 0.0
        %2564 = vmatprep.subr.mxu0 0.0
        %2565 = vmatpush1.msra.mxu0 0.0
        %2566 = vmatprep.subr.mxu0 0.0
        %2567 = vmatpush1.msra.mxu0 0.0
        %2568 = vmatprep.subr.mxu0 0.0
        %2569 = vmatpush1.msra.mxu0 0.0
        %2570 = vmatprep.mubr.f32.mxu0 0.0
        %2571 = vmatmul.mubr.f32.gmra.mrb[0].mxu0 %v2481
        %v2572 = vpop.f32.mrb[0].mxu0
        %v2573 = vadd.f32 0.0, %v2572
        %v2574 = vpop.f32.mrb[0].mxu0
        %2575 = vmatprep.mubr.f32.mxu0 0.0
        %2576 = vmatmul.mubr.f32.gmra.mrb[0].mxu0 %v2482
        %v2577 = vpop.f32.mrb[0].mxu0
        %v2578 = vadd.f32 0.0, %v2577
        %v2579 = vpop.f32.mrb[0].mxu0
        %2580 = vmatprep.mubr.f32.mxu0 0.0
        %2581 = vmatmul.mubr.f32.gmra.mrb[0].mxu0 %v2483
        %v2582 = vpop.f32.mrb[0].mxu0
        %v2583 = vadd.f32 0.0, %v2582
        %v2584 = vpop.f32.mrb[0].mxu0
        %2585 = vmatprep.mubr.f32.mxu0 0.0
        %2586 = vmatmul.mubr.f32.gmra.mrb[0].mxu0 %v2484
        %v2587 = vpop.f32.mrb[0].mxu0
        %v2588 = vadd.f32 0.0, %v2587
        %v2589 = vpop.f32.mrb[0].mxu0
        %2590 = vmatprep.mubr.f32.mxu0 0.0
        %2591 = vmatmul.mubr.f32.gmra.mrb[0].mxu0 %v2485
        %v2592 = vpop.f32.mrb[0].mxu0
        %v2593 = vadd.f32 0.0, %v2592
        %v2594 = vpop.f32.mrb[0].mxu0
        %2595 = vmatprep.mubr.f32.mxu0 0.0
        %2596 = vmatmul.mubr.f32.gmra.mrb[0].mxu0 %v2486
        %v2597 = vpop.f32.mrb[0].mxu0
        %v2598 = vadd.f32 0.0, %v2597
        %v2599 = vpop.f32.mrb[0].mxu0
        %2600 = vmatprep.mubr.f32.mxu0 0.0
        %2601 = vmatmul.mubr.f32.gmra.mrb[0].mxu0 %v2487
        %v2602 = vpop.f32.mrb[0].mxu0
        %v2603 = vadd.f32 0.0, %v2602
        %v2604 = vpop.f32.mrb[0].mxu0
        %2605 = vmatprep.mubr.f32.mxu0 0.0
        %2606 = vmatmul.mubr.f32.gmra.mrb[0].mxu0 %v2488
        %v2607 = vpop.f32.mrb[0].mxu0
        %v2608 = vadd.f32 0.0, %v2607
        %v2609 = vpop.f32.mrb[0].mxu0
        %2610 = vdwg.mxu0
        %v2611 = vadd.f32 %v2472, %v2573
        %v2612 = vadd.f32 %v2473, %v2578
        %v2613 = vadd.f32 %v2474, %v2583
        %v2614 = vadd.f32 %v2475, %v2588
        %v2615 = vadd.f32 %v2476, %v2593
        %v2616 = vadd.f32 %v2477, %v2598
        %v2617 = vadd.f32 %v2478, %v2603
        %v2618 = vadd.f32 %v2479, %v2608
        %v2619 = vld [vmem:[%s2480 + $0x1] sm:$0xff]
        %v2620 = vld [vmem:[%s2480 + $0x11] sm:$0xff]
        %v2621 = vld [vmem:[%s2480 + $0x21] sm:$0xff]
        %v2622 = vld [vmem:[%s2480 + $0x31] sm:$0xff]
        %v2623 = vld [vmem:[%s2480 + $0x41] sm:$0xff]
        %v2624 = vld [vmem:[%s2480 + $0x51] sm:$0xff]
        %v2625 = vld [vmem:[%s2480 + $0x61] sm:$0xff]
        %v2626 = vld [vmem:[%s2480 + $0x71] sm:$0xff]
        %s2627 = scalar_lea.vmem %s3, 896
        %v2628 = vld [vmem:[%s2627] sm:$0xff]
        %v2629 = vld [vmem:[%s2627 + $0x8] sm:$0xff]
        %v2630 = vld [vmem:[%s2627 + $0x10] sm:$0xff]
        %v2631 = vld [vmem:[%s2627 + $0x18] sm:$0xff]
        %v2632 = vld [vmem:[%s2627 + $0x20] sm:$0xff]
        %v2633 = vld [vmem:[%s2627 + $0x28] sm:$0xff]
        %v2634 = vld [vmem:[%s2627 + $0x30] sm:$0xff]
        %v2635 = vld [vmem:[%s2627 + $0x38] sm:$0xff]
        %v2636 = vld [vmem:[%s2627 + $0x40] sm:$0xff]
        %v2637 = vld [vmem:[%s2627 + $0x48] sm:$0xff]
        %v2638 = vld [vmem:[%s2627 + $0x50] sm:$0xff]
        %v2639 = vld [vmem:[%s2627 + $0x58] sm:$0xff]
        %v2640 = vld [vmem:[%s2627 + $0x60] sm:$0xff]
        %v2641 = vld [vmem:[%s2627 + $0x68] sm:$0xff]
        %v2642 = vld [vmem:[%s2627 + $0x70] sm:$0xff]
        %v2643 = vld [vmem:[%s2627 + $0x78] sm:$0xff]
        %2644 = vmatprep.subr.mxu0 0.0
        %2645 = vmatpush1.msra.mxu0 %v2628
        %2646 = vmatprep.subr.mxu0 0.0
        %2647 = vmatpush1.msra.mxu0 %v2629
        %2648 = vmatprep.subr.mxu0 0.0
        %2649 = vmatpush1.msra.mxu0 %v2630
        %2650 = vmatprep.subr.mxu0 0.0
        %2651 = vmatpush1.msra.mxu0 %v2631
        %2652 = vmatprep.subr.mxu0 0.0
        %2653 = vmatpush1.msra.mxu0 %v2632
        %2654 = vmatprep.subr.mxu0 0.0
        %2655 = vmatpush1.msra.mxu0 %v2633
        %2656 = vmatprep.subr.mxu0 0.0
        %2657 = vmatpush1.msra.mxu0 %v2634
        %2658 = vmatprep.subr.mxu0 0.0
        %2659 = vmatpush1.msra.mxu0 %v2635
        %2660 = vmatprep.subr.mxu0 0.0
        %2661 = vmatpush1.msra.mxu0 %v2636
        %2662 = vmatprep.subr.mxu0 0.0
        %2663 = vmatpush1.msra.mxu0 %v2637
        %2664 = vmatprep.subr.mxu0 0.0
        %2665 = vmatpush1.msra.mxu0 %v2638
        %2666 = vmatprep.subr.mxu0 0.0
        %2667 = vmatpush1.msra.mxu0 %v2639
        %2668 = vmatprep.subr.mxu0 0.0
        %2669 = vmatpush1.msra.mxu0 %v2640
        %2670 = vmatprep.subr.mxu0 0.0
        %2671 = vmatpush1.msra.mxu0 %v2641
        %2672 = vmatprep.subr.mxu0 0.0
        %2673 = vmatpush1.msra.mxu0 %v2642
        %2674 = vmatprep.subr.mxu0 0.0
        %2675 = vmatpush1.msra.mxu0 %v2643
        %2676 = vmatprep.subr.mxu0 0.0
        %2677 = vmatpush1.msra.mxu0 0.0
        %2678 = vmatprep.subr.mxu0 0.0
        %2679 = vmatpush1.msra.mxu0 0.0
        %2680 = vmatprep.subr.mxu0 0.0
        %2681 = vmatpush1.msra.mxu0 0.0
        %2682 = vmatprep.subr.mxu0 0.0
        %2683 = vmatpush1.msra.mxu0 0.0
        %2684 = vmatprep.subr.mxu0 0.0
        %2685 = vmatpush1.msra.mxu0 0.0
        %2686 = vmatprep.subr.mxu0 0.0
        %2687 = vmatpush1.msra.mxu0 0.0
        %2688 = vmatprep.subr.mxu0 0.0
        %2689 = vmatpush1.msra.mxu0 0.0
        %2690 = vmatprep.subr.mxu0 0.0
        %2691 = vmatpush1.msra.mxu0 0.0
        %2692 = vmatprep.subr.mxu0 0.0
        %2693 = vmatpush1.msra.mxu0 0.0
        %2694 = vmatprep.subr.mxu0 0.0
        %2695 = vmatpush1.msra.mxu0 0.0
        %2696 = vmatprep.subr.mxu0 0.0
        %2697 = vmatpush1.msra.mxu0 0.0
        %2698 = vmatprep.subr.mxu0 0.0
        %2699 = vmatpush1.msra.mxu0 0.0
        %2700 = vmatprep.subr.mxu0 0.0
        %2701 = vmatpush1.msra.mxu0 0.0
        %2702 = vmatprep.subr.mxu0 0.0
        %2703 = vmatpush1.msra.mxu0 0.0
        %2704 = vmatprep.subr.mxu0 0.0
        %2705 = vmatpush1.msra.mxu0 0.0
        %2706 = vmatprep.subr.mxu0 0.0
        %2707 = vmatpush1.msra.mxu0 0.0
        %2708 = vmatprep.mubr.f32.mxu0 0.0
        %2709 = vmatmul.mubr.f32.gmra.mrb[0].mxu0 %v2619
        %v2710 = vpop.f32.mrb[0].mxu0
        %v2711 = vadd.f32 0.0, %v2710
        %v2712 = vpop.f32.mrb[0].mxu0
        %2713 = vmatprep.mubr.f32.mxu0 0.0
        %2714 = vmatmul.mubr.f32.gmra.mrb[0].mxu0 %v2620
        %v2715 = vpop.f32.mrb[0].mxu0
        %v2716 = vadd.f32 0.0, %v2715
        %v2717 = vpop.f32.mrb[0].mxu0
        %2718 = vmatprep.mubr.f32.mxu0 0.0
        %2719 = vmatmul.mubr.f32.gmra.mrb[0].mxu0 %v2621
        %v2720 = vpop.f32.mrb[0].mxu0
        %v2721 = vadd.f32 0.0, %v2720
        %v2722 = vpop.f32.mrb[0].mxu0
        %2723 = vmatprep.mubr.f32.mxu0 0.0
        %2724 = vmatmul.mubr.f32.gmra.mrb[0].mxu0 %v2622
        %v2725 = vpop.f32.mrb[0].mxu0
        %v2726 = vadd.f32 0.0, %v2725
        %v2727 = vpop.f32.mrb[0].mxu0
        %2728 = vmatprep.mubr.f32.mxu0 0.0
        %2729 = vmatmul.mubr.f32.gmra.mrb[0].mxu0 %v2623
        %v2730 = vpop.f32.mrb[0].mxu0
        %v2731 = vadd.f32 0.0, %v2730
        %v2732 = vpop.f32.mrb[0].mxu0
        %2733 = vmatprep.mubr.f32.mxu0 0.0
        %2734 = vmatmul.mubr.f32.gmra.mrb[0].mxu0 %v2624
        %v2735 = vpop.f32.mrb[0].mxu0
        %v2736 = vadd.f32 0.0, %v2735
        %v2737 = vpop.f32.mrb[0].mxu0
        %2738 = vmatprep.mubr.f32.mxu0 0.0
        %2739 = vmatmul.mubr.f32.gmra.mrb[0].mxu0 %v2625
        %v2740 = vpop.f32.mrb[0].mxu0
        %v2741 = vadd.f32 0.0, %v2740
        %v2742 = vpop.f32.mrb[0].mxu0
        %2743 = vmatprep.mubr.f32.mxu0 0.0
        %2744 = vmatmul.mubr.f32.gmra.mrb[0].mxu0 %v2626
        %v2745 = vpop.f32.mrb[0].mxu0
        %v2746 = vadd.f32 0.0, %v2745
        %v2747 = vpop.f32.mrb[0].mxu0
        %2748 = vdwg.mxu0
        %v2749 = vadd.f32 %v2611, %v2711
        %v2750 = vadd.f32 %v2612, %v2716
        %v2751 = vadd.f32 %v2613, %v2721
        %v2752 = vadd.f32 %v2614, %v2726
        %v2753 = vadd.f32 %v2615, %v2731
        %v2754 = vadd.f32 %v2616, %v2736
        %v2755 = vadd.f32 %v2617, %v2741
        %v2756 = vadd.f32 %v2618, %v2746
        %v2757 = vld [vmem:[%s2480 + $0x2] sm:$0xff]
        %v2758 = vld [vmem:[%s2480 + $0x12] sm:$0xff]
        %v2759 = vld [vmem:[%s2480 + $0x22] sm:$0xff]
        %v2760 = vld [vmem:[%s2480 + $0x32] sm:$0xff]
        %v2761 = vld [vmem:[%s2480 + $0x42] sm:$0xff]
        %v2762 = vld [vmem:[%s2480 + $0x52] sm:$0xff]
        %v2763 = vld [vmem:[%s2480 + $0x62] sm:$0xff]
        %v2764 = vld [vmem:[%s2480 + $0x72] sm:$0xff]
        %s2765 = scalar_lea.vmem %s3, 1024
        %v2766 = vld [vmem:[%s2765] sm:$0xff]
        %v2767 = vld [vmem:[%s2765 + $0x8] sm:$0xff]
        %v2768 = vld [vmem:[%s2765 + $0x10] sm:$0xff]
        %v2769 = vld [vmem:[%s2765 + $0x18] sm:$0xff]
        %v2770 = vld [vmem:[%s2765 + $0x20] sm:$0xff]
        %v2771 = vld [vmem:[%s2765 + $0x28] sm:$0xff]
        %v2772 = vld [vmem:[%s2765 + $0x30] sm:$0xff]
        %v2773 = vld [vmem:[%s2765 + $0x38] sm:$0xff]
        %v2774 = vld [vmem:[%s2765 + $0x40] sm:$0xff]
        %v2775 = vld [vmem:[%s2765 + $0x48] sm:$0xff]
        %v2776 = vld [vmem:[%s2765 + $0x50] sm:$0xff]
        %v2777 = vld [vmem:[%s2765 + $0x58] sm:$0xff]
        %v2778 = vld [vmem:[%s2765 + $0x60] sm:$0xff]
        %v2779 = vld [vmem:[%s2765 + $0x68] sm:$0xff]
        %v2780 = vld [vmem:[%s2765 + $0x70] sm:$0xff]
        %v2781 = vld [vmem:[%s2765 + $0x78] sm:$0xff]
        %2782 = vmatprep.subr.mxu0 0.0
        %2783 = vmatpush1.msra.mxu0 %v2766
        %2784 = vmatprep.subr.mxu0 0.0
        %2785 = vmatpush1.msra.mxu0 %v2767
        %2786 = vmatprep.subr.mxu0 0.0
        %2787 = vmatpush1.msra.mxu0 %v2768
        %2788 = vmatprep.subr.mxu0 0.0
        %2789 = vmatpush1.msra.mxu0 %v2769
        %2790 = vmatprep.subr.mxu0 0.0
        %2791 = vmatpush1.msra.mxu0 %v2770
        %2792 = vmatprep.subr.mxu0 0.0
        %2793 = vmatpush1.msra.mxu0 %v2771
        %2794 = vmatprep.subr.mxu0 0.0
        %2795 = vmatpush1.msra.mxu0 %v2772
        %2796 = vmatprep.subr.mxu0 0.0
        %2797 = vmatpush1.msra.mxu0 %v2773
        %2798 = vmatprep.subr.mxu0 0.0
        %2799 = vmatpush1.msra.mxu0 %v2774
        %2800 = vmatprep.subr.mxu0 0.0
        %2801 = vmatpush1.msra.mxu0 %v2775
        %2802 = vmatprep.subr.mxu0 0.0
        %2803 = vmatpush1.msra.mxu0 %v2776
        %2804 = vmatprep.subr.mxu0 0.0
        %2805 = vmatpush1.msra.mxu0 %v2777
        %2806 = vmatprep.subr.mxu0 0.0
        %2807 = vmatpush1.msra.mxu0 %v2778
        %2808 = vmatprep.subr.mxu0 0.0
        %2809 = vmatpush1.msra.mxu0 %v2779
        %2810 = vmatprep.subr.mxu0 0.0
        %2811 = vmatpush1.msra.mxu0 %v2780
        %2812 = vmatprep.subr.mxu0 0.0
        %2813 = vmatpush1.msra.mxu0 %v2781
        %2814 = vmatprep.subr.mxu0 0.0
        %2815 = vmatpush1.msra.mxu0 0.0
        %2816 = vmatprep.subr.mxu0 0.0
        %2817 = vmatpush1.msra.mxu0 0.0
        %2818 = vmatprep.subr.mxu0 0.0
        %2819 = vmatpush1.msra.mxu0 0.0
        %2820 = vmatprep.subr.mxu0 0.0
        %2821 = vmatpush1.msra.mxu0 0.0
        %2822 = vmatprep.subr.mxu0 0.0
        %2823 = vmatpush1.msra.mxu0 0.0
        %2824 = vmatprep.subr.mxu0 0.0
        %2825 = vmatpush1.msra.mxu0 0.0
        %2826 = vmatprep.subr.mxu0 0.0
        %2827 = vmatpush1.msra.mxu0 0.0
        %2828 = vmatprep.subr.mxu0 0.0
        %2829 = vmatpush1.msra.mxu0 0.0
        %2830 = vmatprep.subr.mxu0 0.0
        %2831 = vmatpush1.msra.mxu0 0.0
        %2832 = vmatprep.subr.mxu0 0.0
        %2833 = vmatpush1.msra.mxu0 0.0
        %2834 = vmatprep.subr.mxu0 0.0
        %2835 = vmatpush1.msra.mxu0 0.0
        %2836 = vmatprep.subr.mxu0 0.0
        %2837 = vmatpush1.msra.mxu0 0.0
        %2838 = vmatprep.subr.mxu0 0.0
        %2839 = vmatpush1.msra.mxu0 0.0
        %2840 = vmatprep.subr.mxu0 0.0
        %2841 = vmatpush1.msra.mxu0 0.0
        %2842 = vmatprep.subr.mxu0 0.0
        %2843 = vmatpush1.msra.mxu0 0.0
        %2844 = vmatprep.subr.mxu0 0.0
        %2845 = vmatpush1.msra.mxu0 0.0
        %2846 = vmatprep.mubr.f32.mxu0 0.0
        %2847 = vmatmul.mubr.f32.gmra.mrb[0].mxu0 %v2757
        %v2848 = vpop.f32.mrb[0].mxu0
        %v2849 = vadd.f32 0.0, %v2848
        %v2850 = vpop.f32.mrb[0].mxu0
        %2851 = vmatprep.mubr.f32.mxu0 0.0
        %2852 = vmatmul.mubr.f32.gmra.mrb[0].mxu0 %v2758
        %v2853 = vpop.f32.mrb[0].mxu0
        %v2854 = vadd.f32 0.0, %v2853
        %v2855 = vpop.f32.mrb[0].mxu0
        %2856 = vmatprep.mubr.f32.mxu0 0.0
        %2857 = vmatmul.mubr.f32.gmra.mrb[0].mxu0 %v2759
        %v2858 = vpop.f32.mrb[0].mxu0
        %v2859 = vadd.f32 0.0, %v2858
        %v2860 = vpop.f32.mrb[0].mxu0
        %2861 = vmatprep.mubr.f32.mxu0 0.0
        %2862 = vmatmul.mubr.f32.gmra.mrb[0].mxu0 %v2760
        %v2863 = vpop.f32.mrb[0].mxu0
        %v2864 = vadd.f32 0.0, %v2863
        %v2865 = vpop.f32.mrb[0].mxu0
        %2866 = vmatprep.mubr.f32.mxu0 0.0
        %2867 = vmatmul.mubr.f32.gmra.mrb[0].mxu0 %v2761
        %v2868 = vpop.f32.mrb[0].mxu0
        %v2869 = vadd.f32 0.0, %v2868
        %v2870 = vpop.f32.mrb[0].mxu0
        %2871 = vmatprep.mubr.f32.mxu0 0.0
        %2872 = vmatmul.mubr.f32.gmra.mrb[0].mxu0 %v2762
        %v2873 = vpop.f32.mrb[0].mxu0
        %v2874 = vadd.f32 0.0, %v2873
        %v2875 = vpop.f32.mrb[0].mxu0
        %2876 = vmatprep.mubr.f32.mxu0 0.0
        %2877 = vmatmul.mubr.f32.gmra.mrb[0].mxu0 %v2763
        %v2878 = vpop.f32.mrb[0].mxu0
        %v2879 = vadd.f32 0.0, %v2878
        %v2880 = vpop.f32.mrb[0].mxu0
        %2881 = vmatprep.mubr.f32.mxu0 0.0
        %2882 = vmatmul.mubr.f32.gmra.mrb[0].mxu0 %v2764
        %v2883 = vpop.f32.mrb[0].mxu0
        %v2884 = vadd.f32 0.0, %v2883
        %v2885 = vpop.f32.mrb[0].mxu0
        %2886 = vdwg.mxu0
        %v2887 = vadd.f32 %v2749, %v2849
        %v2888 = vadd.f32 %v2750, %v2854
        %v2889 = vadd.f32 %v2751, %v2859
        %v2890 = vadd.f32 %v2752, %v2864
        %v2891 = vadd.f32 %v2753, %v2869
        %v2892 = vadd.f32 %v2754, %v2874
        %v2893 = vadd.f32 %v2755, %v2879
        %v2894 = vadd.f32 %v2756, %v2884
        %v2895 = vld [vmem:[%s4] sm:$0x1]
        %v2897 = vlaneseq
        %v2898 = vshrl.u32 %v2897, 7
        %v2899 = vsub.s32 0, %v2898
        %v2900 = vrot.slane %v2895, %v2899
        %v2902 = vadd.f32 %v2887, %v2900
        %v2903 = vadd.f32 %v2888, %v2900
        %v2904 = vadd.f32 %v2889, %v2900
        %v2905 = vadd.f32 %v2890, %v2900
        %v2906 = vadd.f32 %v2891, %v2900
        %v2907 = vadd.f32 %v2892, %v2900
        %v2908 = vadd.f32 %v2893, %v2900
        %v2909 = vadd.f32 %v2894, %v2900
        %v2910 = vld [vmem:[%s864] sm:$0xff]
        %v2911 = vld [vmem:[%s864 + $0x10] sm:$0xff]
        %v2912 = vld [vmem:[%s864 + $0x20] sm:$0xff]
        %v2913 = vld [vmem:[%s864 + $0x30] sm:$0xff]
        %v2914 = vld [vmem:[%s864 + $0x40] sm:$0xff]
        %v2915 = vld [vmem:[%s864 + $0x50] sm:$0xff]
        %v2916 = vld [vmem:[%s864 + $0x60] sm:$0xff]
        %v2917 = vld [vmem:[%s864 + $0x70] sm:$0xff]
        %v2918 = vld [vmem:[%s5] sm:$0xf]
        %v2920 = vsel %vm297, %v2910, 0
        %v2923 = vsel %vm297, %v2911, 0
        %v2926 = vsel %vm297, %v2912, 0
        %v2929 = vsel %vm297, %v2913, 0
        %v2932 = vsel %vm297, %v2914, 0
        %v2935 = vsel %vm297, %v2915, 0
        %v2938 = vsel %vm297, %v2916, 0
        %v2941 = vsel %vm297, %v2917, 0
        %v2944 = vsel %vm322, %v2918, 0
        %2946 = vmatprep.subr.mxu0 0.0
        %2947 = vmatpush1.msra.mxu0 %v2944
        %2948 = vmatprep.subr.mxu0 0.0
        %2949 = vmatpush1.msra.mxu0 0.0
        %2950 = vmatprep.subr.mxu0 0.0
        %2951 = vmatpush1.msra.mxu0 0.0
        %2952 = vmatprep.subr.mxu0 0.0
        %2953 = vmatpush1.msra.mxu0 0.0
        %2954 = vmatprep.subr.mxu0 0.0
        %2955 = vmatpush1.msra.mxu0 0.0
        %2956 = vmatprep.subr.mxu0 0.0
        %2957 = vmatpush1.msra.mxu0 0.0
        %2958 = vmatprep.subr.mxu0 0.0
        %2959 = vmatpush1.msra.mxu0 0.0
        %2960 = vmatprep.subr.mxu0 0.0
        %2961 = vmatpush1.msra.mxu0 0.0
        %2962 = vmatprep.subr.mxu0 0.0
        %2963 = vmatpush1.msra.mxu0 0.0
        %2964 = vmatprep.subr.mxu0 0.0
        %2965 = vmatpush1.msra.mxu0 0.0
        %2966 = vmatprep.subr.mxu0 0.0
        %2967 = vmatpush1.msra.mxu0 0.0
        %2968 = vmatprep.subr.mxu0 0.0
        %2969 = vmatpush1.msra.mxu0 0.0
        %2970 = vmatprep.subr.mxu0 0.0
        %2971 = vmatpush1.msra.mxu0 0.0
        %2972 = vmatprep.subr.mxu0 0.0
        %2973 = vmatpush1.msra.mxu0 0.0
        %2974 = vmatprep.subr.mxu0 0.0
        %2975 = vmatpush1.msra.mxu0 0.0
        %2976 = vmatprep.subr.mxu0 0.0
        %2977 = vmatpush1.msra.mxu0 0.0
        %2978 = vmatprep.subr.mxu0 0.0
        %2979 = vmatpush1.msra.mxu0 0.0
        %2980 = vmatprep.subr.mxu0 0.0
        %2981 = vmatpush1.msra.mxu0 0.0
        %2982 = vmatprep.subr.mxu0 0.0
        %2983 = vmatpush1.msra.mxu0 0.0
        %2984 = vmatprep.subr.mxu0 0.0
        %2985 = vmatpush1.msra.mxu0 0.0
        %2986 = vmatprep.subr.mxu0 0.0
        %2987 = vmatpush1.msra.mxu0 0.0
        %2988 = vmatprep.subr.mxu0 0.0
        %2989 = vmatpush1.msra.mxu0 0.0
        %2990 = vmatprep.subr.mxu0 0.0
        %2991 = vmatpush1.msra.mxu0 0.0
        %2992 = vmatprep.subr.mxu0 0.0
        %2993 = vmatpush1.msra.mxu0 0.0
        %2994 = vmatprep.subr.mxu0 0.0
        %2995 = vmatpush1.msra.mxu0 0.0
        %2996 = vmatprep.subr.mxu0 0.0
        %2997 = vmatpush1.msra.mxu0 0.0
        %2998 = vmatprep.subr.mxu0 0.0
        %2999 = vmatpush1.msra.mxu0 0.0
        %3000 = vmatprep.subr.mxu0 0.0
        %3001 = vmatpush1.msra.mxu0 0.0
        %3002 = vmatprep.subr.mxu0 0.0
        %3003 = vmatpush1.msra.mxu0 0.0
        %3004 = vmatprep.subr.mxu0 0.0
        %3005 = vmatpush1.msra.mxu0 0.0
        %3006 = vmatprep.subr.mxu0 0.0
        %3007 = vmatpush1.msra.mxu0 0.0
        %3008 = vmatprep.subr.mxu0 0.0
        %3009 = vmatpush1.msra.mxu0 0.0
        %3010 = vmatprep.mubr.f32.mxu0 0.0
        %3011 = vmatmul.mubr.f32.gmra.mrb[0].mxu0 %v2920
        %v3012 = vpop.f32.mrb[0].mxu0
        %v3013 = vadd.f32 0.0, %v3012
        %v3014 = vpop.f32.mrb[0].mxu0
        %3015 = vmatprep.mubr.f32.mxu0 0.0
        %3016 = vmatmul.mubr.f32.gmra.mrb[0].mxu0 %v2923
        %v3017 = vpop.f32.mrb[0].mxu0
        %v3018 = vadd.f32 0.0, %v3017
        %v3019 = vpop.f32.mrb[0].mxu0
        %3020 = vmatprep.mubr.f32.mxu0 0.0
        %3021 = vmatmul.mubr.f32.gmra.mrb[0].mxu0 %v2926
        %v3022 = vpop.f32.mrb[0].mxu0
        %v3023 = vadd.f32 0.0, %v3022
        %v3024 = vpop.f32.mrb[0].mxu0
        %3025 = vmatprep.mubr.f32.mxu0 0.0
        %3026 = vmatmul.mubr.f32.gmra.mrb[0].mxu0 %v2929
        %v3027 = vpop.f32.mrb[0].mxu0
        %v3028 = vadd.f32 0.0, %v3027
        %v3029 = vpop.f32.mrb[0].mxu0
        %3030 = vmatprep.mubr.f32.mxu0 0.0
        %3031 = vmatmul.mubr.f32.gmra.mrb[0].mxu0 %v2932
        %v3032 = vpop.f32.mrb[0].mxu0
        %v3033 = vadd.f32 0.0, %v3032
        %v3034 = vpop.f32.mrb[0].mxu0
        %3035 = vmatprep.mubr.f32.mxu0 0.0
        %3036 = vmatmul.mubr.f32.gmra.mrb[0].mxu0 %v2935
        %v3037 = vpop.f32.mrb[0].mxu0
        %v3038 = vadd.f32 0.0, %v3037
        %v3039 = vpop.f32.mrb[0].mxu0
        %3040 = vmatprep.mubr.f32.mxu0 0.0
        %3041 = vmatmul.mubr.f32.gmra.mrb[0].mxu0 %v2938
        %v3042 = vpop.f32.mrb[0].mxu0
        %v3043 = vadd.f32 0.0, %v3042
        %v3044 = vpop.f32.mrb[0].mxu0
        %3045 = vmatprep.mubr.f32.mxu0 0.0
        %3046 = vmatmul.mubr.f32.gmra.mrb[0].mxu0 %v2941
        %v3047 = vpop.f32.mrb[0].mxu0
        %v3048 = vadd.f32 0.0, %v3047
        %v3049 = vpop.f32.mrb[0].mxu0
        %3050 = vdwg.mxu0
        %v3051 = vadd.f32 %v2902, %v3013
        %v3052 = vadd.f32 %v2903, %v3018
        %v3053 = vadd.f32 %v2904, %v3023
        %v3054 = vadd.f32 %v2905, %v3028
        %v3055 = vadd.f32 %v2906, %v3033
        %v3056 = vadd.f32 %v2907, %v3038
        %v3057 = vadd.f32 %v2908, %v3043
        %v3058 = vadd.f32 %v2909, %v3048
        %v3059 = vld [vmem:[%s6] sm:$0x1]
        %v3061 = vlaneseq
        %v3062 = vshrl.u32 %v3061, 7
        %v3063 = vsub.s32 0, %v3062
        %v3064 = vrot.slane %v3059, %v3063
        %v3066 = vadd.f32 %v3051, %v3064
        %v3067 = vadd.f32 %v3052, %v3064
        %v3068 = vadd.f32 %v3053, %v3064
        %v3069 = vadd.f32 %v3054, %v3064
        %v3070 = vadd.f32 %v3055, %v3064
        %v3071 = vadd.f32 %v3056, %v3064
        %v3072 = vadd.f32 %v3057, %v3064
        %v3073 = vadd.f32 %v3058, %v3064
        %v3074 = vmax.f32 %v3066, 0.0
        %v3075 = vmax.f32 %v3067, 0.0
        %v3076 = vmax.f32 %v3068, 0.0
        %v3077 = vmax.f32 %v3069, 0.0
        %v3078 = vmax.f32 %v3070, 0.0
        %v3079 = vmax.f32 %v3071, 0.0
        %v3080 = vmax.f32 %v3072, 0.0
        %v3081 = vmax.f32 %v3073, 0.0
        %3082 = vst [vmem:[%s271] sm:$0xff] %v3074
        %3083 = vst [vmem:[%s271 + $0x8] sm:$0xff] %v3075
        %3084 = vst [vmem:[%s271 + $0x10] sm:$0xff] %v3076
        %3085 = vst [vmem:[%s271 + $0x18] sm:$0xff] %v3077
        %3086 = vst [vmem:[%s271 + $0x20] sm:$0xff] %v3078
        %3087 = vst [vmem:[%s271 + $0x28] sm:$0xff] %v3079
        %3088 = vst [vmem:[%s271 + $0x30] sm:$0xff] %v3080
        %3089 = vst [vmem:[%s271 + $0x38] sm:$0xff] %v3081
        %s3090 = sand.u32 %s181, 1
        %s3091 = scalar_lea.sflag [#allocation4], %s3090
        %s3092 = sand.u32 %s181, 1
        %s3093 = smul.addr %s3092, 64
        %s3094 = scalar_lea.vmem [#allocation3], %s3093
        // Predicated region
        $region49: #{tpu_custom_call.1} parent=47 // pred_check
          %p3095 = pneg %p191
        $region50: #{tpu_custom_call.1} parent=47 // pred_check_branch
          %3097 = sbr.rel (%p3095) target = $region52
        $region51: #{tpu_custom_call.1} parent=47 // pred_region
          %s3099 = ssub.s32 1024, 1024
          %3100 = vsyncadd %s3091, %s3099
          %s3101 = smul.addr %s21, 8
          %s3102 = smul.addr %s3101, 128
          %s3103 = scalar_lea.hbm %s7, %s3102
          %s3104 = sshll.u32 %s3094, 4
          %s3105 = int_to_ptr.vmem [resolvable:$true] %s3104
          %3110 = dma.vmem_to_hbm [thread:$0]  %s3105, 1024, %s3103, %s3091, 128, 128, 8
        $region52: #{tpu_custom_call.1} parent=47 // pred_fallthru
          _
      $region48: #{tpu_custom_call.1} parent=5 // pred_fallthru
        _
      %p3111 = scmp.le.s32.totalorder 2, %s16
      // Predicated region
      $region53: #{tpu_custom_call.1} parent=5 // pred_check
        %p3112 = pneg %p3111
      $region54: #{tpu_custom_call.1} parent=5 // pred_check_branch
        %3114 = sbr.rel (%p3112) target = $region56
      $region55: #{tpu_custom_call.1} parent=5 // pred_region
        %s3115 = ssub.s32 %s16, 2
        // Predicated region
        $region57: #{tpu_custom_call.1} parent=55 // pred_check
          %p3116 = pneg %p197
        $region58: #{tpu_custom_call.1} parent=55 // pred_check_branch
          %3118 = sbr.rel (%p3116) target = $region60
        $region59: #{tpu_custom_call.1} parent=55 // pred_region
          %s3119 = sand.u32 %s182, 1
          %s3120 = scalar_lea.sflag [#allocation4], %s3119
          %s3121 = sand.u32 %s182, 1
          %s3122 = smul.addr %s3121, 64
          %s3123 = scalar_lea.vmem [#allocation3], %s3122
          %3124 = dma.done %s3120, 1024
        $region60: #{tpu_custom_call.1} parent=55 // pred_fallthru
          _
      $region56: #{tpu_custom_call.1} parent=5 // pred_fallthru
        _
    $region6: #{tpu_custom_call.1} parent=1 // loop_footer
      %s20 = sadd.s32 1, %s16
    $region7: #{tpu_custom_call.1} parent=1 // loop_footer_branch
      %15 = sbr.rel target = $region3
    $region8: #{tpu_custom_call.1} parent=1 // loop_exit
      _
    %3125 = vsyncpa [#allocation4], 1
    %s3126 = scalar_lea.sflag [#allocation4], 1
    %3127 = vsyncpa %s3126, 1

</llo_original>
